<compile_context>
chip_gen: v5e
topology: v5e:2x2
jax: 0.10.0
libtpu: 0.0.40
codegen_flags: <defaults>
</compile_context>

<pallas_src>
import functools

import jax
import jax.numpy as jnp
from jax.experimental import pallas as pl
from jax.experimental.pallas import tpu as pltpu

NUM_ATOM_TYPE = 120
NUM_CHIRALITY = 3
NUM_BOND_TYPE = 6      # self-loop bond-type index = 4 (as in the reference GINConv)
NUM_BOND_DIR = 3
BN_EPS = 1e-5
LANE = 128


def _round_up(x, m):
    return ((x + m - 1) // m) * m


def _pick_tile(n, cands):
    for c in cands:
        if n % c == 0:
            return c
    return 128


# ----------------------------- parameter init -----------------------------

def _xavier_uniform(key, fan_in, fan_out, shape):
    limit = (6.0 / (fan_in + fan_out)) ** 0.5
    return jax.random.uniform(key, shape, jnp.float32, -limit, limit)


def init_params(key, h_level, n_layer, n_hidden, num_tasks):
    """h_level GIN encoders (student_layer layers each) + 'cat' graph_pred_linear."""
    keys = jax.random.split(key, h_level * (2 + 4 * n_layer) + 1)
    ki = 0
    encoders = []
    for _ in range(h_level):
        enc = {
            "x_emb1": _xavier_uniform(keys[ki], NUM_ATOM_TYPE, n_hidden,
                                      (NUM_ATOM_TYPE, n_hidden)),
            "x_emb2": _xavier_uniform(keys[ki + 1], NUM_CHIRALITY, n_hidden,
                                      (NUM_CHIRALITY, n_hidden)),
            "layers": [],
        }
        ki += 2
        for _ in range(n_layer):
            w1 = _xavier_uniform(keys[ki], n_hidden, 2 * n_hidden,
                                 (n_hidden, 2 * n_hidden))
            w2 = _xavier_uniform(keys[ki + 1], 2 * n_hidden, n_hidden,
                                 (2 * n_hidden, n_hidden))
            e1 = _xavier_uniform(keys[ki + 2], NUM_BOND_TYPE, n_hidden,
                                 (NUM_BOND_TYPE, n_hidden))
            e2 = _xavier_uniform(keys[ki + 3], NUM_BOND_DIR, n_hidden,
                                 (NUM_BOND_DIR, n_hidden))
            ki += 4
            enc["layers"].append(dict(
                w1=w1, b1=jnp.zeros((1, 2 * n_hidden), jnp.float32),  # init_emb(): bias = 0
                w2=w2, b2=jnp.zeros((1, n_hidden), jnp.float32),
                e1=e1, e2=e2,
                # eval-mode BatchNorm1d with fresh running stats: y = x / sqrt(1 + eps)
                bn_scale=jnp.full((1, n_hidden), 1.0 / (1.0 + BN_EPS) ** 0.5, jnp.float32),
                bn_shift=jnp.zeros((1, n_hidden), jnp.float32),
            ))
        encoders.append(enc)
    w_pred = _xavier_uniform(keys[ki], h_level * n_hidden, num_tasks,
                             (h_level * n_hidden, num_tasks))
    return {"encoders": encoders,
            "w_pred": w_pred,
            "b_pred": jnp.zeros((1, num_tasks), jnp.float32)}


# ------------------- GIN layer kernel (tiled, all encoders batched) -------------------

def _gin_layer_kernel(adj_ref, h_ref, esum_ref, w1_ref, b1_ref, w2_ref, b2_ref,
                      o_ref, acc_ref, *, h_level, apply_relu):
    k = pl.program_id(1)

    @pl.when(k == 0)
    def _():
        acc_ref[...] = jnp.zeros_like(acc_ref)

    # message passing over one (TM, TK) adjacency block, reused for every encoder:
    # bf16 MXU, f32 accumulate
    adj = adj_ref[...]
    for l in range(h_level):
        acc_ref[l] += jnp.dot(adj, h_ref[l], preferred_element_type=jnp.float32)

    @pl.when(k == pl.num_programs(1) - 1)
    def _():
        for l in range(h_level):
            aggr = acc_ref[l] + esum_ref[l]                     # + edge-embedding sums
            # GIN MLP: Linear(D,2D) -> ReLU -> Linear(2D,D)(BN folded in), bf16/MXU
            hid = jnp.dot(aggr.astype(jnp.bfloat16), w1_ref[l],
                          preferred_element_type=jnp.float32) + b1_ref[l]
            hid = jnp.maximum(hid, 0.0)
            out = jnp.dot(hid.astype(jnp.bfloat16), w2_ref[l],
                          preferred_element_type=jnp.float32) + b2_ref[l]
            if apply_relu:                                      # all layers except the last
                out = jnp.maximum(out, 0.0)
            o_ref[l] = out.astype(o_ref.dtype)


def gin_layer(adj_bf16, h_all, esum_all, w1_all, b1_all, w2_all, b2_all,
              apply_relu, *, tm, tk):
    h_level, Np, Dp = h_all.shape
    H2p = w1_all.shape[2]
    grid = (Np // tm, Np // tk)

    flops = h_level * (2 * Np * Np * Dp + 2 * Np * Dp * H2p + 2 * Np * H2p * Dp)
    bytes_accessed = (2 * Np * Np                       # adj bf16
                      + 2 * h_level * Np * Dp           # h bf16
                      + 4 * h_level * Np * Dp           # esum f32
                      + 2 * h_level * Np * Dp           # out bf16
                      + 2 * h_level * (Dp * H2p + H2p * Dp)   # weights bf16
                      + 4 * h_level * (H2p + Dp))             # biases f32

    return pl.pallas_call(
        functools.partial(_gin_layer_kernel, h_level=h_level, apply_relu=apply_relu),
        out_shape=jax.ShapeDtypeStruct((h_level, Np, Dp), jnp.bfloat16),
        grid_spec=pltpu.PrefetchScalarGridSpec(
            num_scalar_prefetch=0,
            grid=grid,
            in_specs=[
                pl.BlockSpec((tm, tk), lambda i, k: (i, k)),              # adj block
                pl.BlockSpec((h_level, tk, Dp), lambda i, k: (0, k, 0)),  # h (reduction)
                pl.BlockSpec((h_level, tm, Dp), lambda i, k: (0, i, 0)),  # esum (resident / k)
                pl.BlockSpec((h_level, Dp, H2p), lambda i, k: (0, 0, 0)),  # w1
                pl.BlockSpec((h_level, 1, H2p), lambda i, k: (0, 0, 0)),   # b1
                pl.BlockSpec((h_level, H2p, Dp), lambda i, k: (0, 0, 0)),  # w2 (BN folded)
                pl.BlockSpec((h_level, 1, Dp), lambda i, k: (0, 0, 0)),    # b2 (BN folded)
            ],
            out_specs=pl.BlockSpec((h_level, tm, Dp), lambda i, k: (0, i, 0)),
            scratch_shapes=[pltpu.VMEM((h_level, tm, Dp), jnp.float32)],
        ),
        compiler_params=pltpu.CompilerParams(
            dimension_semantics=("parallel", "arbitrary"),
            vmem_limit_bytes=32 * 1024 * 1024,
        ),
        cost_estimate=pl.CostEstimate(flops=flops, transcendentals=0,
                                      bytes_accessed=bytes_accessed),
    )(adj_bf16, h_all, esum_all, w1_all, b1_all, w2_all, b2_all)


# ----------------------------- fused pool + prediction head -----------------------------

def _pool_pred_kernel(pmat_ref, z_ref, w_ref, invcnt_ref, bp_ref, o_ref, acc_ref,
                      *, h_level):
    k = pl.program_id(0)

    @pl.when(k == 0)
    def _():
        acc_ref[...] = jnp.zeros_like(acc_ref)

    # accumulate per-graph node sums for every level over this node block
    pm = pmat_ref[...]
    for l in range(h_level):
        acc_ref[l] += jnp.dot(pm, z_ref[l], preferred_element_type=jnp.float32)

    @pl.when(k == pl.num_programs(0) - 1)
    def _():
        inv = invcnt_ref[...]                                   # [B, 1] -> mean pool
        pred = bp_ref[...]
        for l in range(h_level):
            # 'cat' head: cat(g_list) @ W  ==  sum_l g_l @ W[l*D:(l+1)*D]
            pred = pred + jnp.dot(acc_ref[l] * inv, w_ref[l],
                                  preferred_element_type=jnp.float32)
        o_ref[...] = pred


def pool_and_predict(pmat_bf16, z_all, w_all, invcnt, b_pred, num_graphs, num_tasks, *, tk):
    h_level, Np, Dp = z_all.shape
    grid = (Np // tk,)

    flops = h_level * (2 * num_graphs * Np * Dp + 2 * num_graphs * Dp * num_tasks)
    bytes_accessed = (2 * num_graphs * Np + 2 * h_level * Np * Dp
                      + 4 * h_level * Dp * num_tasks + 4 * num_graphs * num_tasks)

    return pl.pallas_call(
        functools.partial(_pool_pred_kernel, h_level=h_level),
        out_shape=jax.ShapeDtypeStruct((num_graphs, num_tasks), jnp.float32),
        grid_spec=pltpu.PrefetchScalarGridSpec(
            num_scalar_prefetch=0,
            grid=grid,
            in_specs=[
                pl.BlockSpec((num_graphs, tk), lambda k: (0, k)),        # one-hot pool mat
                pl.BlockSpec((h_level, tk, Dp), lambda k: (0, k, 0)),    # z (all levels)
                pl.BlockSpec((h_level, Dp, num_tasks), lambda k: (0, 0, 0)),  # W_pred slices
                pl.BlockSpec((num_graphs, 1), lambda k: (0, 0)),         # 1 / node count
                pl.BlockSpec((1, num_tasks), lambda k: (0, 0)),          # bias
            ],
            out_specs=pl.BlockSpec((num_graphs, num_tasks), lambda k: (0, 0)),
            scratch_shapes=[pltpu.VMEM((h_level, num_graphs, Dp), jnp.float32)],
        ),
        compiler_params=pltpu.CompilerParams(
            dimension_semantics=("arbitrary",),
            vmem_limit_bytes=32 * 1024 * 1024,
        ),
        cost_estimate=pl.CostEstimate(flops=flops, transcendentals=0,
                                      bytes_accessed=bytes_accessed),
    )(pmat_bf16, z_all, w_all, invcnt, b_pred)


# ----------------------------- forward (glue in JAX) -----------------------------

def student_graphpred_forward(params, x, edge_index, edge_attr, batch, num_graphs):
    N = x.shape[0]
    D = params["encoders"][0]["x_emb1"].shape[1]
    n_layer = len(params["encoders"][0]["layers"])
    h_level = len(params["encoders"])
    num_tasks = params["w_pred"].shape[1]

    Dp = _round_up(D, LANE)            # lane-pad hidden dim
    H2p = _round_up(2 * D, LANE)       # lane-pad MLP hidden dim
    Np = _round_up(N, LANE)            # pad node count to the tile grid
    tm = _pick_tile(Np, (256, 128))
    tk = _pick_tile(Np, (512, 256, 128))
    tkp = _pick_tile(Np, (1024, 512, 256, 128))

    src, tgt = edge_index[0], edge_index[1]
    # dense adjacency A[i, j] = #edges j->i (multi-edges counted) + self-loops (real nodes)
    adj = (jnp.zeros((Np, Np), jnp.float32)
           .at[tgt, src].add(1.0)
           .at[jnp.arange(N), jnp.arange(N)].add(1.0))
    adj_bf16 = adj.astype(jnp.bfloat16)          # small integer counts -> exact in bf16

    # initial node embeddings for every encoder, stacked [h_level, Np, Dp]
    h0 = jnp.stack([enc["x_emb1"][x[:, 0]] + enc["x_emb2"][x[:, 1]]
                    for enc in params["encoders"]])
    h = jnp.pad(h0, ((0, 0), (0, Np - N), (0, Dp - D))).astype(jnp.bfloat16)

    for l in range(n_layer):
        esum_l, w1_l, b1_l, w2_l, b2_l = [], [], [], [], []
        for enc in params["encoders"]:
            lp = enc["layers"][l]
            # per-target summed edge embeddings (real edges + self-loop edge, type 4 / dir 0)
            e_emb = lp["e1"][edge_attr[:, 0]] + lp["e2"][edge_attr[:, 1]]
            self_emb = lp["e1"][4] + lp["e2"][0]
            esum = jnp.zeros((N, D), jnp.float32).at[tgt].add(e_emb) + self_emb[None, :]
            esum_l.append(esum)
            # fold eval-mode BatchNorm (affine) into the second linear
            w1_l.append(lp["w1"])
            b1_l.append(lp["b1"])
            w2_l.append(lp["w2"] * lp["bn_scale"])
            b2_l.append(lp["b2"] * lp["bn_scale"] + lp["bn_shift"])
        esum_all = jnp.pad(jnp.stack(esum_l), ((0, 0), (0, Np - N), (0, Dp - D)))
        w1_all = jnp.pad(jnp.stack(w1_l),
                         ((0, 0), (0, Dp - D), (0, H2p - 2 * D))).astype(jnp.bfloat16)
        b1_all = jnp.pad(jnp.stack(b1_l), ((0, 0), (0, 0), (0, H2p - 2 * D)))
        w2_all = jnp.pad(jnp.stack(w2_l),
                         ((0, 0), (0, H2p - 2 * D), (0, Dp - D))).astype(jnp.bfloat16)
        b2_all = jnp.pad(jnp.stack(b2_l), ((0, 0), (0, 0), (0, Dp - D)))
        h = gin_layer(adj_bf16, h, esum_all, w1_all, b1_all, w2_all, b2_all,
                      apply_relu=(l != n_layer - 1), tm=tm, tk=tk)
    # JK == "last": z_l = h[l]

    # pooling one-hot (padded nodes map to no graph) + per-graph 1/count
    pmat = (batch[None, :] == jnp.arange(num_graphs)[:, None]).astype(jnp.float32)
    counts = jnp.maximum(pmat.sum(axis=1, keepdims=True), 1.0)
    invcnt = 1.0 / counts                                        # [B, 1]
    pmat_p = jnp.pad(pmat, ((0, 0), (0, Np - N))).astype(jnp.bfloat16)

    # 'cat' prediction head split per level, padded on the contracted dim
    w_all = jnp.stack([jnp.pad(params["w_pred"][l * D:(l + 1) * D], ((0, Dp - D), (0, 0)))
                       for l in range(h_level)])
    return pool_and_predict(pmat_p, h, w_all, invcnt, params["b_pred"],
                            num_graphs, num_tasks, tk=tkp)


# ----------------------------- demo -----------------------------

if __name__ == "__main__":
    key = jax.random.PRNGKey(0)
    N, D, n_layer, h_level, B, E, num_tasks = 200, 32, 2, 2, 2, 400, 3

    kp, kx1, kx2, ke, ka1, ka2 = jax.random.split(key, 6)
    params = init_params(kp, h_level, n_layer, D, num_tasks)

    x = jnp.stack([jax.random.randint(kx1, (N,), 0, NUM_ATOM_TYPE),
                   jax.random.randint(kx2, (N,), 0, NUM_CHIRALITY)], axis=1)
    edge_index = jax.random.randint(ke, (2, E), 0, N)
    edge_attr = jnp.stack([jax.random.randint(ka1, (E,), 0, 4),
                           jax.random.randint(ka2, (E,), 0, NUM_BOND_DIR)], axis=1)
    batch = jnp.concatenate([jnp.zeros(N // 2, jnp.int32),
                             jnp.ones(N - N // 2, jnp.int32)])

    fwd = jax.jit(student_graphpred_forward, static_argnums=(5,))
    g = fwd(params, x, edge_index, edge_attr, batch, B)
    g = jax.block_until_ready(g)
    assert g.shape == (B, num_tasks) and g.dtype == jnp.float32
    assert bool(jnp.all(jnp.isfinite(g)))
    print("KERNEL_OK")
</pallas_src>

<mosaic_0001>
module attributes {stable_mosaic.version = 11 : i64} {
  func.func @_gin_layer_kernel(%arg0: i32, %arg1: i32, %arg2: memref<256x256xbf16, #tpu.memory_space<vmem>>, %arg3: memref<2x256x128xbf16, #tpu.memory_space<vmem>>, %arg4: memref<2x256x128xf32, #tpu.memory_space<vmem>>, %arg5: memref<2x128x128xbf16, #tpu.memory_space<vmem>>, %arg6: memref<2x1x128xf32, #tpu.memory_space<vmem>>, %arg7: memref<2x128x128xbf16, #tpu.memory_space<vmem>>, %arg8: memref<2x1x128xf32, #tpu.memory_space<vmem>>, %arg9: memref<2x256x128xbf16, #tpu.memory_space<vmem>>, %arg10: memref<2x256x128xf32, #tpu.memory_space<vmem>>) attributes {dimension_semantics = [#tpu.dimension_semantics<parallel>, #tpu.dimension_semantics<arbitrary>], iteration_bounds = array<i64: 1, 1>, scalar_prefetch = 0 : i64, scratch_operands = 1 : i64, tpu.core_type = #tpu.core_type<tc>, window_params = [{transform_indices = @transform_0, window_bounds = array<i64: 256, 256>}, {transform_indices = @transform_1, window_bounds = array<i64: 2, 256, 128>}, {transform_indices = @transform_2, window_bounds = array<i64: 2, 256, 128>}, {pipeline_mode = #tpu.pipeline_mode<synchronous>, transform_indices = @transform_3, window_bounds = array<i64: 2, 128, 128>}, {pipeline_mode = #tpu.pipeline_mode<synchronous>, transform_indices = @transform_4, window_bounds = array<i64: 2, 1, 128>}, {pipeline_mode = #tpu.pipeline_mode<synchronous>, transform_indices = @transform_5, window_bounds = array<i64: 2, 128, 128>}, {pipeline_mode = #tpu.pipeline_mode<synchronous>, transform_indices = @transform_6, window_bounds = array<i64: 2, 1, 128>}, {transform_indices = @transform_7, window_bounds = array<i64: 2, 256, 128>}]} {
    %c0_i32 = arith.constant 0 : i32
    %0 = arith.cmpi eq, %arg1, %c0_i32 : i32
    %1 = arith.extui %0 : i1 to i32
    %c0_i32_0 = arith.constant 0 : i32
    %2 = arith.cmpi ne, %1, %c0_i32_0 : i32
    scf.if %2 {
      %cst_22 = arith.constant 0.000000e+00 : f32
      %25 = vector.broadcast %cst_22 : f32 to vector<2x256x128xf32>
      %c0_23 = arith.constant 0 : index
      %c0_24 = arith.constant 0 : index
      %c0_25 = arith.constant 0 : index
      %26 = vector.load %arg10[%c0_23, %c0_24, %c0_25] : memref<2x256x128xf32, #tpu.memory_space<vmem>>, vector<2x256x128xf32>
      tpu.vector_store %arg10[%c0_23, %c0_24, %c0_25], %25 {strides = array<i32>} : memref<2x256x128xf32, #tpu.memory_space<vmem>>, vector<2x256x128xf32>,
    } else {
    }
    %c0 = arith.constant 0 : index
    %c0_1 = arith.constant 0 : index
    %3 = vector.load %arg2[%c0, %c0_1] : memref<256x256xbf16, #tpu.memory_space<vmem>>, vector<256x256xbf16>
    %c0_2 = arith.constant 0 : index
    %c0_3 = arith.constant 0 : index
    %c0_4 = arith.constant 0 : index
    %4 = vector.load %arg10[%c0_2, %c0_3, %c0_4] : memref<2x256x128xf32, #tpu.memory_space<vmem>>, vector<1x256x128xf32>
    %5 = vector.shape_cast %4 : vector<1x256x128xf32> to vector<256x128xf32>
    %c0_5 = arith.constant 0 : index
    %c0_6 = arith.constant 0 : index
    %c0_7 = arith.constant 0 : index
    %6 = vector.load %arg3[%c0_5, %c0_6, %c0_7] : memref<2x256x128xbf16, #tpu.memory_space<vmem>>, vector<1x256x128xbf16>
    %7 = vector.shape_cast %6 : vector<1x256x128xbf16> to vector<256x128xbf16>
    %cst = arith.constant dense<0.000000e+00> : vector<256x128xf32>
    %8 = tpu.matmul %3, %7, %cst {dimension_numbers = #tpu.dot_dimension_numbers<[1], [0], [0], [1], [0, 0, 1, 1], [], []>} : vector<256x256xbf16>, vector<256x128xbf16>, vector<256x128xf32> -> vector<256x128xf32>
    %9 = arith.addf %5, %8 : vector<256x128xf32>
    %c0_8 = arith.constant 0 : index
    %c0_9 = arith.constant 0 : index
    %c0_10 = arith.constant 0 : index
    %10 = vector.load %arg10[%c0_8, %c0_9, %c0_10] : memref<2x256x128xf32, #tpu.memory_space<vmem>>, vector<1x256x128xf32>
    %11 = vector.shape_cast %10 : vector<1x256x128xf32> to vector<256x128xf32>
    %12 = vector.shape_cast %9 : vector<256x128xf32> to vector<1x256x128xf32>
    tpu.vector_store %arg10[%c0_8, %c0_9, %c0_10], %12 {strides = array<i32>} : memref<2x256x128xf32, #tpu.memory_space<vmem>>, vector<1x256x128xf32>,
    %c1 = arith.constant 1 : index
    %c0_11 = arith.constant 0 : index
    %c0_12 = arith.constant 0 : index
    %13 = vector.load %arg10[%c1, %c0_11, %c0_12] : memref<2x256x128xf32, #tpu.memory_space<vmem>>, vector<1x256x128xf32>
    %14 = vector.shape_cast %13 : vector<1x256x128xf32> to vector<256x128xf32>
    %c1_13 = arith.constant 1 : index
    %c0_14 = arith.constant 0 : index
    %c0_15 = arith.constant 0 : index
    %15 = vector.load %arg3[%c1_13, %c0_14, %c0_15] : memref<2x256x128xbf16, #tpu.memory_space<vmem>>, vector<1x256x128xbf16>
    %16 = vector.shape_cast %15 : vector<1x256x128xbf16> to vector<256x128xbf16>
    %cst_16 = arith.constant dense<0.000000e+00> : vector<256x128xf32>
    %17 = tpu.matmul %3, %16, %cst_16 {dimension_numbers = #tpu.dot_dimension_numbers<[1], [0], [0], [1], [0, 0, 1, 1], [], []>} : vector<256x256xbf16>, vector<256x128xbf16>, vector<256x128xf32> -> vector<256x128xf32>
    %18 = arith.addf %14, %17 : vector<256x128xf32>
    %c1_17 = arith.constant 1 : index
    %c0_18 = arith.constant 0 : index
    %c0_19 = arith.constant 0 : index
    %19 = vector.load %arg10[%c1_17, %c0_18, %c0_19] : memref<2x256x128xf32, #tpu.memory_space<vmem>>, vector<1x256x128xf32>
    %20 = vector.shape_cast %19 : vector<1x256x128xf32> to vector<256x128xf32>
    %21 = vector.shape_cast %18 : vector<256x128xf32> to vector<1x256x128xf32>
    tpu.vector_store %arg10[%c1_17, %c0_18, %c0_19], %21 {strides = array<i32>} : memref<2x256x128xf32, #tpu.memory_space<vmem>>, vector<1x256x128xf32>,
    %c0_i32_20 = arith.constant 0 : i32
    %22 = arith.cmpi eq, %arg1, %c0_i32_20 : i32
    %23 = arith.extui %22 : i1 to i32
    %c0_i32_21 = arith.constant 0 : i32
    %24 = arith.cmpi ne, %23, %c0_i32_21 : i32
    scf.if %24 {
      %c0_22 = arith.constant 0 : index
      %c0_23 = arith.constant 0 : index
      %c0_24 = arith.constant 0 : index
      %25 = vector.load %arg10[%c0_22, %c0_23, %c0_24] : memref<2x256x128xf32, #tpu.memory_space<vmem>>, vector<1x256x128xf32>
      %26 = vector.shape_cast %25 : vector<1x256x128xf32> to vector<256x128xf32>
      %c0_25 = arith.constant 0 : index
      %c0_26 = arith.constant 0 : index
      %c0_27 = arith.constant 0 : index
      %27 = vector.load %arg4[%c0_25, %c0_26, %c0_27] : memref<2x256x128xf32, #tpu.memory_space<vmem>>, vector<1x256x128xf32>
      %28 = vector.shape_cast %27 : vector<1x256x128xf32> to vector<256x128xf32>
      %29 = arith.addf %26, %28 : vector<256x128xf32>
      %30 = arith.truncf %29 : vector<256x128xf32> to vector<256x128xbf16>
      %c0_28 = arith.constant 0 : index
      %c0_29 = arith.constant 0 : index
      %c0_30 = arith.constant 0 : index
      %31 = vector.load %arg5[%c0_28, %c0_29, %c0_30] : memref<2x128x128xbf16, #tpu.memory_space<vmem>>, vector<1x128x128xbf16>
      %32 = vector.shape_cast %31 : vector<1x128x128xbf16> to vector<128x128xbf16>
      %cst_31 = arith.constant dense<0.000000e+00> : vector<256x128xf32>
      %33 = tpu.matmul %30, %32, %cst_31 {dimension_numbers = #tpu.dot_dimension_numbers<[1], [0], [0], [1], [0, 0, 1, 1], [], []>} : vector<256x128xbf16>, vector<128x128xbf16>, vector<256x128xf32> -> vector<256x128xf32>
      %c0_32 = arith.constant 0 : index
      %c0_33 = arith.constant 0 : index
      %c0_34 = arith.constant 0 : index
      %34 = vector.load %arg6[%c0_32, %c0_33, %c0_34] : memref<2x1x128xf32, #tpu.memory_space<vmem>>, vector<1x1x128xf32>
      %35 = vector.shape_cast %34 : vector<1x1x128xf32> to vector<1x128xf32>
      %36 = vector.broadcast %35 : vector<1x128xf32> to vector<256x128xf32>
      %37 = arith.addf %33, %36 : vector<256x128xf32>
      %cst_35 = arith.constant 0.000000e+00 : f32
      %38 = vector.broadcast %cst_35 : f32 to vector<256x128xf32>
      %39 = arith.maximumf %37, %38 : vector<256x128xf32>
      %40 = arith.truncf %39 : vector<256x128xf32> to vector<256x128xbf16>
      %c0_36 = arith.constant 0 : index
      %c0_37 = arith.constant 0 : index
      %c0_38 = arith.constant 0 : index
      %41 = vector.load %arg7[%c0_36, %c0_37, %c0_38] : memref<2x128x128xbf16, #tpu.memory_space<vmem>>, vector<1x128x128xbf16>
      %42 = vector.shape_cast %41 : vector<1x128x128xbf16> to vector<128x128xbf16>
      %cst_39 = arith.constant dense<0.000000e+00> : vector<256x128xf32>
      %43 = tpu.matmul %40, %42, %cst_39 {dimension_numbers = #tpu.dot_dimension_numbers<[1], [0], [0], [1], [0, 0, 1, 1], [], []>} : vector<256x128xbf16>, vector<128x128xbf16>, vector<256x128xf32> -> vector<256x128xf32>
      %c0_40 = arith.constant 0 : index
      %c0_41 = arith.constant 0 : index
      %c0_42 = arith.constant 0 : index
      %44 = vector.load %arg8[%c0_40, %c0_41, %c0_42] : memref<2x1x128xf32, #tpu.memory_space<vmem>>, vector<1x1x128xf32>
      %45 = vector.shape_cast %44 : vector<1x1x128xf32> to vector<1x128xf32>
      %46 = vector.broadcast %45 : vector<1x128xf32> to vector<256x128xf32>
      %47 = arith.addf %43, %46 : vector<256x128xf32>
      %cst_43 = arith.constant 0.000000e+00 : f32
      %48 = vector.broadcast %cst_43 : f32 to vector<256x128xf32>
      %49 = arith.maximumf %47, %48 : vector<256x128xf32>
      %50 = arith.truncf %49 : vector<256x128xf32> to vector<256x128xbf16>
      %c0_44 = arith.constant 0 : index
      %c0_45 = arith.constant 0 : index
      %c0_46 = arith.constant 0 : index
      %51 = vector.load %arg9[%c0_44, %c0_45, %c0_46] : memref<2x256x128xbf16, #tpu.memory_space<vmem>>, vector<1x256x128xbf16>
      %52 = vector.shape_cast %51 : vector<1x256x128xbf16> to vector<256x128xbf16>
      %53 = vector.shape_cast %50 : vector<256x128xbf16> to vector<1x256x128xbf16>
      tpu.vector_store %arg9[%c0_44, %c0_45, %c0_46], %53 {strides = array<i32>} : memref<2x256x128xbf16, #tpu.memory_space<vmem>>, vector<1x256x128xbf16>,
      %c1_47 = arith.constant 1 : index
      %c0_48 = arith.constant 0 : index
      %c0_49 = arith.constant 0 : index
      %54 = vector.load %arg10[%c1_47, %c0_48, %c0_49] : memref<2x256x128xf32, #tpu.memory_space<vmem>>, vector<1x256x128xf32>
      %55 = vector.shape_cast %54 : vector<1x256x128xf32> to vector<256x128xf32>
      %c1_50 = arith.constant 1 : index
      %c0_51 = arith.constant 0 : index
      %c0_52 = arith.constant 0 : index
      %56 = vector.load %arg4[%c1_50, %c0_51, %c0_52] : memref<2x256x128xf32, #tpu.memory_space<vmem>>, vector<1x256x128xf32>
      %57 = vector.shape_cast %56 : vector<1x256x128xf32> to vector<256x128xf32>
      %58 = arith.addf %55, %57 : vector<256x128xf32>
      %59 = arith.truncf %58 : vector<256x128xf32> to vector<256x128xbf16>
      %c1_53 = arith.constant 1 : index
      %c0_54 = arith.constant 0 : index
      %c0_55 = arith.constant 0 : index
      %60 = vector.load %arg5[%c1_53, %c0_54, %c0_55] : memref<2x128x128xbf16, #tpu.memory_space<vmem>>, vector<1x128x128xbf16>
      %61 = vector.shape_cast %60 : vector<1x128x128xbf16> to vector<128x128xbf16>
      %cst_56 = arith.constant dense<0.000000e+00> : vector<256x128xf32>
      %62 = tpu.matmul %59, %61, %cst_56 {dimension_numbers = #tpu.dot_dimension_numbers<[1], [0], [0], [1], [0, 0, 1, 1], [], []>} : vector<256x128xbf16>, vector<128x128xbf16>, vector<256x128xf32> -> vector<256x128xf32>
      %c1_57 = arith.constant 1 : index
      %c0_58 = arith.constant 0 : index
      %c0_59 = arith.constant 0 : index
      %63 = vector.load %arg6[%c1_57, %c0_58, %c0_59] : memref<2x1x128xf32, #tpu.memory_space<vmem>>, vector<1x1x128xf32>
      %64 = vector.shape_cast %63 : vector<1x1x128xf32> to vector<1x128xf32>
      %65 = vector.broadcast %64 : vector<1x128xf32> to vector<256x128xf32>
      %66 = arith.addf %62, %65 : vector<256x128xf32>
      %cst_60 = arith.constant 0.000000e+00 : f32
      %67 = vector.broadcast %cst_60 : f32 to vector<256x128xf32>
      %68 = arith.maximumf %66, %67 : vector<256x128xf32>
      %69 = arith.truncf %68 : vector<256x128xf32> to vector<256x128xbf16>
      %c1_61 = arith.constant 1 : index
      %c0_62 = arith.constant 0 : index
      %c0_63 = arith.constant 0 : index
      %70 = vector.load %arg7[%c1_61, %c0_62, %c0_63] : memref<2x128x128xbf16, #tpu.memory_space<vmem>>, vector<1x128x128xbf16>
      %71 = vector.shape_cast %70 : vector<1x128x128xbf16> to vector<128x128xbf16>
      %cst_64 = arith.constant dense<0.000000e+00> : vector<256x128xf32>
      %72 = tpu.matmul %69, %71, %cst_64 {dimension_numbers = #tpu.dot_dimension_numbers<[1], [0], [0], [1], [0, 0, 1, 1], [], []>} : vector<256x128xbf16>, vector<128x128xbf16>, vector<256x128xf32> -> vector<256x128xf32>
      %c1_65 = arith.constant 1 : index
      %c0_66 = arith.constant 0 : index
      %c0_67 = arith.constant 0 : index
      %73 = vector.load %arg8[%c1_65, %c0_66, %c0_67] : memref<2x1x128xf32, #tpu.memory_space<vmem>>, vector<1x1x128xf32>
      %74 = vector.shape_cast %73 : vector<1x1x128xf32> to vector<1x128xf32>
      %75 = vector.broadcast %74 : vector<1x128xf32> to vector<256x128xf32>
      %76 = arith.addf %72, %75 : vector<256x128xf32>
      %cst_68 = arith.constant 0.000000e+00 : f32
      %77 = vector.broadcast %cst_68 : f32 to vector<256x128xf32>
      %78 = arith.maximumf %76, %77 : vector<256x128xf32>
      %79 = arith.truncf %78 : vector<256x128xf32> to vector<256x128xbf16>
      %c1_69 = arith.constant 1 : index
      %c0_70 = arith.constant 0 : index
      %c0_71 = arith.constant 0 : index
      %80 = vector.load %arg9[%c1_69, %c0_70, %c0_71] : memref<2x256x128xbf16, #tpu.memory_space<vmem>>, vector<1x256x128xbf16>
      %81 = vector.shape_cast %80 : vector<1x256x128xbf16> to vector<256x128xbf16>
      %82 = vector.shape_cast %79 : vector<256x128xbf16> to vector<1x256x128xbf16>
      tpu.vector_store %arg9[%c1_69, %c0_70, %c0_71], %82 {strides = array<i32>} : memref<2x256x128xbf16, #tpu.memory_space<vmem>>, vector<1x256x128xbf16>,
    } else {
    }
    return
  }
  func.func @transform_0(%arg0: i32, %arg1: i32) -> (i32, i32) {
    %c0_i32 = arith.constant 0 : i32
    return %arg0, %arg1 : i32, i32
  }
  func.func @transform_1(%arg0: i32, %arg1: i32) -> (i32, i32, i32) {
    %c0_i32 = arith.constant 0 : i32
    %c0_i32_0 = arith.constant 0 : i32
    %c0_i32_1 = arith.constant 0 : i32
    return %c0_i32, %arg1, %c0_i32_0 : i32, i32, i32
  }
  func.func @transform_2(%arg0: i32, %arg1: i32) -> (i32, i32, i32) {
    %c0_i32 = arith.constant 0 : i32
    %c0_i32_0 = arith.constant 0 : i32
    %c0_i32_1 = arith.constant 0 : i32
    return %c0_i32, %arg0, %c0_i32_0 : i32, i32, i32
  }
  func.func @transform_3(%arg0: i32, %arg1: i32) -> (i32, i32, i32) {
    %c0_i32 = arith.constant 0 : i32
    %c0_i32_0 = arith.constant 0 : i32
    %c0_i32_1 = arith.constant 0 : i32
    %c0_i32_2 = arith.constant 0 : i32
    return %c0_i32, %c0_i32_0, %c0_i32_1 : i32, i32, i32
  }
  func.func @transform_4(%arg0: i32, %arg1: i32) -> (i32, i32, i32) {
    %c0_i32 = arith.constant 0 : i32
    %c0_i32_0 = arith.constant 0 : i32
    %c0_i32_1 = arith.constant 0 : i32
    %c0_i32_2 = arith.constant 0 : i32
    return %c0_i32, %c0_i32_0, %c0_i32_1 : i32, i32, i32
  }
  func.func @transform_5(%arg0: i32, %arg1: i32) -> (i32, i32, i32) {
    %c0_i32 = arith.constant 0 : i32
    %c0_i32_0 = arith.constant 0 : i32
    %c0_i32_1 = arith.constant 0 : i32
    %c0_i32_2 = arith.constant 0 : i32
    return %c0_i32, %c0_i32_0, %c0_i32_1 : i32, i32, i32
  }
  func.func @transform_6(%arg0: i32, %arg1: i32) -> (i32, i32, i32) {
    %c0_i32 = arith.constant 0 : i32
    %c0_i32_0 = arith.constant 0 : i32
    %c0_i32_1 = arith.constant 0 : i32
    %c0_i32_2 = arith.constant 0 : i32
    return %c0_i32, %c0_i32_0, %c0_i32_1 : i32, i32, i32
  }
  func.func @transform_7(%arg0: i32, %arg1: i32) -> (i32, i32, i32) {
    %c0_i32 = arith.constant 0 : i32
    %c0_i32_0 = arith.constant 0 : i32
    %c0_i32_1 = arith.constant 0 : i32
    return %c0_i32, %arg0, %c0_i32_0 : i32, i32, i32
  }
}

module attributes {stable_mosaic.version = 11 : i64} {
  func.func @_gin_layer_kernel(%arg0: i32, %arg1: i32, %arg2: memref<256x256xbf16, #tpu.memory_space<vmem>>, %arg3: memref<2x256x128xbf16, #tpu.memory_space<vmem>>, %arg4: memref<2x256x128xf32, #tpu.memory_space<vmem>>, %arg5: memref<2x128x128xbf16, #tpu.memory_space<vmem>>, %arg6: memref<2x1x128xf32, #tpu.memory_space<vmem>>, %arg7: memref<2x128x128xbf16, #tpu.memory_space<vmem>>, %arg8: memref<2x1x128xf32, #tpu.memory_space<vmem>>, %arg9: memref<2x256x128xbf16, #tpu.memory_space<vmem>>, %arg10: memref<2x256x128xf32, #tpu.memory_space<vmem>>) attributes {dimension_semantics = [#tpu.dimension_semantics<parallel>, #tpu.dimension_semantics<arbitrary>], iteration_bounds = array<i64: 1, 1>, scalar_prefetch = 0 : i64, scratch_operands = 1 : i64, tpu.core_type = #tpu.core_type<tc>, window_params = [{transform_indices = @transform_0, window_bounds = array<i64: 256, 256>}, {transform_indices = @transform_1, window_bounds = array<i64: 2, 256, 128>}, {transform_indices = @transform_2, window_bounds = array<i64: 2, 256, 128>}, {pipeline_mode = #tpu.pipeline_mode<synchronous>, transform_indices = @transform_3, window_bounds = array<i64: 2, 128, 128>}, {pipeline_mode = #tpu.pipeline_mode<synchronous>, transform_indices = @transform_4, window_bounds = array<i64: 2, 1, 128>}, {pipeline_mode = #tpu.pipeline_mode<synchronous>, transform_indices = @transform_5, window_bounds = array<i64: 2, 128, 128>}, {pipeline_mode = #tpu.pipeline_mode<synchronous>, transform_indices = @transform_6, window_bounds = array<i64: 2, 1, 128>}, {transform_indices = @transform_7, window_bounds = array<i64: 2, 256, 128>}]} {
    %c0_i32 = arith.constant 0 : i32
    %0 = arith.cmpi eq, %arg1, %c0_i32 : i32
    %1 = arith.extui %0 : i1 to i32
    %c0_i32_0 = arith.constant 0 : i32
    %2 = arith.cmpi ne, %1, %c0_i32_0 : i32
    scf.if %2 {
      %cst_22 = arith.constant 0.000000e+00 : f32
      %25 = vector.broadcast %cst_22 : f32 to vector<2x256x128xf32>
      %c0_23 = arith.constant 0 : index
      %c0_24 = arith.constant 0 : index
      %c0_25 = arith.constant 0 : index
      %26 = vector.load %arg10[%c0_23, %c0_24, %c0_25] : memref<2x256x128xf32, #tpu.memory_space<vmem>>, vector<2x256x128xf32>
      tpu.vector_store %arg10[%c0_23, %c0_24, %c0_25], %25 {strides = array<i32>} : memref<2x256x128xf32, #tpu.memory_space<vmem>>, vector<2x256x128xf32>,
    } else {
    }
    %c0 = arith.constant 0 : index
    %c0_1 = arith.constant 0 : index
    %3 = vector.load %arg2[%c0, %c0_1] : memref<256x256xbf16, #tpu.memory_space<vmem>>, vector<256x256xbf16>
    %c0_2 = arith.constant 0 : index
    %c0_3 = arith.constant 0 : index
    %c0_4 = arith.constant 0 : index
    %4 = vector.load %arg10[%c0_2, %c0_3, %c0_4] : memref<2x256x128xf32, #tpu.memory_space<vmem>>, vector<1x256x128xf32>
    %5 = vector.shape_cast %4 : vector<1x256x128xf32> to vector<256x128xf32>
    %c0_5 = arith.constant 0 : index
    %c0_6 = arith.constant 0 : index
    %c0_7 = arith.constant 0 : index
    %6 = vector.load %arg3[%c0_5, %c0_6, %c0_7] : memref<2x256x128xbf16, #tpu.memory_space<vmem>>, vector<1x256x128xbf16>
    %7 = vector.shape_cast %6 : vector<1x256x128xbf16> to vector<256x128xbf16>
    %cst = arith.constant dense<0.000000e+00> : vector<256x128xf32>
    %8 = tpu.matmul %3, %7, %cst {dimension_numbers = #tpu.dot_dimension_numbers<[1], [0], [0], [1], [0, 0, 1, 1], [], []>} : vector<256x256xbf16>, vector<256x128xbf16>, vector<256x128xf32> -> vector<256x128xf32>
    %9 = arith.addf %5, %8 : vector<256x128xf32>
    %c0_8 = arith.constant 0 : index
    %c0_9 = arith.constant 0 : index
    %c0_10 = arith.constant 0 : index
    %10 = vector.load %arg10[%c0_8, %c0_9, %c0_10] : memref<2x256x128xf32, #tpu.memory_space<vmem>>, vector<1x256x128xf32>
    %11 = vector.shape_cast %10 : vector<1x256x128xf32> to vector<256x128xf32>
    %12 = vector.shape_cast %9 : vector<256x128xf32> to vector<1x256x128xf32>
    tpu.vector_store %arg10[%c0_8, %c0_9, %c0_10], %12 {strides = array<i32>} : memref<2x256x128xf32, #tpu.memory_space<vmem>>, vector<1x256x128xf32>,
    %c1 = arith.constant 1 : index
    %c0_11 = arith.constant 0 : index
    %c0_12 = arith.constant 0 : index
    %13 = vector.load %arg10[%c1, %c0_11, %c0_12] : memref<2x256x128xf32, #tpu.memory_space<vmem>>, vector<1x256x128xf32>
    %14 = vector.shape_cast %13 : vector<1x256x128xf32> to vector<256x128xf32>
    %c1_13 = arith.constant 1 : index
    %c0_14 = arith.constant 0 : index
    %c0_15 = arith.constant 0 : index
    %15 = vector.load %arg3[%c1_13, %c0_14, %c0_15] : memref<2x256x128xbf16, #tpu.memory_space<vmem>>, vector<1x256x128xbf16>
    %16 = vector.shape_cast %15 : vector<1x256x128xbf16> to vector<256x128xbf16>
    %cst_16 = arith.constant dense<0.000000e+00> : vector<256x128xf32>
    %17 = tpu.matmul %3, %16, %cst_16 {dimension_numbers = #tpu.dot_dimension_numbers<[1], [0], [0], [1], [0, 0, 1, 1], [], []>} : vector<256x256xbf16>, vector<256x128xbf16>, vector<256x128xf32> -> vector<256x128xf32>
    %18 = arith.addf %14, %17 : vector<256x128xf32>
    %c1_17 = arith.constant 1 : index
    %c0_18 = arith.constant 0 : index
    %c0_19 = arith.constant 0 : index
    %19 = vector.load %arg10[%c1_17, %c0_18, %c0_19] : memref<2x256x128xf32, #tpu.memory_space<vmem>>, vector<1x256x128xf32>
    %20 = vector.shape_cast %19 : vector<1x256x128xf32> to vector<256x128xf32>
    %21 = vector.shape_cast %18 : vector<256x128xf32> to vector<1x256x128xf32>
    tpu.vector_store %arg10[%c1_17, %c0_18, %c0_19], %21 {strides = array<i32>} : memref<2x256x128xf32, #tpu.memory_space<vmem>>, vector<1x256x128xf32>,
    %c0_i32_20 = arith.constant 0 : i32
    %22 = arith.cmpi eq, %arg1, %c0_i32_20 : i32
    %23 = arith.extui %22 : i1 to i32
    %c0_i32_21 = arith.constant 0 : i32
    %24 = arith.cmpi ne, %23, %c0_i32_21 : i32
    scf.if %24 {
      %c0_22 = arith.constant 0 : index
      %c0_23 = arith.constant 0 : index
      %c0_24 = arith.constant 0 : index
      %25 = vector.load %arg10[%c0_22, %c0_23, %c0_24] : memref<2x256x128xf32, #tpu.memory_space<vmem>>, vector<1x256x128xf32>
      %26 = vector.shape_cast %25 : vector<1x256x128xf32> to vector<256x128xf32>
      %c0_25 = arith.constant 0 : index
      %c0_26 = arith.constant 0 : index
      %c0_27 = arith.constant 0 : index
      %27 = vector.load %arg4[%c0_25, %c0_26, %c0_27] : memref<2x256x128xf32, #tpu.memory_space<vmem>>, vector<1x256x128xf32>
      %28 = vector.shape_cast %27 : vector<1x256x128xf32> to vector<256x128xf32>
      %29 = arith.addf %26, %28 : vector<256x128xf32>
      %30 = arith.truncf %29 : vector<256x128xf32> to vector<256x128xbf16>
      %c0_28 = arith.constant 0 : index
      %c0_29 = arith.constant 0 : index
      %c0_30 = arith.constant 0 : index
      %31 = vector.load %arg5[%c0_28, %c0_29, %c0_30] : memref<2x128x128xbf16, #tpu.memory_space<vmem>>, vector<1x128x128xbf16>
      %32 = vector.shape_cast %31 : vector<1x128x128xbf16> to vector<128x128xbf16>
      %cst_31 = arith.constant dense<0.000000e+00> : vector<256x128xf32>
      %33 = tpu.matmul %30, %32, %cst_31 {dimension_numbers = #tpu.dot_dimension_numbers<[1], [0], [0], [1], [0, 0, 1, 1], [], []>} : vector<256x128xbf16>, vector<128x128xbf16>, vector<256x128xf32> -> vector<256x128xf32>
      %c0_32 = arith.constant 0 : index
      %c0_33 = arith.constant 0 : index
      %c0_34 = arith.constant 0 : index
      %34 = vector.load %arg6[%c0_32, %c0_33, %c0_34] : memref<2x1x128xf32, #tpu.memory_space<vmem>>, vector<1x1x128xf32>
      %35 = vector.shape_cast %34 : vector<1x1x128xf32> to vector<1x128xf32>
      %36 = vector.broadcast %35 : vector<1x128xf32> to vector<256x128xf32>
      %37 = arith.addf %33, %36 : vector<256x128xf32>
      %cst_35 = arith.constant 0.000000e+00 : f32
      %38 = vector.broadcast %cst_35 : f32 to vector<256x128xf32>
      %39 = arith.maximumf %37, %38 : vector<256x128xf32>
      %40 = arith.truncf %39 : vector<256x128xf32> to vector<256x128xbf16>
      %c0_36 = arith.constant 0 : index
      %c0_37 = arith.constant 0 : index
      %c0_38 = arith.constant 0 : index
      %41 = vector.load %arg7[%c0_36, %c0_37, %c0_38] : memref<2x128x128xbf16, #tpu.memory_space<vmem>>, vector<1x128x128xbf16>
      %42 = vector.shape_cast %41 : vector<1x128x128xbf16> to vector<128x128xbf16>
      %cst_39 = arith.constant dense<0.000000e+00> : vector<256x128xf32>
      %43 = tpu.matmul %40, %42, %cst_39 {dimension_numbers = #tpu.dot_dimension_numbers<[1], [0], [0], [1], [0, 0, 1, 1], [], []>} : vector<256x128xbf16>, vector<128x128xbf16>, vector<256x128xf32> -> vector<256x128xf32>
      %c0_40 = arith.constant 0 : index
      %c0_41 = arith.constant 0 : index
      %c0_42 = arith.constant 0 : index
      %44 = vector.load %arg8[%c0_40, %c0_41, %c0_42] : memref<2x1x128xf32, #tpu.memory_space<vmem>>, vector<1x1x128xf32>
      %45 = vector.shape_cast %44 : vector<1x1x128xf32> to vector<1x128xf32>
      %46 = vector.broadcast %45 : vector<1x128xf32> to vector<256x128xf32>
      %47 = arith.addf %43, %46 : vector<256x128xf32>
      %48 = arith.truncf %47 : vector<256x128xf32> to vector<256x128xbf16>
      %c0_43 = arith.constant 0 : index
      %c0_44 = arith.constant 0 : index
      %c0_45 = arith.constant 0 : index
      %49 = vector.load %arg9[%c0_43, %c0_44, %c0_45] : memref<2x256x128xbf16, #tpu.memory_space<vmem>>, vector<1x256x128xbf16>
      %50 = vector.shape_cast %49 : vector<1x256x128xbf16> to vector<256x128xbf16>
      %51 = vector.shape_cast %48 : vector<256x128xbf16> to vector<1x256x128xbf16>
      tpu.vector_store %arg9[%c0_43, %c0_44, %c0_45], %51 {strides = array<i32>} : memref<2x256x128xbf16, #tpu.memory_space<vmem>>, vector<1x256x128xbf16>,
      %c1_46 = arith.constant 1 : index
      %c0_47 = arith.constant 0 : index
      %c0_48 = arith.constant 0 : index
      %52 = vector.load %arg10[%c1_46, %c0_47, %c0_48] : memref<2x256x128xf32, #tpu.memory_space<vmem>>, vector<1x256x128xf32>
      %53 = vector.shape_cast %52 : vector<1x256x128xf32> to vector<256x128xf32>
      %c1_49 = arith.constant 1 : index
      %c0_50 = arith.constant 0 : index
      %c0_51 = arith.constant 0 : index
      %54 = vector.load %arg4[%c1_49, %c0_50, %c0_51] : memref<2x256x128xf32, #tpu.memory_space<vmem>>, vector<1x256x128xf32>
      %55 = vector.shape_cast %54 : vector<1x256x128xf32> to vector<256x128xf32>
      %56 = arith.addf %53, %55 : vector<256x128xf32>
      %57 = arith.truncf %56 : vector<256x128xf32> to vector<256x128xbf16>
      %c1_52 = arith.constant 1 : index
      %c0_53 = arith.constant 0 : index
      %c0_54 = arith.constant 0 : index
      %58 = vector.load %arg5[%c1_52, %c0_53, %c0_54] : memref<2x128x128xbf16, #tpu.memory_space<vmem>>, vector<1x128x128xbf16>
      %59 = vector.shape_cast %58 : vector<1x128x128xbf16> to vector<128x128xbf16>
      %cst_55 = arith.constant dense<0.000000e+00> : vector<256x128xf32>
      %60 = tpu.matmul %57, %59, %cst_55 {dimension_numbers = #tpu.dot_dimension_numbers<[1], [0], [0], [1], [0, 0, 1, 1], [], []>} : vector<256x128xbf16>, vector<128x128xbf16>, vector<256x128xf32> -> vector<256x128xf32>
      %c1_56 = arith.constant 1 : index
      %c0_57 = arith.constant 0 : index
      %c0_58 = arith.constant 0 : index
      %61 = vector.load %arg6[%c1_56, %c0_57, %c0_58] : memref<2x1x128xf32, #tpu.memory_space<vmem>>, vector<1x1x128xf32>
      %62 = vector.shape_cast %61 : vector<1x1x128xf32> to vector<1x128xf32>
      %63 = vector.broadcast %62 : vector<1x128xf32> to vector<256x128xf32>
      %64 = arith.addf %60, %63 : vector<256x128xf32>
      %cst_59 = arith.constant 0.000000e+00 : f32
      %65 = vector.broadcast %cst_59 : f32 to vector<256x128xf32>
      %66 = arith.maximumf %64, %65 : vector<256x128xf32>
      %67 = arith.truncf %66 : vector<256x128xf32> to vector<256x128xbf16>
      %c1_60 = arith.constant 1 : index
      %c0_61 = arith.constant 0 : index
      %c0_62 = arith.constant 0 : index
      %68 = vector.load %arg7[%c1_60, %c0_61, %c0_62] : memref<2x128x128xbf16, #tpu.memory_space<vmem>>, vector<1x128x128xbf16>
      %69 = vector.shape_cast %68 : vector<1x128x128xbf16> to vector<128x128xbf16>
      %cst_63 = arith.constant dense<0.000000e+00> : vector<256x128xf32>
      %70 = tpu.matmul %67, %69, %cst_63 {dimension_numbers = #tpu.dot_dimension_numbers<[1], [0], [0], [1], [0, 0, 1, 1], [], []>} : vector<256x128xbf16>, vector<128x128xbf16>, vector<256x128xf32> -> vector<256x128xf32>
      %c1_64 = arith.constant 1 : index
      %c0_65 = arith.constant 0 : index
      %c0_66 = arith.constant 0 : index
      %71 = vector.load %arg8[%c1_64, %c0_65, %c0_66] : memref<2x1x128xf32, #tpu.memory_space<vmem>>, vector<1x1x128xf32>
      %72 = vector.shape_cast %71 : vector<1x1x128xf32> to vector<1x128xf32>
      %73 = vector.broadcast %72 : vector<1x128xf32> to vector<256x128xf32>
      %74 = arith.addf %70, %73 : vector<256x128xf32>
      %75 = arith.truncf %74 : vector<256x128xf32> to vector<256x128xbf16>
      %c1_67 = arith.constant 1 : index
      %c0_68 = arith.constant 0 : index
      %c0_69 = arith.constant 0 : index
      %76 = vector.load %arg9[%c1_67, %c0_68, %c0_69] : memref<2x256x128xbf16, #tpu.memory_space<vmem>>, vector<1x256x128xbf16>
      %77 = vector.shape_cast %76 : vector<1x256x128xbf16> to vector<256x128xbf16>
      %78 = vector.shape_cast %75 : vector<256x128xbf16> to vector<1x256x128xbf16>
      tpu.vector_store %arg9[%c1_67, %c0_68, %c0_69], %78 {strides = array<i32>} : memref<2x256x128xbf16, #tpu.memory_space<vmem>>, vector<1x256x128xbf16>,
    } else {
    }
    return
  }
  func.func @transform_0(%arg0: i32, %arg1: i32) -> (i32, i32) {
    %c0_i32 = arith.constant 0 : i32
    return %arg0, %arg1 : i32, i32
  }
  func.func @transform_1(%arg0: i32, %arg1: i32) -> (i32, i32, i32) {
    %c0_i32 = arith.constant 0 : i32
    %c0_i32_0 = arith.constant 0 : i32
    %c0_i32_1 = arith.constant 0 : i32
    return %c0_i32, %arg1, %c0_i32_0 : i32, i32, i32
  }
  func.func @transform_2(%arg0: i32, %arg1: i32) -> (i32, i32, i32) {
    %c0_i32 = arith.constant 0 : i32
    %c0_i32_0 = arith.constant 0 : i32
    %c0_i32_1 = arith.constant 0 : i32
    return %c0_i32, %arg0, %c0_i32_0 : i32, i32, i32
  }
  func.func @transform_3(%arg0: i32, %arg1: i32) -> (i32, i32, i32) {
    %c0_i32 = arith.constant 0 : i32
    %c0_i32_0 = arith.constant 0 : i32
    %c0_i32_1 = arith.constant 0 : i32
    %c0_i32_2 = arith.constant 0 : i32
    return %c0_i32, %c0_i32_0, %c0_i32_1 : i32, i32, i32
  }
  func.func @transform_4(%arg0: i32, %arg1: i32) -> (i32, i32, i32) {
    %c0_i32 = arith.constant 0 : i32
    %c0_i32_0 = arith.constant 0 : i32
    %c0_i32_1 = arith.constant 0 : i32
    %c0_i32_2 = arith.constant 0 : i32
    return %c0_i32, %c0_i32_0, %c0_i32_1 : i32, i32, i32
  }
  func.func @transform_5(%arg0: i32, %arg1: i32) -> (i32, i32, i32) {
    %c0_i32 = arith.constant 0 : i32
    %c0_i32_0 = arith.constant 0 : i32
    %c0_i32_1 = arith.constant 0 : i32
    %c0_i32_2 = arith.constant 0 : i32
    return %c0_i32, %c0_i32_0, %c0_i32_1 : i32, i32, i32
  }
  func.func @transform_6(%arg0: i32, %arg1: i32) -> (i32, i32, i32) {
    %c0_i32 = arith.constant 0 : i32
    %c0_i32_0 = arith.constant 0 : i32
    %c0_i32_1 = arith.constant 0 : i32
    %c0_i32_2 = arith.constant 0 : i32
    return %c0_i32, %c0_i32_0, %c0_i32_1 : i32, i32, i32
  }
  func.func @transform_7(%arg0: i32, %arg1: i32) -> (i32, i32, i32) {
    %c0_i32 = arith.constant 0 : i32
    %c0_i32_0 = arith.constant 0 : i32
    %c0_i32_1 = arith.constant 0 : i32
    return %c0_i32, %arg0, %c0_i32_0 : i32, i32, i32
  }
}

module attributes {stable_mosaic.version = 11 : i64} {
  func.func @_pool_pred_kernel(%arg0: i32, %arg1: memref<2x256xbf16, #tpu.memory_space<vmem>>, %arg2: memref<2x256x128xbf16, #tpu.memory_space<vmem>>, %arg3: memref<2x128x3xf32, #tpu.memory_space<vmem>>, %arg4: memref<2x1xf32, #tpu.memory_space<vmem>>, %arg5: memref<1x3xf32, #tpu.memory_space<vmem>>, %arg6: memref<2x3xf32, #tpu.memory_space<vmem>>, %arg7: memref<2x2x128xf32, #tpu.memory_space<vmem>>) attributes {dimension_semantics = [#tpu.dimension_semantics<arbitrary>], iteration_bounds = array<i64: 1>, scalar_prefetch = 0 : i64, scratch_operands = 1 : i64, tpu.core_type = #tpu.core_type<tc>, window_params = [{transform_indices = @transform_0, window_bounds = array<i64: 2, 256>}, {transform_indices = @transform_1, window_bounds = array<i64: 2, 256, 128>}, {pipeline_mode = #tpu.pipeline_mode<synchronous>, transform_indices = @transform_2, window_bounds = array<i64: 2, 128, 3>}, {pipeline_mode = #tpu.pipeline_mode<synchronous>, transform_indices = @transform_3, window_bounds = array<i64: 2, 1>}, {pipeline_mode = #tpu.pipeline_mode<synchronous>, transform_indices = @transform_4, window_bounds = array<i64: 1, 3>}, {pipeline_mode = #tpu.pipeline_mode<synchronous>, transform_indices = @transform_5, window_bounds = array<i64: 2, 3>}]} {
    %c0_i32 = arith.constant 0 : i32
    %0 = arith.cmpi eq, %arg0, %c0_i32 : i32
    %1 = arith.extui %0 : i1 to i32
    %c0_i32_0 = arith.constant 0 : i32
    %2 = arith.cmpi ne, %1, %c0_i32_0 : i32
    scf.if %2 {
      %cst_22 = arith.constant 0.000000e+00 : f32
      %25 = vector.broadcast %cst_22 : f32 to vector<2x2x128xf32>
      %c0_23 = arith.constant 0 : index
      %c0_24 = arith.constant 0 : index
      %c0_25 = arith.constant 0 : index
      %26 = vector.load %arg7[%c0_23, %c0_24, %c0_25] : memref<2x2x128xf32, #tpu.memory_space<vmem>>, vector<2x2x128xf32>
      tpu.vector_store %arg7[%c0_23, %c0_24, %c0_25], %25 {strides = array<i32>} : memref<2x2x128xf32, #tpu.memory_space<vmem>>, vector<2x2x128xf32>,
    } else {
    }
    %c0 = arith.constant 0 : index
    %c0_1 = arith.constant 0 : index
    %3 = vector.load %arg1[%c0, %c0_1] : memref<2x256xbf16, #tpu.memory_space<vmem>>, vector<2x256xbf16>
    %c0_2 = arith.constant 0 : index
    %c0_3 = arith.constant 0 : index
    %c0_4 = arith.constant 0 : index
    %4 = vector.load %arg7[%c0_2, %c0_3, %c0_4] : memref<2x2x128xf32, #tpu.memory_space<vmem>>, vector<1x2x128xf32>
    %5 = vector.shape_cast %4 : vector<1x2x128xf32> to vector<2x128xf32>
    %c0_5 = arith.constant 0 : index
    %c0_6 = arith.constant 0 : index
    %c0_7 = arith.constant 0 : index
    %6 = vector.load %arg2[%c0_5, %c0_6, %c0_7] : memref<2x256x128xbf16, #tpu.memory_space<vmem>>, vector<1x256x128xbf16>
    %7 = vector.shape_cast %6 : vector<1x256x128xbf16> to vector<256x128xbf16>
    %cst = arith.constant dense<0.000000e+00> : vector<2x128xf32>
    %8 = tpu.matmul %3, %7, %cst {dimension_numbers = #tpu.dot_dimension_numbers<[1], [0], [0], [1], [0, 0, 1, 1], [], []>} : vector<2x256xbf16>, vector<256x128xbf16>, vector<2x128xf32> -> vector<2x128xf32>
    %9 = arith.addf %5, %8 : vector<2x128xf32>
    %c0_8 = arith.constant 0 : index
    %c0_9 = arith.constant 0 : index
    %c0_10 = arith.constant 0 : index
    %10 = vector.load %arg7[%c0_8, %c0_9, %c0_10] : memref<2x2x128xf32, #tpu.memory_space<vmem>>, vector<1x2x128xf32>
    %11 = vector.shape_cast %10 : vector<1x2x128xf32> to vector<2x128xf32>
    %12 = vector.shape_cast %9 : vector<2x128xf32> to vector<1x2x128xf32>
    tpu.vector_store %arg7[%c0_8, %c0_9, %c0_10], %12 {strides = array<i32>} : memref<2x2x128xf32, #tpu.memory_space<vmem>>, vector<1x2x128xf32>,
    %c1 = arith.constant 1 : index
    %c0_11 = arith.constant 0 : index
    %c0_12 = arith.constant 0 : index
    %13 = vector.load %arg7[%c1, %c0_11, %c0_12] : memref<2x2x128xf32, #tpu.memory_space<vmem>>, vector<1x2x128xf32>
    %14 = vector.shape_cast %13 : vector<1x2x128xf32> to vector<2x128xf32>
    %c1_13 = arith.constant 1 : index
    %c0_14 = arith.constant 0 : index
    %c0_15 = arith.constant 0 : index
    %15 = vector.load %arg2[%c1_13, %c0_14, %c0_15] : memref<2x256x128xbf16, #tpu.memory_space<vmem>>, vector<1x256x128xbf16>
    %16 = vector.shape_cast %15 : vector<1x256x128xbf16> to vector<256x128xbf16>
    %cst_16 = arith.constant dense<0.000000e+00> : vector<2x128xf32>
    %17 = tpu.matmul %3, %16, %cst_16 {dimension_numbers = #tpu.dot_dimension_numbers<[1], [0], [0], [1], [0, 0, 1, 1], [], []>} : vector<2x256xbf16>, vector<256x128xbf16>, vector<2x128xf32> -> vector<2x128xf32>
    %18 = arith.addf %14, %17 : vector<2x128xf32>
    %c1_17 = arith.constant 1 : index
    %c0_18 = arith.constant 0 : index
    %c0_19 = arith.constant 0 : index
    %19 = vector.load %arg7[%c1_17, %c0_18, %c0_19] : memref<2x2x128xf32, #tpu.memory_space<vmem>>, vector<1x2x128xf32>
    %20 = vector.shape_cast %19 : vector<1x2x128xf32> to vector<2x128xf32>
    %21 = vector.shape_cast %18 : vector<2x128xf32> to vector<1x2x128xf32>
    tpu.vector_store %arg7[%c1_17, %c0_18, %c0_19], %21 {strides = array<i32>} : memref<2x2x128xf32, #tpu.memory_space<vmem>>, vector<1x2x128xf32>,
    %c0_i32_20 = arith.constant 0 : i32
    %22 = arith.cmpi eq, %arg0, %c0_i32_20 : i32
    %23 = arith.extui %22 : i1 to i32
    %c0_i32_21 = arith.constant 0 : i32
    %24 = arith.cmpi ne, %23, %c0_i32_21 : i32
    scf.if %24 {
      %c0_22 = arith.constant 0 : index
      %c0_23 = arith.constant 0 : index
      %25 = vector.load %arg4[%c0_22, %c0_23] : memref<2x1xf32, #tpu.memory_space<vmem>>, vector<2x1xf32>
      %c0_24 = arith.constant 0 : index
      %c0_25 = arith.constant 0 : index
      %26 = vector.load %arg5[%c0_24, %c0_25] : memref<1x3xf32, #tpu.memory_space<vmem>>, vector<1x3xf32>
      %c0_26 = arith.constant 0 : index
      %c0_27 = arith.constant 0 : index
      %c0_28 = arith.constant 0 : index
      %27 = vector.load %arg7[%c0_26, %c0_27, %c0_28] : memref<2x2x128xf32, #tpu.memory_space<vmem>>, vector<1x2x128xf32>
      %28 = vector.shape_cast %27 : vector<1x2x128xf32> to vector<2x128xf32>
      %29 = vector.broadcast %25 : vector<2x1xf32> to vector<2x128xf32>
      %30 = arith.mulf %28, %29 : vector<2x128xf32>
      %c0_29 = arith.constant 0 : index
      %c0_30 = arith.constant 0 : index
      %c0_31 = arith.constant 0 : index
      %31 = vector.load %arg3[%c0_29, %c0_30, %c0_31] : memref<2x128x3xf32, #tpu.memory_space<vmem>>, vector<1x128x3xf32>
      %32 = vector.shape_cast %31 : vector<1x128x3xf32> to vector<128x3xf32>
      %cst_32 = arith.constant dense<0.000000e+00> : vector<2x3xf32>
      %33 = tpu.matmul %30, %32, %cst_32 {dimension_numbers = #tpu.dot_dimension_numbers<[1], [0], [0], [1], [0, 0, 1, 1], [], []>} : vector<2x128xf32>, vector<128x3xf32>, vector<2x3xf32> -> vector<2x3xf32>
      %34 = vector.broadcast %26 : vector<1x3xf32> to vector<2x3xf32>
      %35 = arith.addf %34, %33 : vector<2x3xf32>
      %c1_33 = arith.constant 1 : index
      %c0_34 = arith.constant 0 : index
      %c0_35 = arith.constant 0 : index
      %36 = vector.load %arg7[%c1_33, %c0_34, %c0_35] : memref<2x2x128xf32, #tpu.memory_space<vmem>>, vector<1x2x128xf32>
      %37 = vector.shape_cast %36 : vector<1x2x128xf32> to vector<2x128xf32>
      %38 = vector.broadcast %25 : vector<2x1xf32> to vector<2x128xf32>
      %39 = arith.mulf %37, %38 : vector<2x128xf32>
      %c1_36 = arith.constant 1 : index
      %c0_37 = arith.constant 0 : index
      %c0_38 = arith.constant 0 : index
      %40 = vector.load %arg3[%c1_36, %c0_37, %c0_38] : memref<2x128x3xf32, #tpu.memory_space<vmem>>, vector<1x128x3xf32>
      %41 = vector.shape_cast %40 : vector<1x128x3xf32> to vector<128x3xf32>
      %cst_39 = arith.constant dense<0.000000e+00> : vector<2x3xf32>
      %42 = tpu.matmul %39, %41, %cst_39 {dimension_numbers = #tpu.dot_dimension_numbers<[1], [0], [0], [1], [0, 0, 1, 1], [], []>} : vector<2x128xf32>, vector<128x3xf32>, vector<2x3xf32> -> vector<2x3xf32>
      %43 = arith.addf %35, %42 : vector<2x3xf32>
      %c0_40 = arith.constant 0 : index
      %c0_41 = arith.constant 0 : index
      %44 = vector.load %arg6[%c0_40, %c0_41] : memref<2x3xf32, #tpu.memory_space<vmem>>, vector<2x3xf32>
      tpu.vector_store %arg6[%c0_40, %c0_41], %43 {strides = array<i32>} : memref<2x3xf32, #tpu.memory_space<vmem>>, vector<2x3xf32>,
    } else {
    }
    return
  }
  func.func @transform_0(%arg0: i32) -> (i32, i32) {
    %c0_i32 = arith.constant 0 : i32
    %c0_i32_0 = arith.constant 0 : i32
    return %c0_i32, %arg0 : i32, i32
  }
  func.func @transform_1(%arg0: i32) -> (i32, i32, i32) {
    %c0_i32 = arith.constant 0 : i32
    %c0_i32_0 = arith.constant 0 : i32
    %c0_i32_1 = arith.constant 0 : i32
    return %c0_i32, %arg0, %c0_i32_0 : i32, i32, i32
  }
  func.func @transform_2(%arg0: i32) -> (i32, i32, i32) {
    %c0_i32 = arith.constant 0 : i32
    %c0_i32_0 = arith.constant 0 : i32
    %c0_i32_1 = arith.constant 0 : i32
    %c0_i32_2 = arith.constant 0 : i32
    return %c0_i32, %c0_i32_0, %c0_i32_1 : i32, i32, i32
  }
  func.func @transform_3(%arg0: i32) -> (i32, i32) {
    %c0_i32 = arith.constant 0 : i32
    %c0_i32_0 = arith.constant 0 : i32
    %c0_i32_1 = arith.constant 0 : i32
    return %c0_i32, %c0_i32_0 : i32, i32
  }
  func.func @transform_4(%arg0: i32) -> (i32, i32) {
    %c0_i32 = arith.constant 0 : i32
    %c0_i32_0 = arith.constant 0 : i32
    %c0_i32_1 = arith.constant 0 : i32
    return %c0_i32, %c0_i32_0 : i32, i32
  }
  func.func @transform_5(%arg0: i32) -> (i32, i32) {
    %c0_i32 = arith.constant 0 : i32
    %c0_i32_0 = arith.constant 0 : i32
    %c0_i32_1 = arith.constant 0 : i32
    return %c0_i32, %c0_i32_0 : i32, i32
  }
}

</mosaic_0001>

<llo_original>
// kernel: student_graphpred_forward.5
$region0: #{student_graphpred_forward.5}
  #allocation0 [shape = 'u32[]', space=smem, size = 0x4, offset = 0x4, fixed_abs, tag = 'smem constant byte address 0x4 - core index']
  #allocation1 [shape = 'u32[72,128]{1,0:T(1,128)}', space=vmem, size = 0x9000, scoped, tag = 'internal scratch']
  #allocation2 [shape = 'f32[2,2,128]{2,1,0:T(2,128)}', space=vmem, size = 0x800, scoped, tag = 'scratch operand']
  %s0 = inlined_call_operand.vmem [shape: bf16[2,256], index: 0, kind: input, shape index: {}]
  %s1 = inlined_call_operand.vmem [shape: bf16[2,256,128], index: 1, kind: input, shape index: {}]
  %s2 = inlined_call_operand.vmem [shape: f32[2,128,3], index: 2, kind: input, shape index: {}]
  %s3 = inlined_call_operand.vmem [shape: f32[2,1], index: 3, kind: input, shape index: {}]
  %s4 = inlined_call_operand.vmem [shape: f32[1,3], index: 4, kind: input, shape index: {}]
  %s5 = inlined_call_operand.hbm [shape: f32[2,3], index: 5, kind: output, shape index: {}]
  %s6 = sld [smem:[#allocation0]]
  $region38: #{student_graphpred_forward.5} parent=0
    _
  %s8 = ssub.s32 1, %s6
  %s9 = scalar_select 0, %s8, %s6
  $region1: #{student_graphpred_forward.5} parent=0
    #allocation3 [shape = 'u8[1024]{0}', space=vmem, size = 0x400, scoped, tag = 'output window, operand 0, single buffered']
    #allocation4 [shape = 's32[1]{0}', space=sflag, size = 0x4, scoped, tag = 'scoped memory for student_graphpred_forward.5']
    %10 = vsyncpa [#allocation4], 0
    // Predicated region
    $region2: #{student_graphpred_forward.5} parent=1 // pred_check
      _
    $region3: #{student_graphpred_forward.5} parent=1 // pred_check_branch
      %12 = sbr.rel (0) target = $region5
    $region4: #{student_graphpred_forward.5} parent=1 // pred_region
      _
    $region5: #{student_graphpred_forward.5} parent=1 // pred_fallthru
      _
    // Predicated region
    $region6: #{student_graphpred_forward.5} parent=1 // pred_check
      _
    $region7: #{student_graphpred_forward.5} parent=1 // pred_check_branch
      %14 = sbr.rel (0) target = $region9
    $region8: #{student_graphpred_forward.5} parent=1 // pred_region
      _
    $region9: #{student_graphpred_forward.5} parent=1 // pred_fallthru
      _
    // Predicated region
    $region10: #{student_graphpred_forward.5} parent=1 // pred_check
      _
    $region11: #{student_graphpred_forward.5} parent=1 // pred_check_branch
      %16 = sbr.rel (0) target = $region13
    $region12: #{student_graphpred_forward.5} parent=1 // pred_region
      _
    $region13: #{student_graphpred_forward.5} parent=1 // pred_fallthru
      _
    // Predicated region
    $region14: #{student_graphpred_forward.5} parent=1 // pred_check
      _
    $region15: #{student_graphpred_forward.5} parent=1 // pred_check_branch
      %18 = sbr.rel (0) target = $region17
    $region16: #{student_graphpred_forward.5} parent=1 // pred_region
      _
    $region17: #{student_graphpred_forward.5} parent=1 // pred_fallthru
      _
    // Predicated region
    $region18: #{student_graphpred_forward.5} parent=1 // pred_check
      _
    $region19: #{student_graphpred_forward.5} parent=1 // pred_check_branch
      %20 = sbr.rel (0) target = $region21
    $region20: #{student_graphpred_forward.5} parent=1 // pred_region
      _
    $region21: #{student_graphpred_forward.5} parent=1 // pred_fallthru
      _
    %p21 = scmp.eq.s32.totalorder 0, 0
    // Predicated region
    $region22: #{student_graphpred_forward.5} parent=1 // pred_check
      %p22 = pneg %p21
    $region23: #{student_graphpred_forward.5} parent=1 // pred_check_branch
      %24 = sbr.rel (%p22) target = $region25
    $region24: #{student_graphpred_forward.5} parent=1 // pred_region
      %25 = vst [vmem:[#allocation2] sm:$0x3] 0.0
      %26 = vst [vmem:[#allocation2 + $0x2] sm:$0x3] 0.0
    $region25: #{student_graphpred_forward.5} parent=1 // pred_fallthru
      _
    %v27 = vld [vmem:[%s0] sm:$0x3]
    %v28 = vld [vmem:[#allocation2] sm:$0x3]
    %v29 = vld [vmem:[%s1] sm:$0xf]
    %v30 = vld [vmem:[%s1 + $0x4] sm:$0xf]
    %v31 = vld [vmem:[%s1 + $0x8] sm:$0xf]
    %v32 = vld [vmem:[%s1 + $0xc] sm:$0xf]
    %v33 = vld [vmem:[%s1 + $0x10] sm:$0xf]
    %v34 = vld [vmem:[%s1 + $0x14] sm:$0xf]
    %v35 = vld [vmem:[%s1 + $0x18] sm:$0xf]
    %v36 = vld [vmem:[%s1 + $0x1c] sm:$0xf]
    %v37 = vld [vmem:[%s1 + $0x20] sm:$0xf]
    %v38 = vld [vmem:[%s1 + $0x24] sm:$0xf]
    %v39 = vld [vmem:[%s1 + $0x28] sm:$0xf]
    %v40 = vld [vmem:[%s1 + $0x2c] sm:$0xf]
    %v41 = vld [vmem:[%s1 + $0x30] sm:$0xf]
    %v42 = vld [vmem:[%s1 + $0x34] sm:$0xf]
    %v43 = vld [vmem:[%s1 + $0x38] sm:$0xf]
    %v44 = vld [vmem:[%s1 + $0x3c] sm:$0xf]
    %v45 = vld [vmem:[%s1 + $0x40] sm:$0xf]
    %v46 = vld [vmem:[%s1 + $0x44] sm:$0xf]
    %v47 = vld [vmem:[%s1 + $0x48] sm:$0xf]
    %v48 = vld [vmem:[%s1 + $0x4c] sm:$0xf]
    %v49 = vld [vmem:[%s1 + $0x50] sm:$0xf]
    %v50 = vld [vmem:[%s1 + $0x54] sm:$0xf]
    %v51 = vld [vmem:[%s1 + $0x58] sm:$0xf]
    %v52 = vld [vmem:[%s1 + $0x5c] sm:$0xf]
    %v53 = vld [vmem:[%s1 + $0x60] sm:$0xf]
    %v54 = vld [vmem:[%s1 + $0x64] sm:$0xf]
    %v55 = vld [vmem:[%s1 + $0x68] sm:$0xf]
    %v56 = vld [vmem:[%s1 + $0x6c] sm:$0xf]
    %v57 = vld [vmem:[%s1 + $0x70] sm:$0xf]
    %v58 = vld [vmem:[%s1 + $0x74] sm:$0xf]
    %v59 = vld [vmem:[%s1 + $0x78] sm:$0xf]
    %v60 = vld [vmem:[%s1 + $0x7c] sm:$0xf]
    %62 = vst [vmem:[#allocation1] ss:$9 sm:$0xff] %v27
    %v63 = vld [vmem:[#allocation1] sm:$0xff]
    %v64 = vld [vmem:[#allocation1 + $0x9] sm:$0xff]
    %v99 = vunpack.c.l.b16 %v29
    %v100 = vunpack.c.l.b16 %v30
    %v101 = vunpack.c.l.b16 %v31
    %v102 = vunpack.c.l.b16 %v32
    %v103 = vunpack.c.l.b16 %v33
    %v104 = vunpack.c.l.b16 %v34
    %v105 = vunpack.c.l.b16 %v35
    %v106 = vunpack.c.l.b16 %v36
    %v107 = vunpack.c.l.b16 %v37
    %v108 = vunpack.c.l.b16 %v38
    %v109 = vunpack.c.l.b16 %v39
    %v110 = vunpack.c.l.b16 %v40
    %v111 = vunpack.c.l.b16 %v41
    %v112 = vunpack.c.l.b16 %v42
    %v113 = vunpack.c.l.b16 %v43
    %v114 = vunpack.c.l.b16 %v44
    %v115 = vunpack.c.l.b16 %v45
    %v116 = vunpack.c.l.b16 %v46
    %v117 = vunpack.c.l.b16 %v47
    %v118 = vunpack.c.l.b16 %v48
    %v119 = vunpack.c.l.b16 %v49
    %v120 = vunpack.c.l.b16 %v50
    %v121 = vunpack.c.l.b16 %v51
    %v122 = vunpack.c.l.b16 %v52
    %v123 = vunpack.c.l.b16 %v53
    %v124 = vunpack.c.l.b16 %v54
    %v125 = vunpack.c.l.b16 %v55
    %v126 = vunpack.c.l.b16 %v56
    %v127 = vunpack.c.l.b16 %v57
    %v128 = vunpack.c.l.b16 %v58
    %v129 = vunpack.c.l.b16 %v59
    %v130 = vunpack.c.l.b16 %v60
    %v131 = vpack.c.b16 %v100, %v99
    %v132 = vpack.c.b16 %v102, %v101
    %v133 = vpack.c.b16 %v104, %v103
    %v134 = vpack.c.b16 %v106, %v105
    %v135 = vpack.c.b16 %v108, %v107
    %v136 = vpack.c.b16 %v110, %v109
    %v137 = vpack.c.b16 %v112, %v111
    %v138 = vpack.c.b16 %v114, %v113
    %v139 = vpack.c.b16 %v116, %v115
    %v140 = vpack.c.b16 %v118, %v117
    %v141 = vpack.c.b16 %v120, %v119
    %v142 = vpack.c.b16 %v122, %v121
    %v143 = vpack.c.b16 %v124, %v123
    %v144 = vpack.c.b16 %v126, %v125
    %v145 = vpack.c.b16 %v128, %v127
    %v146 = vpack.c.b16 %v130, %v129
    %163 = vmatpush.bf16.msra.mxu0 %v138
    %164 = vmatpush.bf16.msra.mxu0 %v137
    %165 = vmatpush.bf16.msra.mxu0 %v136
    %166 = vmatpush.bf16.msra.mxu0 %v135
    %167 = vmatpush.bf16.msra.mxu0 %v134
    %168 = vmatpush.bf16.msra.mxu0 %v133
    %169 = vmatpush.bf16.msra.mxu0 %v132
    %170 = vmatpush.bf16.msra.mxu0 %v131
    %171 = vmatmul.bf16.gmra.mxu0 %v63
    %v172 = vpop.f32.mrf.mxu0
    %v173 = vadd.f32 0.0, %v172
    %v174 = vpop.f32.mrf.mxu0
    %175 = vdwg.mxu0
    %176 = vmatpush.bf16.msra.mxu0 %v146
    %177 = vmatpush.bf16.msra.mxu0 %v145
    %178 = vmatpush.bf16.msra.mxu0 %v144
    %179 = vmatpush.bf16.msra.mxu0 %v143
    %180 = vmatpush.bf16.msra.mxu0 %v142
    %181 = vmatpush.bf16.msra.mxu0 %v141
    %182 = vmatpush.bf16.msra.mxu0 %v140
    %183 = vmatpush.bf16.msra.mxu0 %v139
    %184 = vmatmul.bf16.gmra.mxu0 %v64
    %v185 = vpop.f32.mrf.mxu0
    %v186 = vadd.f32 %v173, %v185
    %v187 = vpop.f32.mrf.mxu0
    %188 = vdwg.mxu0
    %v189 = vadd.f32 %v28, %v186
    %190 = vst [vmem:[#allocation2] sm:$0x3] %v189
    %s191 = scalar_lea.vmem [#allocation2], 2
    %v192 = vld [vmem:[%s191] sm:$0x3]
    %s193 = scalar_lea.vmem %s1, 128
    %v194 = vld [vmem:[%s193] sm:$0xf]
    %v195 = vld [vmem:[%s193 + $0x4] sm:$0xf]
    %v196 = vld [vmem:[%s193 + $0x8] sm:$0xf]
    %v197 = vld [vmem:[%s193 + $0xc] sm:$0xf]
    %v198 = vld [vmem:[%s193 + $0x10] sm:$0xf]
    %v199 = vld [vmem:[%s193 + $0x14] sm:$0xf]
    %v200 = vld [vmem:[%s193 + $0x18] sm:$0xf]
    %v201 = vld [vmem:[%s193 + $0x1c] sm:$0xf]
    %v202 = vld [vmem:[%s193 + $0x20] sm:$0xf]
    %v203 = vld [vmem:[%s193 + $0x24] sm:$0xf]
    %v204 = vld [vmem:[%s193 + $0x28] sm:$0xf]
    %v205 = vld [vmem:[%s193 + $0x2c] sm:$0xf]
    %v206 = vld [vmem:[%s193 + $0x30] sm:$0xf]
    %v207 = vld [vmem:[%s193 + $0x34] sm:$0xf]
    %v208 = vld [vmem:[%s193 + $0x38] sm:$0xf]
    %v209 = vld [vmem:[%s193 + $0x3c] sm:$0xf]
    %v210 = vld [vmem:[%s193 + $0x40] sm:$0xf]
    %v211 = vld [vmem:[%s193 + $0x44] sm:$0xf]
    %v212 = vld [vmem:[%s193 + $0x48] sm:$0xf]
    %v213 = vld [vmem:[%s193 + $0x4c] sm:$0xf]
    %v214 = vld [vmem:[%s193 + $0x50] sm:$0xf]
    %v215 = vld [vmem:[%s193 + $0x54] sm:$0xf]
    %v216 = vld [vmem:[%s193 + $0x58] sm:$0xf]
    %v217 = vld [vmem:[%s193 + $0x5c] sm:$0xf]
    %v218 = vld [vmem:[%s193 + $0x60] sm:$0xf]
    %v219 = vld [vmem:[%s193 + $0x64] sm:$0xf]
    %v220 = vld [vmem:[%s193 + $0x68] sm:$0xf]
    %v221 = vld [vmem:[%s193 + $0x6c] sm:$0xf]
    %v222 = vld [vmem:[%s193 + $0x70] sm:$0xf]
    %v223 = vld [vmem:[%s193 + $0x74] sm:$0xf]
    %v224 = vld [vmem:[%s193 + $0x78] sm:$0xf]
    %v225 = vld [vmem:[%s193 + $0x7c] sm:$0xf]
    %226 = vst [vmem:[#allocation1] ss:$9 sm:$0xff] %v27
    %v227 = vld [vmem:[#allocation1] sm:$0xff]
    %v228 = vld [vmem:[#allocation1 + $0x9] sm:$0xff]
    %v263 = vunpack.c.l.b16 %v194
    %v264 = vunpack.c.l.b16 %v195
    %v265 = vunpack.c.l.b16 %v196
    %v266 = vunpack.c.l.b16 %v197
    %v267 = vunpack.c.l.b16 %v198
    %v268 = vunpack.c.l.b16 %v199
    %v269 = vunpack.c.l.b16 %v200
    %v270 = vunpack.c.l.b16 %v201
    %v271 = vunpack.c.l.b16 %v202
    %v272 = vunpack.c.l.b16 %v203
    %v273 = vunpack.c.l.b16 %v204
    %v274 = vunpack.c.l.b16 %v205
    %v275 = vunpack.c.l.b16 %v206
    %v276 = vunpack.c.l.b16 %v207
    %v277 = vunpack.c.l.b16 %v208
    %v278 = vunpack.c.l.b16 %v209
    %v279 = vunpack.c.l.b16 %v210
    %v280 = vunpack.c.l.b16 %v211
    %v281 = vunpack.c.l.b16 %v212
    %v282 = vunpack.c.l.b16 %v213
    %v283 = vunpack.c.l.b16 %v214
    %v284 = vunpack.c.l.b16 %v215
    %v285 = vunpack.c.l.b16 %v216
    %v286 = vunpack.c.l.b16 %v217
    %v287 = vunpack.c.l.b16 %v218
    %v288 = vunpack.c.l.b16 %v219
    %v289 = vunpack.c.l.b16 %v220
    %v290 = vunpack.c.l.b16 %v221
    %v291 = vunpack.c.l.b16 %v222
    %v292 = vunpack.c.l.b16 %v223
    %v293 = vunpack.c.l.b16 %v224
    %v294 = vunpack.c.l.b16 %v225
    %v295 = vpack.c.b16 %v264, %v263
    %v296 = vpack.c.b16 %v266, %v265
    %v297 = vpack.c.b16 %v268, %v267
    %v298 = vpack.c.b16 %v270, %v269
    %v299 = vpack.c.b16 %v272, %v271
    %v300 = vpack.c.b16 %v274, %v273
    %v301 = vpack.c.b16 %v276, %v275
    %v302 = vpack.c.b16 %v278, %v277
    %v303 = vpack.c.b16 %v280, %v279
    %v304 = vpack.c.b16 %v282, %v281
    %v305 = vpack.c.b16 %v284, %v283
    %v306 = vpack.c.b16 %v286, %v285
    %v307 = vpack.c.b16 %v288, %v287
    %v308 = vpack.c.b16 %v290, %v289
    %v309 = vpack.c.b16 %v292, %v291
    %v310 = vpack.c.b16 %v294, %v293
    %327 = vmatpush.bf16.msra.mxu0 %v302
    %328 = vmatpush.bf16.msra.mxu0 %v301
    %329 = vmatpush.bf16.msra.mxu0 %v300
    %330 = vmatpush.bf16.msra.mxu0 %v299
    %331 = vmatpush.bf16.msra.mxu0 %v298
    %332 = vmatpush.bf16.msra.mxu0 %v297
    %333 = vmatpush.bf16.msra.mxu0 %v296
    %334 = vmatpush.bf16.msra.mxu0 %v295
    %335 = vmatmul.bf16.gmra.mxu0 %v227
    %v336 = vpop.f32.mrf.mxu0
    %v337 = vadd.f32 0.0, %v336
    %v338 = vpop.f32.mrf.mxu0
    %339 = vdwg.mxu0
    %340 = vmatpush.bf16.msra.mxu0 %v310
    %341 = vmatpush.bf16.msra.mxu0 %v309
    %342 = vmatpush.bf16.msra.mxu0 %v308
    %343 = vmatpush.bf16.msra.mxu0 %v307
    %344 = vmatpush.bf16.msra.mxu0 %v306
    %345 = vmatpush.bf16.msra.mxu0 %v305
    %346 = vmatpush.bf16.msra.mxu0 %v304
    %347 = vmatpush.bf16.msra.mxu0 %v303
    %348 = vmatmul.bf16.gmra.mxu0 %v228
    %v349 = vpop.f32.mrf.mxu0
    %v350 = vadd.f32 %v337, %v349
    %v351 = vpop.f32.mrf.mxu0
    %352 = vdwg.mxu0
    %v353 = vadd.f32 %v192, %v350
    %354 = vst [vmem:[%s191] sm:$0x3] %v353
    // Predicated region
    $region26: #{student_graphpred_forward.5} parent=1 // pred_check
      %p355 = pneg %p21
    $region27: #{student_graphpred_forward.5} parent=1 // pred_check_branch
      %357 = sbr.rel (%p355) target = $region29
    $region28: #{student_graphpred_forward.5} parent=1 // pred_region
      %v358 = vld [vmem:[%s3] sm:$0x3]
      %v359 = vld [vmem:[%s4] sm:$0x1]
      %v360 = vld [vmem:[#allocation2] sm:$0x3]
      %362 = vset.pattern.permute.xlu0 0
      %363 = vperm.xlu0 %362, %v358
      %v364 = vpop.permute.xlu0 %363
      %v366 = vmul.f32 %v360, %v364
      %v367 = vld [vmem:[%s2] sm:$0xff]
      %v368 = vld [vmem:[%s2 + $0x8] sm:$0xff]
      %v369 = vld [vmem:[%s2 + $0x10] sm:$0xff]
      %v370 = vld [vmem:[%s2 + $0x18] sm:$0xff]
      %v371 = vld [vmem:[%s2 + $0x20] sm:$0xff]
      %v372 = vld [vmem:[%s2 + $0x28] sm:$0xff]
      %v373 = vld [vmem:[%s2 + $0x30] sm:$0xff]
      %v374 = vld [vmem:[%s2 + $0x38] sm:$0xff]
      %v375 = vld [vmem:[%s2 + $0x40] sm:$0xff]
      %v376 = vld [vmem:[%s2 + $0x48] sm:$0xff]
      %v377 = vld [vmem:[%s2 + $0x50] sm:$0xff]
      %v378 = vld [vmem:[%s2 + $0x58] sm:$0xff]
      %v379 = vld [vmem:[%s2 + $0x60] sm:$0xff]
      %v380 = vld [vmem:[%s2 + $0x68] sm:$0xff]
      %v381 = vld [vmem:[%s2 + $0x70] sm:$0xff]
      %v382 = vld [vmem:[%s2 + $0x78] sm:$0xff]
      %383 = vmatpush.msra.mxu0 %v382
      %384 = vmatpush.msra.mxu0 %v381
      %385 = vmatpush.msra.mxu0 %v380
      %386 = vmatpush.msra.mxu0 %v379
      %387 = vmatpush.msra.mxu0 %v378
      %388 = vmatpush.msra.mxu0 %v377
      %389 = vmatpush.msra.mxu0 %v376
      %390 = vmatpush.msra.mxu0 %v375
      %391 = vmatpush.msra.mxu0 %v374
      %392 = vmatpush.msra.mxu0 %v373
      %393 = vmatpush.msra.mxu0 %v372
      %394 = vmatpush.msra.mxu0 %v371
      %395 = vmatpush.msra.mxu0 %v370
      %396 = vmatpush.msra.mxu0 %v369
      %397 = vmatpush.msra.mxu0 %v368
      %398 = vmatpush.msra.mxu0 %v367
      %399 = vmatmul.f32.gmra.mxu0 %v366
      %v400 = vpop.f32.mrf.mxu0
      %v401 = vadd.f32 0.0, %v400
      %402 = vdwg.mxu0
      %v404 = vperm.slane %v359, 0
      %v406 = vadd.f32 %v404, %v401
      %v407 = vld [vmem:[%s191] sm:$0x3]
      %v408 = vmul.f32 %v407, %v364
      %s409 = scalar_lea.vmem %s2, 128
      %v410 = vld [vmem:[%s409] sm:$0xff]
      %v411 = vld [vmem:[%s409 + $0x8] sm:$0xff]
      %v412 = vld [vmem:[%s409 + $0x10] sm:$0xff]
      %v413 = vld [vmem:[%s409 + $0x18] sm:$0xff]
      %v414 = vld [vmem:[%s409 + $0x20] sm:$0xff]
      %v415 = vld [vmem:[%s409 + $0x28] sm:$0xff]
      %v416 = vld [vmem:[%s409 + $0x30] sm:$0xff]
      %v417 = vld [vmem:[%s409 + $0x38] sm:$0xff]
      %v418 = vld [vmem:[%s409 + $0x40] sm:$0xff]
      %v419 = vld [vmem:[%s409 + $0x48] sm:$0xff]
      %v420 = vld [vmem:[%s409 + $0x50] sm:$0xff]
      %v421 = vld [vmem:[%s409 + $0x58] sm:$0xff]
      %v422 = vld [vmem:[%s409 + $0x60] sm:$0xff]
      %v423 = vld [vmem:[%s409 + $0x68] sm:$0xff]
      %v424 = vld [vmem:[%s409 + $0x70] sm:$0xff]
      %v425 = vld [vmem:[%s409 + $0x78] sm:$0xff]
      %426 = vmatpush.msra.mxu0 %v425
      %427 = vmatpush.msra.mxu0 %v424
      %428 = vmatpush.msra.mxu0 %v423
      %429 = vmatpush.msra.mxu0 %v422
      %430 = vmatpush.msra.mxu0 %v421
      %431 = vmatpush.msra.mxu0 %v420
      %432 = vmatpush.msra.mxu0 %v419
      %433 = vmatpush.msra.mxu0 %v418
      %434 = vmatpush.msra.mxu0 %v417
      %435 = vmatpush.msra.mxu0 %v416
      %436 = vmatpush.msra.mxu0 %v415
      %437 = vmatpush.msra.mxu0 %v414
      %438 = vmatpush.msra.mxu0 %v413
      %439 = vmatpush.msra.mxu0 %v412
      %440 = vmatpush.msra.mxu0 %v411
      %441 = vmatpush.msra.mxu0 %v410
      %442 = vmatmul.f32.gmra.mxu0 %v408
      %v443 = vpop.f32.mrf.mxu0
      %v444 = vadd.f32 0.0, %v443
      %445 = vdwg.mxu0
      %v446 = vadd.f32 %v406, %v444
      %vm447 = vcmask 17408
      %448 = vst.msk [vmem:[#allocation3] sm:$0x3] %vm447, %v446
    $region29: #{student_graphpred_forward.5} parent=1 // pred_fallthru
      _
    // Predicated region
    $region30: #{student_graphpred_forward.5} parent=1 // pred_check
      _
    $region31: #{student_graphpred_forward.5} parent=1 // pred_check_branch
      %450 = sbr.rel (0) target = $region33
    $region32: #{student_graphpred_forward.5} parent=1 // pred_region
      %452 = vsyncadd [#allocation4], 0
      %s454 = sshll.u32 [#allocation3], 4
      %s455 = int_to_ptr.vmem [resolvable:$true] %s454
      %s456 = sshll.u32 %s5, 4
      %s457 = int_to_ptr.hbm [resolvable:$true] %s456
      %459 = dma.vmem_to_hbm [thread:$0]  %s455, 32, %s457, [#allocation4]
    $region33: #{student_graphpred_forward.5} parent=1 // pred_fallthru
      _
    // Predicated region
    $region34: #{student_graphpred_forward.5} parent=1 // pred_check
      _
    $region35: #{student_graphpred_forward.5} parent=1 // pred_check_branch
      %461 = sbr.rel (0) target = $region37
    $region36: #{student_graphpred_forward.5} parent=1 // pred_region
      %463 = dma.done [#allocation4], 32
    $region37: #{student_graphpred_forward.5} parent=1 // pred_fallthru
      _
    %464 = vsyncpa [#allocation4], 1

// kernel: student_graphpred_forward.4
$region0: #{student_graphpred_forward.4}
  #allocation0 [shape = 'u32[]', space=smem, size = 0x4, offset = 0x4, fixed_abs, tag = 'smem constant byte address 0x4 - core index']
  #allocation1 [shape = 'u32[72,128]{1,0:T(1,128)}', space=vmem, size = 0x9000, scoped, tag = 'internal scratch']
  #allocation2 [shape = 'f32[2,256,128]{2,1,0:T(8,128)}', space=vmem, size = 0x40000, scoped, tag = 'scratch operand']
  %s0 = inlined_call_operand.vmem [shape: bf16[256,256], index: 0, kind: input, shape index: {}]
  %s1 = inlined_call_operand.vmem [shape: bf16[2,256,128], index: 1, kind: input, shape index: {}]
  %s2 = inlined_call_operand.vmem [shape: f32[2,256,128], index: 2, kind: input, shape index: {}]
  %s3 = inlined_call_operand.vmem [shape: bf16[2,128,128], index: 3, kind: input, shape index: {}]
  %s4 = inlined_call_operand.vmem [shape: f32[2,1,128], index: 4, kind: input, shape index: {}]
  %s5 = inlined_call_operand.vmem [shape: bf16[2,128,128], index: 5, kind: input, shape index: {}]
  %s6 = inlined_call_operand.vmem [shape: f32[2,1,128], index: 6, kind: input, shape index: {}]
  %s7 = inlined_call_operand.vmem [shape: bf16[2,256,128], index: 7, kind: output, shape index: {}]
  %s8 = sld [smem:[#allocation0]]
  $region46: #{student_graphpred_forward.4} parent=0
    _
  %s10 = ssub.s32 1, %s8
  %s11 = scalar_select 0, %s10, %s8
  // Predicated region
  $region2: #{student_graphpred_forward.4} parent=0 // pred_check
    _
  $region3: #{student_graphpred_forward.4} parent=0 // pred_check_branch
    %13 = sbr.rel (0) target = $region5
  $region4: #{student_graphpred_forward.4} parent=0 // pred_region
    _
  $region5: #{student_graphpred_forward.4} parent=0 // pred_fallthru
    _
  // Predicated region
  $region6: #{student_graphpred_forward.4} parent=0 // pred_check
    _
  $region7: #{student_graphpred_forward.4} parent=0 // pred_check_branch
    %15 = sbr.rel (0) target = $region9
  $region8: #{student_graphpred_forward.4} parent=0 // pred_region
    _
  $region9: #{student_graphpred_forward.4} parent=0 // pred_fallthru
    _
  // Predicated region
  $region10: #{student_graphpred_forward.4} parent=0 // pred_check
    _
  $region11: #{student_graphpred_forward.4} parent=0 // pred_check_branch
    %17 = sbr.rel (0) target = $region13
  $region12: #{student_graphpred_forward.4} parent=0 // pred_region
    _
  $region13: #{student_graphpred_forward.4} parent=0 // pred_fallthru
    _
  // Predicated region
  $region14: #{student_graphpred_forward.4} parent=0 // pred_check
    _
  $region15: #{student_graphpred_forward.4} parent=0 // pred_check_branch
    %19 = sbr.rel (0) target = $region17
  $region16: #{student_graphpred_forward.4} parent=0 // pred_region
    _
  $region17: #{student_graphpred_forward.4} parent=0 // pred_fallthru
    _
  // Predicated region
  $region18: #{student_graphpred_forward.4} parent=0 // pred_check
    _
  $region19: #{student_graphpred_forward.4} parent=0 // pred_check_branch
    %21 = sbr.rel (0) target = $region21
  $region20: #{student_graphpred_forward.4} parent=0 // pred_region
    _
  $region21: #{student_graphpred_forward.4} parent=0 // pred_fallthru
    _
  // Predicated region
  $region22: #{student_graphpred_forward.4} parent=0 // pred_check
    _
  $region23: #{student_graphpred_forward.4} parent=0 // pred_check_branch
    %23 = sbr.rel (0) target = $region25
  $region24: #{student_graphpred_forward.4} parent=0 // pred_region
    _
  $region25: #{student_graphpred_forward.4} parent=0 // pred_fallthru
    _
  // Predicated region
  $region26: #{student_graphpred_forward.4} parent=0 // pred_check
    _
  $region27: #{student_graphpred_forward.4} parent=0 // pred_check_branch
    %25 = sbr.rel (0) target = $region29
  $region28: #{student_graphpred_forward.4} parent=0 // pred_region
    _
  $region29: #{student_graphpred_forward.4} parent=0 // pred_fallthru
    _
  %p26 = scmp.eq.s32.totalorder 0, 0
  // Predicated region
  $region30: #{student_graphpred_forward.4} parent=0 // pred_check
    %p27 = pneg %p26
  $region31: #{student_graphpred_forward.4} parent=0 // pred_check_branch
    %29 = sbr.rel (%p27) target = $region33
  $region32: #{student_graphpred_forward.4} parent=0 // pred_region
    %30 = vst [vmem:[#allocation2] sm:$0xff] 0.0
    %31 = vst [vmem:[#allocation2 + $0x8] sm:$0xff] 0.0
    %32 = vst [vmem:[#allocation2 + $0x10] sm:$0xff] 0.0
    %33 = vst [vmem:[#allocation2 + $0x18] sm:$0xff] 0.0
    %34 = vst [vmem:[#allocation2 + $0x20] sm:$0xff] 0.0
    %35 = vst [vmem:[#allocation2 + $0x28] sm:$0xff] 0.0
    %36 = vst [vmem:[#allocation2 + $0x30] sm:$0xff] 0.0
    %37 = vst [vmem:[#allocation2 + $0x38] sm:$0xff] 0.0
    %38 = vst [vmem:[#allocation2 + $0x40] sm:$0xff] 0.0
    %39 = vst [vmem:[#allocation2 + $0x48] sm:$0xff] 0.0
    %40 = vst [vmem:[#allocation2 + $0x50] sm:$0xff] 0.0
    %41 = vst [vmem:[#allocation2 + $0x58] sm:$0xff] 0.0
    %42 = vst [vmem:[#allocation2 + $0x60] sm:$0xff] 0.0
    %43 = vst [vmem:[#allocation2 + $0x68] sm:$0xff] 0.0
    %44 = vst [vmem:[#allocation2 + $0x70] sm:$0xff] 0.0
    %45 = vst [vmem:[#allocation2 + $0x78] sm:$0xff] 0.0
    %46 = vst [vmem:[#allocation2 + $0x80] sm:$0xff] 0.0
    %47 = vst [vmem:[#allocation2 + $0x88] sm:$0xff] 0.0
    %48 = vst [vmem:[#allocation2 + $0x90] sm:$0xff] 0.0
    %49 = vst [vmem:[#allocation2 + $0x98] sm:$0xff] 0.0
    %50 = vst [vmem:[#allocation2 + $0xa0] sm:$0xff] 0.0
    %51 = vst [vmem:[#allocation2 + $0xa8] sm:$0xff] 0.0
    %52 = vst [vmem:[#allocation2 + $0xb0] sm:$0xff] 0.0
    %53 = vst [vmem:[#allocation2 + $0xb8] sm:$0xff] 0.0
    %54 = vst [vmem:[#allocation2 + $0xc0] sm:$0xff] 0.0
    %55 = vst [vmem:[#allocation2 + $0xc8] sm:$0xff] 0.0
    %56 = vst [vmem:[#allocation2 + $0xd0] sm:$0xff] 0.0
    %57 = vst [vmem:[#allocation2 + $0xd8] sm:$0xff] 0.0
    %58 = vst [vmem:[#allocation2 + $0xe0] sm:$0xff] 0.0
    %59 = vst [vmem:[#allocation2 + $0xe8] sm:$0xff] 0.0
    %60 = vst [vmem:[#allocation2 + $0xf0] sm:$0xff] 0.0
    %61 = vst [vmem:[#allocation2 + $0xf8] sm:$0xff] 0.0
    %62 = vst [vmem:[#allocation2 + $0x100] sm:$0xff] 0.0
    %63 = vst [vmem:[#allocation2 + $0x108] sm:$0xff] 0.0
    %64 = vst [vmem:[#allocation2 + $0x110] sm:$0xff] 0.0
    %65 = vst [vmem:[#allocation2 + $0x118] sm:$0xff] 0.0
    %66 = vst [vmem:[#allocation2 + $0x120] sm:$0xff] 0.0
    %67 = vst [vmem:[#allocation2 + $0x128] sm:$0xff] 0.0
    %68 = vst [vmem:[#allocation2 + $0x130] sm:$0xff] 0.0
    %69 = vst [vmem:[#allocation2 + $0x138] sm:$0xff] 0.0
    %70 = vst [vmem:[#allocation2 + $0x140] sm:$0xff] 0.0
    %71 = vst [vmem:[#allocation2 + $0x148] sm:$0xff] 0.0
    %72 = vst [vmem:[#allocation2 + $0x150] sm:$0xff] 0.0
    %73 = vst [vmem:[#allocation2 + $0x158] sm:$0xff] 0.0
    %74 = vst [vmem:[#allocation2 + $0x160] sm:$0xff] 0.0
    %75 = vst [vmem:[#allocation2 + $0x168] sm:$0xff] 0.0
    %76 = vst [vmem:[#allocation2 + $0x170] sm:$0xff] 0.0
    %77 = vst [vmem:[#allocation2 + $0x178] sm:$0xff] 0.0
    %78 = vst [vmem:[#allocation2 + $0x180] sm:$0xff] 0.0
    %79 = vst [vmem:[#allocation2 + $0x188] sm:$0xff] 0.0
    %80 = vst [vmem:[#allocation2 + $0x190] sm:$0xff] 0.0
    %81 = vst [vmem:[#allocation2 + $0x198] sm:$0xff] 0.0
    %82 = vst [vmem:[#allocation2 + $0x1a0] sm:$0xff] 0.0
    %83 = vst [vmem:[#allocation2 + $0x1a8] sm:$0xff] 0.0
    %84 = vst [vmem:[#allocation2 + $0x1b0] sm:$0xff] 0.0
    %85 = vst [vmem:[#allocation2 + $0x1b8] sm:$0xff] 0.0
    %86 = vst [vmem:[#allocation2 + $0x1c0] sm:$0xff] 0.0
    %87 = vst [vmem:[#allocation2 + $0x1c8] sm:$0xff] 0.0
    %88 = vst [vmem:[#allocation2 + $0x1d0] sm:$0xff] 0.0
    %89 = vst [vmem:[#allocation2 + $0x1d8] sm:$0xff] 0.0
    %90 = vst [vmem:[#allocation2 + $0x1e0] sm:$0xff] 0.0
    %91 = vst [vmem:[#allocation2 + $0x1e8] sm:$0xff] 0.0
    %92 = vst [vmem:[#allocation2 + $0x1f0] sm:$0xff] 0.0
    %93 = vst [vmem:[#allocation2 + $0x1f8] sm:$0xff] 0.0
  $region33: #{student_graphpred_forward.4} parent=0 // pred_fallthru
    _
  %v94 = vld [vmem:[%s0] sm:$0xff]
  %v95 = vld [vmem:[%s0 + $0x8] sm:$0xff]
  %v96 = vld [vmem:[%s0 + $0x10] sm:$0xff]
  %v97 = vld [vmem:[%s0 + $0x18] sm:$0xff]
  %v98 = vld [vmem:[%s0 + $0x20] sm:$0xff]
  %v99 = vld [vmem:[%s0 + $0x28] sm:$0xff]
  %v100 = vld [vmem:[%s0 + $0x30] sm:$0xff]
  %v101 = vld [vmem:[%s0 + $0x38] sm:$0xff]
  %v102 = vld [vmem:[%s0 + $0x40] sm:$0xff]
  %v103 = vld [vmem:[%s0 + $0x48] sm:$0xff]
  %v104 = vld [vmem:[%s0 + $0x50] sm:$0xff]
  %v105 = vld [vmem:[%s0 + $0x58] sm:$0xff]
  %v106 = vld [vmem:[%s0 + $0x60] sm:$0xff]
  %v107 = vld [vmem:[%s0 + $0x68] sm:$0xff]
  %v108 = vld [vmem:[%s0 + $0x70] sm:$0xff]
  %v109 = vld [vmem:[%s0 + $0x78] sm:$0xff]
  %v110 = vld [vmem:[%s0 + $0x80] sm:$0xff]
  %v111 = vld [vmem:[%s0 + $0x88] sm:$0xff]
  %v112 = vld [vmem:[%s0 + $0x90] sm:$0xff]
  %v113 = vld [vmem:[%s0 + $0x98] sm:$0xff]
  %v114 = vld [vmem:[%s0 + $0xa0] sm:$0xff]
  %v115 = vld [vmem:[%s0 + $0xa8] sm:$0xff]
  %v116 = vld [vmem:[%s0 + $0xb0] sm:$0xff]
  %v117 = vld [vmem:[%s0 + $0xb8] sm:$0xff]
  %v118 = vld [vmem:[%s0 + $0xc0] sm:$0xff]
  %v119 = vld [vmem:[%s0 + $0xc8] sm:$0xff]
  %v120 = vld [vmem:[%s0 + $0xd0] sm:$0xff]
  %v121 = vld [vmem:[%s0 + $0xd8] sm:$0xff]
  %v122 = vld [vmem:[%s0 + $0xe0] sm:$0xff]
  %v123 = vld [vmem:[%s0 + $0xe8] sm:$0xff]
  %v124 = vld [vmem:[%s0 + $0xf0] sm:$0xff]
  %v125 = vld [vmem:[%s0 + $0xf8] sm:$0xff]
  %v126 = vld [vmem:[#allocation2] sm:$0xff]
  %v127 = vld [vmem:[#allocation2 + $0x8] sm:$0xff]
  %v128 = vld [vmem:[#allocation2 + $0x10] sm:$0xff]
  %v129 = vld [vmem:[#allocation2 + $0x18] sm:$0xff]
  %v130 = vld [vmem:[#allocation2 + $0x20] sm:$0xff]
  %v131 = vld [vmem:[#allocation2 + $0x28] sm:$0xff]
  %v132 = vld [vmem:[#allocation2 + $0x30] sm:$0xff]
  %v133 = vld [vmem:[#allocation2 + $0x38] sm:$0xff]
  %v134 = vld [vmem:[#allocation2 + $0x40] sm:$0xff]
  %v135 = vld [vmem:[#allocation2 + $0x48] sm:$0xff]
  %v136 = vld [vmem:[#allocation2 + $0x50] sm:$0xff]
  %v137 = vld [vmem:[#allocation2 + $0x58] sm:$0xff]
  %v138 = vld [vmem:[#allocation2 + $0x60] sm:$0xff]
  %v139 = vld [vmem:[#allocation2 + $0x68] sm:$0xff]
  %v140 = vld [vmem:[#allocation2 + $0x70] sm:$0xff]
  %v141 = vld [vmem:[#allocation2 + $0x78] sm:$0xff]
  %v142 = vld [vmem:[#allocation2 + $0x80] sm:$0xff]
  %v143 = vld [vmem:[#allocation2 + $0x88] sm:$0xff]
  %v144 = vld [vmem:[#allocation2 + $0x90] sm:$0xff]
  %v145 = vld [vmem:[#allocation2 + $0x98] sm:$0xff]
  %v146 = vld [vmem:[#allocation2 + $0xa0] sm:$0xff]
  %v147 = vld [vmem:[#allocation2 + $0xa8] sm:$0xff]
  %v148 = vld [vmem:[#allocation2 + $0xb0] sm:$0xff]
  %v149 = vld [vmem:[#allocation2 + $0xb8] sm:$0xff]
  %v150 = vld [vmem:[#allocation2 + $0xc0] sm:$0xff]
  %v151 = vld [vmem:[#allocation2 + $0xc8] sm:$0xff]
  %v152 = vld [vmem:[#allocation2 + $0xd0] sm:$0xff]
  %v153 = vld [vmem:[#allocation2 + $0xd8] sm:$0xff]
  %v154 = vld [vmem:[#allocation2 + $0xe0] sm:$0xff]
  %v155 = vld [vmem:[#allocation2 + $0xe8] sm:$0xff]
  %v156 = vld [vmem:[#allocation2 + $0xf0] sm:$0xff]
  %v157 = vld [vmem:[#allocation2 + $0xf8] sm:$0xff]
  %v158 = vld [vmem:[%s1] sm:$0xf]
  %v159 = vld [vmem:[%s1 + $0x4] sm:$0xf]
  %v160 = vld [vmem:[%s1 + $0x8] sm:$0xf]
  %v161 = vld [vmem:[%s1 + $0xc] sm:$0xf]
  %v162 = vld [vmem:[%s1 + $0x10] sm:$0xf]
  %v163 = vld [vmem:[%s1 + $0x14] sm:$0xf]
  %v164 = vld [vmem:[%s1 + $0x18] sm:$0xf]
  %v165 = vld [vmem:[%s1 + $0x1c] sm:$0xf]
  %v166 = vld [vmem:[%s1 + $0x20] sm:$0xf]
  %v167 = vld [vmem:[%s1 + $0x24] sm:$0xf]
  %v168 = vld [vmem:[%s1 + $0x28] sm:$0xf]
  %v169 = vld [vmem:[%s1 + $0x2c] sm:$0xf]
  %v170 = vld [vmem:[%s1 + $0x30] sm:$0xf]
  %v171 = vld [vmem:[%s1 + $0x34] sm:$0xf]
  %v172 = vld [vmem:[%s1 + $0x38] sm:$0xf]
  %v173 = vld [vmem:[%s1 + $0x3c] sm:$0xf]
  %v174 = vld [vmem:[%s1 + $0x40] sm:$0xf]
  %v175 = vld [vmem:[%s1 + $0x44] sm:$0xf]
  %v176 = vld [vmem:[%s1 + $0x48] sm:$0xf]
  %v177 = vld [vmem:[%s1 + $0x4c] sm:$0xf]
  %v178 = vld [vmem:[%s1 + $0x50] sm:$0xf]
  %v179 = vld [vmem:[%s1 + $0x54] sm:$0xf]
  %v180 = vld [vmem:[%s1 + $0x58] sm:$0xf]
  %v181 = vld [vmem:[%s1 + $0x5c] sm:$0xf]
  %v182 = vld [vmem:[%s1 + $0x60] sm:$0xf]
  %v183 = vld [vmem:[%s1 + $0x64] sm:$0xf]
  %v184 = vld [vmem:[%s1 + $0x68] sm:$0xf]
  %v185 = vld [vmem:[%s1 + $0x6c] sm:$0xf]
  %v186 = vld [vmem:[%s1 + $0x70] sm:$0xf]
  %v187 = vld [vmem:[%s1 + $0x74] sm:$0xf]
  %v188 = vld [vmem:[%s1 + $0x78] sm:$0xf]
  %v189 = vld [vmem:[%s1 + $0x7c] sm:$0xf]
  %v222 = vunpack.c.l.b16 %v94
  %v223 = vunpack.c.h.b16 %v94
  %v224 = vunpack.c.l.b16 %v95
  %v225 = vunpack.c.h.b16 %v95
  %v226 = vunpack.c.l.b16 %v96
  %v227 = vunpack.c.h.b16 %v96
  %v228 = vunpack.c.l.b16 %v97
  %v229 = vunpack.c.h.b16 %v97
  %v230 = vunpack.c.l.b16 %v98
  %v231 = vunpack.c.h.b16 %v98
  %v232 = vunpack.c.l.b16 %v99
  %v233 = vunpack.c.h.b16 %v99
  %v234 = vunpack.c.l.b16 %v100
  %v235 = vunpack.c.h.b16 %v100
  %v236 = vunpack.c.l.b16 %v101
  %v237 = vunpack.c.h.b16 %v101
  %v238 = vunpack.c.l.b16 %v102
  %v239 = vunpack.c.h.b16 %v102
  %v240 = vunpack.c.l.b16 %v103
  %v241 = vunpack.c.h.b16 %v103
  %v242 = vunpack.c.l.b16 %v104
  %v243 = vunpack.c.h.b16 %v104
  %v244 = vunpack.c.l.b16 %v105
  %v245 = vunpack.c.h.b16 %v105
  %v246 = vunpack.c.l.b16 %v106
  %v247 = vunpack.c.h.b16 %v106
  %v248 = vunpack.c.l.b16 %v107
  %v249 = vunpack.c.h.b16 %v107
  %v250 = vunpack.c.l.b16 %v108
  %v251 = vunpack.c.h.b16 %v108
  %v252 = vunpack.c.l.b16 %v109
  %v253 = vunpack.c.h.b16 %v109
  %v254 = vunpack.c.l.b16 %v110
  %v255 = vunpack.c.h.b16 %v110
  %v256 = vunpack.c.l.b16 %v111
  %v257 = vunpack.c.h.b16 %v111
  %v258 = vunpack.c.l.b16 %v112
  %v259 = vunpack.c.h.b16 %v112
  %v260 = vunpack.c.l.b16 %v113
  %v261 = vunpack.c.h.b16 %v113
  %v262 = vunpack.c.l.b16 %v114
  %v263 = vunpack.c.h.b16 %v114
  %v264 = vunpack.c.l.b16 %v115
  %v265 = vunpack.c.h.b16 %v115
  %v266 = vunpack.c.l.b16 %v116
  %v267 = vunpack.c.h.b16 %v116
  %v268 = vunpack.c.l.b16 %v117
  %v269 = vunpack.c.h.b16 %v117
  %v270 = vunpack.c.l.b16 %v118
  %v271 = vunpack.c.h.b16 %v118
  %v272 = vunpack.c.l.b16 %v119
  %v273 = vunpack.c.h.b16 %v119
  %v274 = vunpack.c.l.b16 %v120
  %v275 = vunpack.c.h.b16 %v120
  %v276 = vunpack.c.l.b16 %v121
  %v277 = vunpack.c.h.b16 %v121
  %v278 = vunpack.c.l.b16 %v122
  %v279 = vunpack.c.h.b16 %v122
  %v280 = vunpack.c.l.b16 %v123
  %v281 = vunpack.c.h.b16 %v123
  %v282 = vunpack.c.l.b16 %v124
  %v283 = vunpack.c.h.b16 %v124
  %v284 = vunpack.c.l.b16 %v125
  %v285 = vunpack.c.h.b16 %v125
  %v286 = vpack.c.b16 %v224, %v222
  %v287 = vpack.c.b16 %v225, %v223
  %v288 = vpack.c.b16 %v228, %v226
  %v289 = vpack.c.b16 %v229, %v227
  %v290 = vpack.c.b16 %v232, %v230
  %v291 = vpack.c.b16 %v233, %v231
  %v292 = vpack.c.b16 %v236, %v234
  %v293 = vpack.c.b16 %v237, %v235
  %v294 = vpack.c.b16 %v240, %v238
  %v295 = vpack.c.b16 %v241, %v239
  %v296 = vpack.c.b16 %v244, %v242
  %v297 = vpack.c.b16 %v245, %v243
  %v298 = vpack.c.b16 %v248, %v246
  %v299 = vpack.c.b16 %v249, %v247
  %v300 = vpack.c.b16 %v252, %v250
  %v301 = vpack.c.b16 %v253, %v251
  %v302 = vpack.c.b16 %v256, %v254
  %v303 = vpack.c.b16 %v257, %v255
  %v304 = vpack.c.b16 %v260, %v258
  %v305 = vpack.c.b16 %v261, %v259
  %v306 = vpack.c.b16 %v264, %v262
  %v307 = vpack.c.b16 %v265, %v263
  %v308 = vpack.c.b16 %v268, %v266
  %v309 = vpack.c.b16 %v269, %v267
  %v310 = vpack.c.b16 %v272, %v270
  %v311 = vpack.c.b16 %v273, %v271
  %v312 = vpack.c.b16 %v276, %v274
  %v313 = vpack.c.b16 %v277, %v275
  %v314 = vpack.c.b16 %v280, %v278
  %v315 = vpack.c.b16 %v281, %v279
  %v316 = vpack.c.b16 %v284, %v282
  %v317 = vpack.c.b16 %v285, %v283
  %v382 = vunpack.c.l.b16 %v158
  %v383 = vunpack.c.l.b16 %v159
  %v384 = vunpack.c.l.b16 %v160
  %v385 = vunpack.c.l.b16 %v161
  %v386 = vunpack.c.l.b16 %v162
  %v387 = vunpack.c.l.b16 %v163
  %v388 = vunpack.c.l.b16 %v164
  %v389 = vunpack.c.l.b16 %v165
  %v390 = vunpack.c.l.b16 %v166
  %v391 = vunpack.c.l.b16 %v167
  %v392 = vunpack.c.l.b16 %v168
  %v393 = vunpack.c.l.b16 %v169
  %v394 = vunpack.c.l.b16 %v170
  %v395 = vunpack.c.l.b16 %v171
  %v396 = vunpack.c.l.b16 %v172
  %v397 = vunpack.c.l.b16 %v173
  %v398 = vunpack.c.l.b16 %v174
  %v399 = vunpack.c.l.b16 %v175
  %v400 = vunpack.c.l.b16 %v176
  %v401 = vunpack.c.l.b16 %v177
  %v402 = vunpack.c.l.b16 %v178
  %v403 = vunpack.c.l.b16 %v179
  %v404 = vunpack.c.l.b16 %v180
  %v405 = vunpack.c.l.b16 %v181
  %v406 = vunpack.c.l.b16 %v182
  %v407 = vunpack.c.l.b16 %v183
  %v408 = vunpack.c.l.b16 %v184
  %v409 = vunpack.c.l.b16 %v185
  %v410 = vunpack.c.l.b16 %v186
  %v411 = vunpack.c.l.b16 %v187
  %v412 = vunpack.c.l.b16 %v188
  %v413 = vunpack.c.l.b16 %v189
  %v414 = vpack.c.b16 %v383, %v382
  %v415 = vpack.c.b16 %v385, %v384
  %v416 = vpack.c.b16 %v387, %v386
  %v417 = vpack.c.b16 %v389, %v388
  %v418 = vpack.c.b16 %v391, %v390
  %v419 = vpack.c.b16 %v393, %v392
  %v420 = vpack.c.b16 %v395, %v394
  %v421 = vpack.c.b16 %v397, %v396
  %v422 = vpack.c.b16 %v399, %v398
  %v423 = vpack.c.b16 %v401, %v400
  %v424 = vpack.c.b16 %v403, %v402
  %v425 = vpack.c.b16 %v405, %v404
  %v426 = vpack.c.b16 %v407, %v406
  %v427 = vpack.c.b16 %v409, %v408
  %v428 = vpack.c.b16 %v411, %v410
  %v429 = vpack.c.b16 %v413, %v412
  %446 = vmatpush.bf16.msra.mxu0 %v421
  %447 = vmatpush.bf16.msra.mxu0 %v420
  %448 = vmatpush.bf16.msra.mxu0 %v419
  %449 = vmatpush.bf16.msra.mxu0 %v418
  %450 = vmatpush.bf16.msra.mxu0 %v417
  %451 = vmatpush.bf16.msra.mxu0 %v416
  %452 = vmatpush.bf16.msra.mxu0 %v415
  %453 = vmatpush.bf16.msra.mxu0 %v414
  %454 = vmatmul.bf16.gmra.mxu0 %v286
  %v455 = vpop.f32.mrf.mxu0
  %v456 = vadd.f32 0.0, %v455
  %v457 = vpop.f32.mrf.mxu0
  %v458 = vadd.f32 0.0, %v457
  %459 = vmatmul.bf16.gmra.mxu0 %v288
  %v460 = vpop.f32.mrf.mxu0
  %v461 = vadd.f32 0.0, %v460
  %v462 = vpop.f32.mrf.mxu0
  %v463 = vadd.f32 0.0, %v462
  %464 = vmatmul.bf16.gmra.mxu0 %v290
  %v465 = vpop.f32.mrf.mxu0
  %v466 = vadd.f32 0.0, %v465
  %v467 = vpop.f32.mrf.mxu0
  %v468 = vadd.f32 0.0, %v467
  %469 = vmatmul.bf16.gmra.mxu0 %v292
  %v470 = vpop.f32.mrf.mxu0
  %v471 = vadd.f32 0.0, %v470
  %v472 = vpop.f32.mrf.mxu0
  %v473 = vadd.f32 0.0, %v472
  %474 = vmatmul.bf16.gmra.mxu0 %v294
  %v475 = vpop.f32.mrf.mxu0
  %v476 = vadd.f32 0.0, %v475
  %v477 = vpop.f32.mrf.mxu0
  %v478 = vadd.f32 0.0, %v477
  %479 = vmatmul.bf16.gmra.mxu0 %v296
  %v480 = vpop.f32.mrf.mxu0
  %v481 = vadd.f32 0.0, %v480
  %v482 = vpop.f32.mrf.mxu0
  %v483 = vadd.f32 0.0, %v482
  %484 = vmatmul.bf16.gmra.mxu0 %v298
  %v485 = vpop.f32.mrf.mxu0
  %v486 = vadd.f32 0.0, %v485
  %v487 = vpop.f32.mrf.mxu0
  %v488 = vadd.f32 0.0, %v487
  %489 = vmatmul.bf16.gmra.mxu0 %v300
  %v490 = vpop.f32.mrf.mxu0
  %v491 = vadd.f32 0.0, %v490
  %v492 = vpop.f32.mrf.mxu0
  %v493 = vadd.f32 0.0, %v492
  %494 = vmatmul.bf16.gmra.mxu0 %v302
  %v495 = vpop.f32.mrf.mxu0
  %v496 = vadd.f32 0.0, %v495
  %v497 = vpop.f32.mrf.mxu0
  %v498 = vadd.f32 0.0, %v497
  %499 = vmatmul.bf16.gmra.mxu0 %v304
  %v500 = vpop.f32.mrf.mxu0
  %v501 = vadd.f32 0.0, %v500
  %v502 = vpop.f32.mrf.mxu0
  %v503 = vadd.f32 0.0, %v502
  %504 = vmatmul.bf16.gmra.mxu0 %v306
  %v505 = vpop.f32.mrf.mxu0
  %v506 = vadd.f32 0.0, %v505
  %v507 = vpop.f32.mrf.mxu0
  %v508 = vadd.f32 0.0, %v507
  %509 = vmatmul.bf16.gmra.mxu0 %v308
  %v510 = vpop.f32.mrf.mxu0
  %v511 = vadd.f32 0.0, %v510
  %v512 = vpop.f32.mrf.mxu0
  %v513 = vadd.f32 0.0, %v512
  %514 = vmatmul.bf16.gmra.mxu0 %v310
  %v515 = vpop.f32.mrf.mxu0
  %v516 = vadd.f32 0.0, %v515
  %v517 = vpop.f32.mrf.mxu0
  %v518 = vadd.f32 0.0, %v517
  %519 = vmatmul.bf16.gmra.mxu0 %v312
  %v520 = vpop.f32.mrf.mxu0
  %v521 = vadd.f32 0.0, %v520
  %v522 = vpop.f32.mrf.mxu0
  %v523 = vadd.f32 0.0, %v522
  %524 = vmatmul.bf16.gmra.mxu0 %v314
  %v525 = vpop.f32.mrf.mxu0
  %v526 = vadd.f32 0.0, %v525
  %v527 = vpop.f32.mrf.mxu0
  %v528 = vadd.f32 0.0, %v527
  %529 = vmatmul.bf16.gmra.mxu0 %v316
  %v530 = vpop.f32.mrf.mxu0
  %v531 = vadd.f32 0.0, %v530
  %v532 = vpop.f32.mrf.mxu0
  %v533 = vadd.f32 0.0, %v532
  %534 = vdwg.mxu0
  %535 = vmatpush.bf16.msra.mxu0 %v429
  %536 = vmatpush.bf16.msra.mxu0 %v428
  %537 = vmatpush.bf16.msra.mxu0 %v427
  %538 = vmatpush.bf16.msra.mxu0 %v426
  %539 = vmatpush.bf16.msra.mxu0 %v425
  %540 = vmatpush.bf16.msra.mxu0 %v424
  %541 = vmatpush.bf16.msra.mxu0 %v423
  %542 = vmatpush.bf16.msra.mxu0 %v422
  %543 = vmatmul.bf16.gmra.mxu0 %v287
  %v544 = vpop.f32.mrf.mxu0
  %v545 = vadd.f32 %v456, %v544
  %v546 = vpop.f32.mrf.mxu0
  %v547 = vadd.f32 %v458, %v546
  %548 = vmatmul.bf16.gmra.mxu0 %v289
  %v549 = vpop.f32.mrf.mxu0
  %v550 = vadd.f32 %v461, %v549
  %v551 = vpop.f32.mrf.mxu0
  %v552 = vadd.f32 %v463, %v551
  %553 = vmatmul.bf16.gmra.mxu0 %v291
  %v554 = vpop.f32.mrf.mxu0
  %v555 = vadd.f32 %v466, %v554
  %v556 = vpop.f32.mrf.mxu0
  %v557 = vadd.f32 %v468, %v556
  %558 = vmatmul.bf16.gmra.mxu0 %v293
  %v559 = vpop.f32.mrf.mxu0
  %v560 = vadd.f32 %v471, %v559
  %v561 = vpop.f32.mrf.mxu0
  %v562 = vadd.f32 %v473, %v561
  %563 = vmatmul.bf16.gmra.mxu0 %v295
  %v564 = vpop.f32.mrf.mxu0
  %v565 = vadd.f32 %v476, %v564
  %v566 = vpop.f32.mrf.mxu0
  %v567 = vadd.f32 %v478, %v566
  %568 = vmatmul.bf16.gmra.mxu0 %v297
  %v569 = vpop.f32.mrf.mxu0
  %v570 = vadd.f32 %v481, %v569
  %v571 = vpop.f32.mrf.mxu0
  %v572 = vadd.f32 %v483, %v571
  %573 = vmatmul.bf16.gmra.mxu0 %v299
  %v574 = vpop.f32.mrf.mxu0
  %v575 = vadd.f32 %v486, %v574
  %v576 = vpop.f32.mrf.mxu0
  %v577 = vadd.f32 %v488, %v576
  %578 = vmatmul.bf16.gmra.mxu0 %v301
  %v579 = vpop.f32.mrf.mxu0
  %v580 = vadd.f32 %v491, %v579
  %v581 = vpop.f32.mrf.mxu0
  %v582 = vadd.f32 %v493, %v581
  %583 = vmatmul.bf16.gmra.mxu0 %v303
  %v584 = vpop.f32.mrf.mxu0
  %v585 = vadd.f32 %v496, %v584
  %v586 = vpop.f32.mrf.mxu0
  %v587 = vadd.f32 %v498, %v586
  %588 = vmatmul.bf16.gmra.mxu0 %v305
  %v589 = vpop.f32.mrf.mxu0
  %v590 = vadd.f32 %v501, %v589
  %v591 = vpop.f32.mrf.mxu0
  %v592 = vadd.f32 %v503, %v591
  %593 = vmatmul.bf16.gmra.mxu0 %v307
  %v594 = vpop.f32.mrf.mxu0
  %v595 = vadd.f32 %v506, %v594
  %v596 = vpop.f32.mrf.mxu0
  %v597 = vadd.f32 %v508, %v596
  %598 = vmatmul.bf16.gmra.mxu0 %v309
  %v599 = vpop.f32.mrf.mxu0
  %v600 = vadd.f32 %v511, %v599
  %v601 = vpop.f32.mrf.mxu0
  %v602 = vadd.f32 %v513, %v601
  %603 = vmatmul.bf16.gmra.mxu0 %v311
  %v604 = vpop.f32.mrf.mxu0
  %v605 = vadd.f32 %v516, %v604
  %v606 = vpop.f32.mrf.mxu0
  %v607 = vadd.f32 %v518, %v606
  %608 = vmatmul.bf16.gmra.mxu0 %v313
  %v609 = vpop.f32.mrf.mxu0
  %v610 = vadd.f32 %v521, %v609
  %v611 = vpop.f32.mrf.mxu0
  %v612 = vadd.f32 %v523, %v611
  %613 = vmatmul.bf16.gmra.mxu0 %v315
  %v614 = vpop.f32.mrf.mxu0
  %v615 = vadd.f32 %v526, %v614
  %v616 = vpop.f32.mrf.mxu0
  %v617 = vadd.f32 %v528, %v616
  %618 = vmatmul.bf16.gmra.mxu0 %v317
  %v619 = vpop.f32.mrf.mxu0
  %v620 = vadd.f32 %v531, %v619
  %v621 = vpop.f32.mrf.mxu0
  %v622 = vadd.f32 %v533, %v621
  %623 = vdwg.mxu0
  %v624 = vadd.f32 %v126, %v545
  %v625 = vadd.f32 %v127, %v547
  %v626 = vadd.f32 %v128, %v550
  %v627 = vadd.f32 %v129, %v552
  %v628 = vadd.f32 %v130, %v555
  %v629 = vadd.f32 %v131, %v557
  %v630 = vadd.f32 %v132, %v560
  %v631 = vadd.f32 %v133, %v562
  %v632 = vadd.f32 %v134, %v565
  %v633 = vadd.f32 %v135, %v567
  %v634 = vadd.f32 %v136, %v570
  %v635 = vadd.f32 %v137, %v572
  %v636 = vadd.f32 %v138, %v575
  %v637 = vadd.f32 %v139, %v577
  %v638 = vadd.f32 %v140, %v580
  %v639 = vadd.f32 %v141, %v582
  %v640 = vadd.f32 %v142, %v585
  %v641 = vadd.f32 %v143, %v587
  %v642 = vadd.f32 %v144, %v590
  %v643 = vadd.f32 %v145, %v592
  %v644 = vadd.f32 %v146, %v595
  %v645 = vadd.f32 %v147, %v597
  %v646 = vadd.f32 %v148, %v600
  %v647 = vadd.f32 %v149, %v602
  %v648 = vadd.f32 %v150, %v605
  %v649 = vadd.f32 %v151, %v607
  %v650 = vadd.f32 %v152, %v610
  %v651 = vadd.f32 %v153, %v612
  %v652 = vadd.f32 %v154, %v615
  %v653 = vadd.f32 %v155, %v617
  %v654 = vadd.f32 %v156, %v620
  %v655 = vadd.f32 %v157, %v622
  %656 = vst [vmem:[#allocation2] sm:$0xff] %v624
  %657 = vst [vmem:[#allocation2 + $0x8] sm:$0xff] %v625
  %658 = vst [vmem:[#allocation2 + $0x10] sm:$0xff] %v626
  %659 = vst [vmem:[#allocation2 + $0x18] sm:$0xff] %v627
  %660 = vst [vmem:[#allocation2 + $0x20] sm:$0xff] %v628
  %661 = vst [vmem:[#allocation2 + $0x28] sm:$0xff] %v629
  %662 = vst [vmem:[#allocation2 + $0x30] sm:$0xff] %v630
  %663 = vst [vmem:[#allocation2 + $0x38] sm:$0xff] %v631
  %664 = vst [vmem:[#allocation2 + $0x40] sm:$0xff] %v632
  %665 = vst [vmem:[#allocation2 + $0x48] sm:$0xff] %v633
  %666 = vst [vmem:[#allocation2 + $0x50] sm:$0xff] %v634
  %667 = vst [vmem:[#allocation2 + $0x58] sm:$0xff] %v635
  %668 = vst [vmem:[#allocation2 + $0x60] sm:$0xff] %v636
  %669 = vst [vmem:[#allocation2 + $0x68] sm:$0xff] %v637
  %670 = vst [vmem:[#allocation2 + $0x70] sm:$0xff] %v638
  %671 = vst [vmem:[#allocation2 + $0x78] sm:$0xff] %v639
  %672 = vst [vmem:[#allocation2 + $0x80] sm:$0xff] %v640
  %673 = vst [vmem:[#allocation2 + $0x88] sm:$0xff] %v641
  %674 = vst [vmem:[#allocation2 + $0x90] sm:$0xff] %v642
  %675 = vst [vmem:[#allocation2 + $0x98] sm:$0xff] %v643
  %676 = vst [vmem:[#allocation2 + $0xa0] sm:$0xff] %v644
  %677 = vst [vmem:[#allocation2 + $0xa8] sm:$0xff] %v645
  %678 = vst [vmem:[#allocation2 + $0xb0] sm:$0xff] %v646
  %679 = vst [vmem:[#allocation2 + $0xb8] sm:$0xff] %v647
  %680 = vst [vmem:[#allocation2 + $0xc0] sm:$0xff] %v648
  %681 = vst [vmem:[#allocation2 + $0xc8] sm:$0xff] %v649
  %682 = vst [vmem:[#allocation2 + $0xd0] sm:$0xff] %v650
  %683 = vst [vmem:[#allocation2 + $0xd8] sm:$0xff] %v651
  %684 = vst [vmem:[#allocation2 + $0xe0] sm:$0xff] %v652
  %685 = vst [vmem:[#allocation2 + $0xe8] sm:$0xff] %v653
  %686 = vst [vmem:[#allocation2 + $0xf0] sm:$0xff] %v654
  %687 = vst [vmem:[#allocation2 + $0xf8] sm:$0xff] %v655
  %s688 = scalar_lea.vmem [#allocation2], 256
  %v689 = vld [vmem:[%s688] sm:$0xff]
  %v690 = vld [vmem:[%s688 + $0x8] sm:$0xff]
  %v691 = vld [vmem:[%s688 + $0x10] sm:$0xff]
  %v692 = vld [vmem:[%s688 + $0x18] sm:$0xff]
  %v693 = vld [vmem:[%s688 + $0x20] sm:$0xff]
  %v694 = vld [vmem:[%s688 + $0x28] sm:$0xff]
  %v695 = vld [vmem:[%s688 + $0x30] sm:$0xff]
  %v696 = vld [vmem:[%s688 + $0x38] sm:$0xff]
  %v697 = vld [vmem:[%s688 + $0x40] sm:$0xff]
  %v698 = vld [vmem:[%s688 + $0x48] sm:$0xff]
  %v699 = vld [vmem:[%s688 + $0x50] sm:$0xff]
  %v700 = vld [vmem:[%s688 + $0x58] sm:$0xff]
  %v701 = vld [vmem:[%s688 + $0x60] sm:$0xff]
  %v702 = vld [vmem:[%s688 + $0x68] sm:$0xff]
  %v703 = vld [vmem:[%s688 + $0x70] sm:$0xff]
  %v704 = vld [vmem:[%s688 + $0x78] sm:$0xff]
  %v705 = vld [vmem:[%s688 + $0x80] sm:$0xff]
  %v706 = vld [vmem:[%s688 + $0x88] sm:$0xff]
  %v707 = vld [vmem:[%s688 + $0x90] sm:$0xff]
  %v708 = vld [vmem:[%s688 + $0x98] sm:$0xff]
  %v709 = vld [vmem:[%s688 + $0xa0] sm:$0xff]
  %v710 = vld [vmem:[%s688 + $0xa8] sm:$0xff]
  %v711 = vld [vmem:[%s688 + $0xb0] sm:$0xff]
  %v712 = vld [vmem:[%s688 + $0xb8] sm:$0xff]
  %v713 = vld [vmem:[%s688 + $0xc0] sm:$0xff]
  %v714 = vld [vmem:[%s688 + $0xc8] sm:$0xff]
  %v715 = vld [vmem:[%s688 + $0xd0] sm:$0xff]
  %v716 = vld [vmem:[%s688 + $0xd8] sm:$0xff]
  %v717 = vld [vmem:[%s688 + $0xe0] sm:$0xff]
  %v718 = vld [vmem:[%s688 + $0xe8] sm:$0xff]
  %v719 = vld [vmem:[%s688 + $0xf0] sm:$0xff]
  %v720 = vld [vmem:[%s688 + $0xf8] sm:$0xff]
  %s721 = scalar_lea.vmem %s1, 128
  %v722 = vld [vmem:[%s721] sm:$0xf]
  %v723 = vld [vmem:[%s721 + $0x4] sm:$0xf]
  %v724 = vld [vmem:[%s721 + $0x8] sm:$0xf]
  %v725 = vld [vmem:[%s721 + $0xc] sm:$0xf]
  %v726 = vld [vmem:[%s721 + $0x10] sm:$0xf]
  %v727 = vld [vmem:[%s721 + $0x14] sm:$0xf]
  %v728 = vld [vmem:[%s721 + $0x18] sm:$0xf]
  %v729 = vld [vmem:[%s721 + $0x1c] sm:$0xf]
  %v730 = vld [vmem:[%s721 + $0x20] sm:$0xf]
  %v731 = vld [vmem:[%s721 + $0x24] sm:$0xf]
  %v732 = vld [vmem:[%s721 + $0x28] sm:$0xf]
  %v733 = vld [vmem:[%s721 + $0x2c] sm:$0xf]
  %v734 = vld [vmem:[%s721 + $0x30] sm:$0xf]
  %v735 = vld [vmem:[%s721 + $0x34] sm:$0xf]
  %v736 = vld [vmem:[%s721 + $0x38] sm:$0xf]
  %v737 = vld [vmem:[%s721 + $0x3c] sm:$0xf]
  %v738 = vld [vmem:[%s721 + $0x40] sm:$0xf]
  %v739 = vld [vmem:[%s721 + $0x44] sm:$0xf]
  %v740 = vld [vmem:[%s721 + $0x48] sm:$0xf]
  %v741 = vld [vmem:[%s721 + $0x4c] sm:$0xf]
  %v742 = vld [vmem:[%s721 + $0x50] sm:$0xf]
  %v743 = vld [vmem:[%s721 + $0x54] sm:$0xf]
  %v744 = vld [vmem:[%s721 + $0x58] sm:$0xf]
  %v745 = vld [vmem:[%s721 + $0x5c] sm:$0xf]
  %v746 = vld [vmem:[%s721 + $0x60] sm:$0xf]
  %v747 = vld [vmem:[%s721 + $0x64] sm:$0xf]
  %v748 = vld [vmem:[%s721 + $0x68] sm:$0xf]
  %v749 = vld [vmem:[%s721 + $0x6c] sm:$0xf]
  %v750 = vld [vmem:[%s721 + $0x70] sm:$0xf]
  %v751 = vld [vmem:[%s721 + $0x74] sm:$0xf]
  %v752 = vld [vmem:[%s721 + $0x78] sm:$0xf]
  %v753 = vld [vmem:[%s721 + $0x7c] sm:$0xf]
  %v786 = vunpack.c.l.b16 %v722
  %v787 = vunpack.c.l.b16 %v723
  %v788 = vunpack.c.l.b16 %v724
  %v789 = vunpack.c.l.b16 %v725
  %v790 = vunpack.c.l.b16 %v726
  %v791 = vunpack.c.l.b16 %v727
  %v792 = vunpack.c.l.b16 %v728
  %v793 = vunpack.c.l.b16 %v729
  %v794 = vunpack.c.l.b16 %v730
  %v795 = vunpack.c.l.b16 %v731
  %v796 = vunpack.c.l.b16 %v732
  %v797 = vunpack.c.l.b16 %v733
  %v798 = vunpack.c.l.b16 %v734
  %v799 = vunpack.c.l.b16 %v735
  %v800 = vunpack.c.l.b16 %v736
  %v801 = vunpack.c.l.b16 %v737
  %v802 = vunpack.c.l.b16 %v738
  %v803 = vunpack.c.l.b16 %v739
  %v804 = vunpack.c.l.b16 %v740
  %v805 = vunpack.c.l.b16 %v741
  %v806 = vunpack.c.l.b16 %v742
  %v807 = vunpack.c.l.b16 %v743
  %v808 = vunpack.c.l.b16 %v744
  %v809 = vunpack.c.l.b16 %v745
  %v810 = vunpack.c.l.b16 %v746
  %v811 = vunpack.c.l.b16 %v747
  %v812 = vunpack.c.l.b16 %v748
  %v813 = vunpack.c.l.b16 %v749
  %v814 = vunpack.c.l.b16 %v750
  %v815 = vunpack.c.l.b16 %v751
  %v816 = vunpack.c.l.b16 %v752
  %v817 = vunpack.c.l.b16 %v753
  %v818 = vpack.c.b16 %v787, %v786
  %v819 = vpack.c.b16 %v789, %v788
  %v820 = vpack.c.b16 %v791, %v790
  %v821 = vpack.c.b16 %v793, %v792
  %v822 = vpack.c.b16 %v795, %v794
  %v823 = vpack.c.b16 %v797, %v796
  %v824 = vpack.c.b16 %v799, %v798
  %v825 = vpack.c.b16 %v801, %v800
  %v826 = vpack.c.b16 %v803, %v802
  %v827 = vpack.c.b16 %v805, %v804
  %v828 = vpack.c.b16 %v807, %v806
  %v829 = vpack.c.b16 %v809, %v808
  %v830 = vpack.c.b16 %v811, %v810
  %v831 = vpack.c.b16 %v813, %v812
  %v832 = vpack.c.b16 %v815, %v814
  %v833 = vpack.c.b16 %v817, %v816
  %850 = vmatpush.bf16.msra.mxu0 %v825
  %851 = vmatpush.bf16.msra.mxu0 %v824
  %852 = vmatpush.bf16.msra.mxu0 %v823
  %853 = vmatpush.bf16.msra.mxu0 %v822
  %854 = vmatpush.bf16.msra.mxu0 %v821
  %855 = vmatpush.bf16.msra.mxu0 %v820
  %856 = vmatpush.bf16.msra.mxu0 %v819
  %857 = vmatpush.bf16.msra.mxu0 %v818
  %858 = vmatmul.bf16.gmra.mxu0 %v286
  %v859 = vpop.f32.mrf.mxu0
  %v860 = vadd.f32 0.0, %v859
  %v861 = vpop.f32.mrf.mxu0
  %v862 = vadd.f32 0.0, %v861
  %863 = vmatmul.bf16.gmra.mxu0 %v288
  %v864 = vpop.f32.mrf.mxu0
  %v865 = vadd.f32 0.0, %v864
  %v866 = vpop.f32.mrf.mxu0
  %v867 = vadd.f32 0.0, %v866
  %868 = vmatmul.bf16.gmra.mxu0 %v290
  %v869 = vpop.f32.mrf.mxu0
  %v870 = vadd.f32 0.0, %v869
  %v871 = vpop.f32.mrf.mxu0
  %v872 = vadd.f32 0.0, %v871
  %873 = vmatmul.bf16.gmra.mxu0 %v292
  %v874 = vpop.f32.mrf.mxu0
  %v875 = vadd.f32 0.0, %v874
  %v876 = vpop.f32.mrf.mxu0
  %v877 = vadd.f32 0.0, %v876
  %878 = vmatmul.bf16.gmra.mxu0 %v294
  %v879 = vpop.f32.mrf.mxu0
  %v880 = vadd.f32 0.0, %v879
  %v881 = vpop.f32.mrf.mxu0
  %v882 = vadd.f32 0.0, %v881
  %883 = vmatmul.bf16.gmra.mxu0 %v296
  %v884 = vpop.f32.mrf.mxu0
  %v885 = vadd.f32 0.0, %v884
  %v886 = vpop.f32.mrf.mxu0
  %v887 = vadd.f32 0.0, %v886
  %888 = vmatmul.bf16.gmra.mxu0 %v298
  %v889 = vpop.f32.mrf.mxu0
  %v890 = vadd.f32 0.0, %v889
  %v891 = vpop.f32.mrf.mxu0
  %v892 = vadd.f32 0.0, %v891
  %893 = vmatmul.bf16.gmra.mxu0 %v300
  %v894 = vpop.f32.mrf.mxu0
  %v895 = vadd.f32 0.0, %v894
  %v896 = vpop.f32.mrf.mxu0
  %v897 = vadd.f32 0.0, %v896
  %898 = vmatmul.bf16.gmra.mxu0 %v302
  %v899 = vpop.f32.mrf.mxu0
  %v900 = vadd.f32 0.0, %v899
  %v901 = vpop.f32.mrf.mxu0
  %v902 = vadd.f32 0.0, %v901
  %903 = vmatmul.bf16.gmra.mxu0 %v304
  %v904 = vpop.f32.mrf.mxu0
  %v905 = vadd.f32 0.0, %v904
  %v906 = vpop.f32.mrf.mxu0
  %v907 = vadd.f32 0.0, %v906
  %908 = vmatmul.bf16.gmra.mxu0 %v306
  %v909 = vpop.f32.mrf.mxu0
  %v910 = vadd.f32 0.0, %v909
  %v911 = vpop.f32.mrf.mxu0
  %v912 = vadd.f32 0.0, %v911
  %913 = vmatmul.bf16.gmra.mxu0 %v308
  %v914 = vpop.f32.mrf.mxu0
  %v915 = vadd.f32 0.0, %v914
  %v916 = vpop.f32.mrf.mxu0
  %v917 = vadd.f32 0.0, %v916
  %918 = vmatmul.bf16.gmra.mxu0 %v310
  %v919 = vpop.f32.mrf.mxu0
  %v920 = vadd.f32 0.0, %v919
  %v921 = vpop.f32.mrf.mxu0
  %v922 = vadd.f32 0.0, %v921
  %923 = vmatmul.bf16.gmra.mxu0 %v312
  %v924 = vpop.f32.mrf.mxu0
  %v925 = vadd.f32 0.0, %v924
  %v926 = vpop.f32.mrf.mxu0
  %v927 = vadd.f32 0.0, %v926
  %928 = vmatmul.bf16.gmra.mxu0 %v314
  %v929 = vpop.f32.mrf.mxu0
  %v930 = vadd.f32 0.0, %v929
  %v931 = vpop.f32.mrf.mxu0
  %v932 = vadd.f32 0.0, %v931
  %933 = vmatmul.bf16.gmra.mxu0 %v316
  %v934 = vpop.f32.mrf.mxu0
  %v935 = vadd.f32 0.0, %v934
  %v936 = vpop.f32.mrf.mxu0
  %v937 = vadd.f32 0.0, %v936
  %938 = vdwg.mxu0
  %939 = vmatpush.bf16.msra.mxu0 %v833
  %940 = vmatpush.bf16.msra.mxu0 %v832
  %941 = vmatpush.bf16.msra.mxu0 %v831
  %942 = vmatpush.bf16.msra.mxu0 %v830
  %943 = vmatpush.bf16.msra.mxu0 %v829
  %944 = vmatpush.bf16.msra.mxu0 %v828
  %945 = vmatpush.bf16.msra.mxu0 %v827
  %946 = vmatpush.bf16.msra.mxu0 %v826
  %947 = vmatmul.bf16.gmra.mxu0 %v287
  %v948 = vpop.f32.mrf.mxu0
  %v949 = vadd.f32 %v860, %v948
  %v950 = vpop.f32.mrf.mxu0
  %v951 = vadd.f32 %v862, %v950
  %952 = vmatmul.bf16.gmra.mxu0 %v289
  %v953 = vpop.f32.mrf.mxu0
  %v954 = vadd.f32 %v865, %v953
  %v955 = vpop.f32.mrf.mxu0
  %v956 = vadd.f32 %v867, %v955
  %957 = vmatmul.bf16.gmra.mxu0 %v291
  %v958 = vpop.f32.mrf.mxu0
  %v959 = vadd.f32 %v870, %v958
  %v960 = vpop.f32.mrf.mxu0
  %v961 = vadd.f32 %v872, %v960
  %962 = vmatmul.bf16.gmra.mxu0 %v293
  %v963 = vpop.f32.mrf.mxu0
  %v964 = vadd.f32 %v875, %v963
  %v965 = vpop.f32.mrf.mxu0
  %v966 = vadd.f32 %v877, %v965
  %967 = vmatmul.bf16.gmra.mxu0 %v295
  %v968 = vpop.f32.mrf.mxu0
  %v969 = vadd.f32 %v880, %v968
  %v970 = vpop.f32.mrf.mxu0
  %v971 = vadd.f32 %v882, %v970
  %972 = vmatmul.bf16.gmra.mxu0 %v297
  %v973 = vpop.f32.mrf.mxu0
  %v974 = vadd.f32 %v885, %v973
  %v975 = vpop.f32.mrf.mxu0
  %v976 = vadd.f32 %v887, %v975
  %977 = vmatmul.bf16.gmra.mxu0 %v299
  %v978 = vpop.f32.mrf.mxu0
  %v979 = vadd.f32 %v890, %v978
  %v980 = vpop.f32.mrf.mxu0
  %v981 = vadd.f32 %v892, %v980
  %982 = vmatmul.bf16.gmra.mxu0 %v301
  %v983 = vpop.f32.mrf.mxu0
  %v984 = vadd.f32 %v895, %v983
  %v985 = vpop.f32.mrf.mxu0
  %v986 = vadd.f32 %v897, %v985
  %987 = vmatmul.bf16.gmra.mxu0 %v303
  %v988 = vpop.f32.mrf.mxu0
  %v989 = vadd.f32 %v900, %v988
  %v990 = vpop.f32.mrf.mxu0
  %v991 = vadd.f32 %v902, %v990
  %992 = vmatmul.bf16.gmra.mxu0 %v305
  %v993 = vpop.f32.mrf.mxu0
  %v994 = vadd.f32 %v905, %v993
  %v995 = vpop.f32.mrf.mxu0
  %v996 = vadd.f32 %v907, %v995
  %997 = vmatmul.bf16.gmra.mxu0 %v307
  %v998 = vpop.f32.mrf.mxu0
  %v999 = vadd.f32 %v910, %v998
  %v1000 = vpop.f32.mrf.mxu0
  %v1001 = vadd.f32 %v912, %v1000
  %1002 = vmatmul.bf16.gmra.mxu0 %v309
  %v1003 = vpop.f32.mrf.mxu0
  %v1004 = vadd.f32 %v915, %v1003
  %v1005 = vpop.f32.mrf.mxu0
  %v1006 = vadd.f32 %v917, %v1005
  %1007 = vmatmul.bf16.gmra.mxu0 %v311
  %v1008 = vpop.f32.mrf.mxu0
  %v1009 = vadd.f32 %v920, %v1008
  %v1010 = vpop.f32.mrf.mxu0
  %v1011 = vadd.f32 %v922, %v1010
  %1012 = vmatmul.bf16.gmra.mxu0 %v313
  %v1013 = vpop.f32.mrf.mxu0
  %v1014 = vadd.f32 %v925, %v1013
  %v1015 = vpop.f32.mrf.mxu0
  %v1016 = vadd.f32 %v927, %v1015
  %1017 = vmatmul.bf16.gmra.mxu0 %v315
  %v1018 = vpop.f32.mrf.mxu0
  %v1019 = vadd.f32 %v930, %v1018
  %v1020 = vpop.f32.mrf.mxu0
  %v1021 = vadd.f32 %v932, %v1020
  %1022 = vmatmul.bf16.gmra.mxu0 %v317
  %v1023 = vpop.f32.mrf.mxu0
  %v1024 = vadd.f32 %v935, %v1023
  %v1025 = vpop.f32.mrf.mxu0
  %v1026 = vadd.f32 %v937, %v1025
  %1027 = vdwg.mxu0
  %v1028 = vadd.f32 %v689, %v949
  %v1029 = vadd.f32 %v690, %v951
  %v1030 = vadd.f32 %v691, %v954
  %v1031 = vadd.f32 %v692, %v956
  %v1032 = vadd.f32 %v693, %v959
  %v1033 = vadd.f32 %v694, %v961
  %v1034 = vadd.f32 %v695, %v964
  %v1035 = vadd.f32 %v696, %v966
  %v1036 = vadd.f32 %v697, %v969
  %v1037 = vadd.f32 %v698, %v971
  %v1038 = vadd.f32 %v699, %v974
  %v1039 = vadd.f32 %v700, %v976
  %v1040 = vadd.f32 %v701, %v979
  %v1041 = vadd.f32 %v702, %v981
  %v1042 = vadd.f32 %v703, %v984
  %v1043 = vadd.f32 %v704, %v986
  %v1044 = vadd.f32 %v705, %v989
  %v1045 = vadd.f32 %v706, %v991
  %v1046 = vadd.f32 %v707, %v994
  %v1047 = vadd.f32 %v708, %v996
  %v1048 = vadd.f32 %v709, %v999
  %v1049 = vadd.f32 %v710, %v1001
  %v1050 = vadd.f32 %v711, %v1004
  %v1051 = vadd.f32 %v712, %v1006
  %v1052 = vadd.f32 %v713, %v1009
  %v1053 = vadd.f32 %v714, %v1011
  %v1054 = vadd.f32 %v715, %v1014
  %v1055 = vadd.f32 %v716, %v1016
  %v1056 = vadd.f32 %v717, %v1019
  %v1057 = vadd.f32 %v718, %v1021
  %v1058 = vadd.f32 %v719, %v1024
  %v1059 = vadd.f32 %v720, %v1026
  %1060 = vst [vmem:[%s688] sm:$0xff] %v1028
  %1061 = vst [vmem:[%s688 + $0x8] sm:$0xff] %v1029
  %1062 = vst [vmem:[%s688 + $0x10] sm:$0xff] %v1030
  %1063 = vst [vmem:[%s688 + $0x18] sm:$0xff] %v1031
  %1064 = vst [vmem:[%s688 + $0x20] sm:$0xff] %v1032
  %1065 = vst [vmem:[%s688 + $0x28] sm:$0xff] %v1033
  %1066 = vst [vmem:[%s688 + $0x30] sm:$0xff] %v1034
  %1067 = vst [vmem:[%s688 + $0x38] sm:$0xff] %v1035
  %1068 = vst [vmem:[%s688 + $0x40] sm:$0xff] %v1036
  %1069 = vst [vmem:[%s688 + $0x48] sm:$0xff] %v1037
  %1070 = vst [vmem:[%s688 + $0x50] sm:$0xff] %v1038
  %1071 = vst [vmem:[%s688 + $0x58] sm:$0xff] %v1039
  %1072 = vst [vmem:[%s688 + $0x60] sm:$0xff] %v1040
  %1073 = vst [vmem:[%s688 + $0x68] sm:$0xff] %v1041
  %1074 = vst [vmem:[%s688 + $0x70] sm:$0xff] %v1042
  %1075 = vst [vmem:[%s688 + $0x78] sm:$0xff] %v1043
  %1076 = vst [vmem:[%s688 + $0x80] sm:$0xff] %v1044
  %1077 = vst [vmem:[%s688 + $0x88] sm:$0xff] %v1045
  %1078 = vst [vmem:[%s688 + $0x90] sm:$0xff] %v1046
  %1079 = vst [vmem:[%s688 + $0x98] sm:$0xff] %v1047
  %1080 = vst [vmem:[%s688 + $0xa0] sm:$0xff] %v1048
  %1081 = vst [vmem:[%s688 + $0xa8] sm:$0xff] %v1049
  %1082 = vst [vmem:[%s688 + $0xb0] sm:$0xff] %v1050
  %1083 = vst [vmem:[%s688 + $0xb8] sm:$0xff] %v1051
  %1084 = vst [vmem:[%s688 + $0xc0] sm:$0xff] %v1052
  %1085 = vst [vmem:[%s688 + $0xc8] sm:$0xff] %v1053
  %1086 = vst [vmem:[%s688 + $0xd0] sm:$0xff] %v1054
  %1087 = vst [vmem:[%s688 + $0xd8] sm:$0xff] %v1055
  %1088 = vst [vmem:[%s688 + $0xe0] sm:$0xff] %v1056
  %1089 = vst [vmem:[%s688 + $0xe8] sm:$0xff] %v1057
  %1090 = vst [vmem:[%s688 + $0xf0] sm:$0xff] %v1058
  %1091 = vst [vmem:[%s688 + $0xf8] sm:$0xff] %v1059
  // Predicated region
  $region34: #{student_graphpred_forward.4} parent=0 // pred_check
    %p1092 = pneg %p26
  $region35: #{student_graphpred_forward.4} parent=0 // pred_check_branch
    %1094 = sbr.rel (%p1092) target = $region37
  $region36: #{student_graphpred_forward.4} parent=0 // pred_region
    %v1095 = vld [vmem:[#allocation2] sm:$0xff]
    %v1096 = vld [vmem:[#allocation2 + $0x8] sm:$0xff]
    %v1097 = vld [vmem:[#allocation2 + $0x10] sm:$0xff]
    %v1098 = vld [vmem:[#allocation2 + $0x18] sm:$0xff]
    %v1099 = vld [vmem:[#allocation2 + $0x20] sm:$0xff]
    %v1100 = vld [vmem:[#allocation2 + $0x28] sm:$0xff]
    %v1101 = vld [vmem:[#allocation2 + $0x30] sm:$0xff]
    %v1102 = vld [vmem:[#allocation2 + $0x38] sm:$0xff]
    %v1103 = vld [vmem:[#allocation2 + $0x40] sm:$0xff]
    %v1104 = vld [vmem:[#allocation2 + $0x48] sm:$0xff]
    %v1105 = vld [vmem:[#allocation2 + $0x50] sm:$0xff]
    %v1106 = vld [vmem:[#allocation2 + $0x58] sm:$0xff]
    %v1107 = vld [vmem:[#allocation2 + $0x60] sm:$0xff]
    %v1108 = vld [vmem:[#allocation2 + $0x68] sm:$0xff]
    %v1109 = vld [vmem:[#allocation2 + $0x70] sm:$0xff]
    %v1110 = vld [vmem:[#allocation2 + $0x78] sm:$0xff]
    %v1111 = vld [vmem:[#allocation2 + $0x80] sm:$0xff]
    %v1112 = vld [vmem:[#allocation2 + $0x88] sm:$0xff]
    %v1113 = vld [vmem:[#allocation2 + $0x90] sm:$0xff]
    %v1114 = vld [vmem:[#allocation2 + $0x98] sm:$0xff]
    %v1115 = vld [vmem:[#allocation2 + $0xa0] sm:$0xff]
    %v1116 = vld [vmem:[#allocation2 + $0xa8] sm:$0xff]
    %v1117 = vld [vmem:[#allocation2 + $0xb0] sm:$0xff]
    %v1118 = vld [vmem:[#allocation2 + $0xb8] sm:$0xff]
    %v1119 = vld [vmem:[#allocation2 + $0xc0] sm:$0xff]
    %v1120 = vld [vmem:[#allocation2 + $0xc8] sm:$0xff]
    %v1121 = vld [vmem:[#allocation2 + $0xd0] sm:$0xff]
    %v1122 = vld [vmem:[#allocation2 + $0xd8] sm:$0xff]
    %v1123 = vld [vmem:[#allocation2 + $0xe0] sm:$0xff]
    %v1124 = vld [vmem:[#allocation2 + $0xe8] sm:$0xff]
    %v1125 = vld [vmem:[#allocation2 + $0xf0] sm:$0xff]
    %v1126 = vld [vmem:[#allocation2 + $0xf8] sm:$0xff]
    %v1127 = vld [vmem:[%s2] sm:$0xff]
    %v1128 = vld [vmem:[%s2 + $0x8] sm:$0xff]
    %v1129 = vld [vmem:[%s2 + $0x10] sm:$0xff]
    %v1130 = vld [vmem:[%s2 + $0x18] sm:$0xff]
    %v1131 = vld [vmem:[%s2 + $0x20] sm:$0xff]
    %v1132 = vld [vmem:[%s2 + $0x28] sm:$0xff]
    %v1133 = vld [vmem:[%s2 + $0x30] sm:$0xff]
    %v1134 = vld [vmem:[%s2 + $0x38] sm:$0xff]
    %v1135 = vld [vmem:[%s2 + $0x40] sm:$0xff]
    %v1136 = vld [vmem:[%s2 + $0x48] sm:$0xff]
    %v1137 = vld [vmem:[%s2 + $0x50] sm:$0xff]
    %v1138 = vld [vmem:[%s2 + $0x58] sm:$0xff]
    %v1139 = vld [vmem:[%s2 + $0x60] sm:$0xff]
    %v1140 = vld [vmem:[%s2 + $0x68] sm:$0xff]
    %v1141 = vld [vmem:[%s2 + $0x70] sm:$0xff]
    %v1142 = vld [vmem:[%s2 + $0x78] sm:$0xff]
    %v1143 = vld [vmem:[%s2 + $0x80] sm:$0xff]
    %v1144 = vld [vmem:[%s2 + $0x88] sm:$0xff]
    %v1145 = vld [vmem:[%s2 + $0x90] sm:$0xff]
    %v1146 = vld [vmem:[%s2 + $0x98] sm:$0xff]
    %v1147 = vld [vmem:[%s2 + $0xa0] sm:$0xff]
    %v1148 = vld [vmem:[%s2 + $0xa8] sm:$0xff]
    %v1149 = vld [vmem:[%s2 + $0xb0] sm:$0xff]
    %v1150 = vld [vmem:[%s2 + $0xb8] sm:$0xff]
    %v1151 = vld [vmem:[%s2 + $0xc0] sm:$0xff]
    %v1152 = vld [vmem:[%s2 + $0xc8] sm:$0xff]
    %v1153 = vld [vmem:[%s2 + $0xd0] sm:$0xff]
    %v1154 = vld [vmem:[%s2 + $0xd8] sm:$0xff]
    %v1155 = vld [vmem:[%s2 + $0xe0] sm:$0xff]
    %v1156 = vld [vmem:[%s2 + $0xe8] sm:$0xff]
    %v1157 = vld [vmem:[%s2 + $0xf0] sm:$0xff]
    %v1158 = vld [vmem:[%s2 + $0xf8] sm:$0xff]
    %v1159 = vadd.f32 %v1095, %v1127
    %v1160 = vadd.f32 %v1096, %v1128
    %v1161 = vadd.f32 %v1097, %v1129
    %v1162 = vadd.f32 %v1098, %v1130
    %v1163 = vadd.f32 %v1099, %v1131
    %v1164 = vadd.f32 %v1100, %v1132
    %v1165 = vadd.f32 %v1101, %v1133
    %v1166 = vadd.f32 %v1102, %v1134
    %v1167 = vadd.f32 %v1103, %v1135
    %v1168 = vadd.f32 %v1104, %v1136
    %v1169 = vadd.f32 %v1105, %v1137
    %v1170 = vadd.f32 %v1106, %v1138
    %v1171 = vadd.f32 %v1107, %v1139
    %v1172 = vadd.f32 %v1108, %v1140
    %v1173 = vadd.f32 %v1109, %v1141
    %v1174 = vadd.f32 %v1110, %v1142
    %v1175 = vadd.f32 %v1111, %v1143
    %v1176 = vadd.f32 %v1112, %v1144
    %v1177 = vadd.f32 %v1113, %v1145
    %v1178 = vadd.f32 %v1114, %v1146
    %v1179 = vadd.f32 %v1115, %v1147
    %v1180 = vadd.f32 %v1116, %v1148
    %v1181 = vadd.f32 %v1117, %v1149
    %v1182 = vadd.f32 %v1118, %v1150
    %v1183 = vadd.f32 %v1119, %v1151
    %v1184 = vadd.f32 %v1120, %v1152
    %v1185 = vadd.f32 %v1121, %v1153
    %v1186 = vadd.f32 %v1122, %v1154
    %v1187 = vadd.f32 %v1123, %v1155
    %v1188 = vadd.f32 %v1124, %v1156
    %v1189 = vadd.f32 %v1125, %v1157
    %v1190 = vadd.f32 %v1126, %v1158
    %v1191 = vpack.c.bf16 %v1160, %v1159
    %v1192 = vpack.c.bf16 %v1162, %v1161
    %v1193 = vpack.c.bf16 %v1164, %v1163
    %v1194 = vpack.c.bf16 %v1166, %v1165
    %v1195 = vpack.c.bf16 %v1168, %v1167
    %v1196 = vpack.c.bf16 %v1170, %v1169
    %v1197 = vpack.c.bf16 %v1172, %v1171
    %v1198 = vpack.c.bf16 %v1174, %v1173
    %v1199 = vpack.c.bf16 %v1176, %v1175
    %v1200 = vpack.c.bf16 %v1178, %v1177
    %v1201 = vpack.c.bf16 %v1180, %v1179
    %v1202 = vpack.c.bf16 %v1182, %v1181
    %v1203 = vpack.c.bf16 %v1184, %v1183
    %v1204 = vpack.c.bf16 %v1186, %v1185
    %v1205 = vpack.c.bf16 %v1188, %v1187
    %v1206 = vpack.c.bf16 %v1190, %v1189
    %v1207 = vld [vmem:[%s3] sm:$0xf]
    %v1208 = vld [vmem:[%s3 + $0x4] sm:$0xf]
    %v1209 = vld [vmem:[%s3 + $0x8] sm:$0xf]
    %v1210 = vld [vmem:[%s3 + $0xc] sm:$0xf]
    %v1211 = vld [vmem:[%s3 + $0x10] sm:$0xf]
    %v1212 = vld [vmem:[%s3 + $0x14] sm:$0xf]
    %v1213 = vld [vmem:[%s3 + $0x18] sm:$0xf]
    %v1214 = vld [vmem:[%s3 + $0x1c] sm:$0xf]
    %v1215 = vld [vmem:[%s3 + $0x20] sm:$0xf]
    %v1216 = vld [vmem:[%s3 + $0x24] sm:$0xf]
    %v1217 = vld [vmem:[%s3 + $0x28] sm:$0xf]
    %v1218 = vld [vmem:[%s3 + $0x2c] sm:$0xf]
    %v1219 = vld [vmem:[%s3 + $0x30] sm:$0xf]
    %v1220 = vld [vmem:[%s3 + $0x34] sm:$0xf]
    %v1221 = vld [vmem:[%s3 + $0x38] sm:$0xf]
    %v1222 = vld [vmem:[%s3 + $0x3c] sm:$0xf]
    %v1223 = vld [vmem:[%s4] sm:$0x1]
    %v1225 = vperm.slane %v1223, 0
    %v1243 = vunpack.c.l.b16 %v1207
    %v1244 = vunpack.c.l.b16 %v1208
    %v1245 = vunpack.c.l.b16 %v1209
    %v1246 = vunpack.c.l.b16 %v1210
    %v1247 = vunpack.c.l.b16 %v1211
    %v1248 = vunpack.c.l.b16 %v1212
    %v1249 = vunpack.c.l.b16 %v1213
    %v1250 = vunpack.c.l.b16 %v1214
    %v1251 = vunpack.c.l.b16 %v1215
    %v1252 = vunpack.c.l.b16 %v1216
    %v1253 = vunpack.c.l.b16 %v1217
    %v1254 = vunpack.c.l.b16 %v1218
    %v1255 = vunpack.c.l.b16 %v1219
    %v1256 = vunpack.c.l.b16 %v1220
    %v1257 = vunpack.c.l.b16 %v1221
    %v1258 = vunpack.c.l.b16 %v1222
    %v1259 = vpack.c.b16 %v1244, %v1243
    %v1260 = vpack.c.b16 %v1246, %v1245
    %v1261 = vpack.c.b16 %v1248, %v1247
    %v1262 = vpack.c.b16 %v1250, %v1249
    %v1263 = vpack.c.b16 %v1252, %v1251
    %v1264 = vpack.c.b16 %v1254, %v1253
    %v1265 = vpack.c.b16 %v1256, %v1255
    %v1266 = vpack.c.b16 %v1258, %v1257
    %1275 = vmatpush.bf16.msra.mxu0 %v1266
    %1276 = vmatpush.bf16.msra.mxu0 %v1265
    %1277 = vmatpush.bf16.msra.mxu0 %v1264
    %1278 = vmatpush.bf16.msra.mxu0 %v1263
    %1279 = vmatpush.bf16.msra.mxu0 %v1262
    %1280 = vmatpush.bf16.msra.mxu0 %v1261
    %1281 = vmatpush.bf16.msra.mxu0 %v1260
    %1282 = vmatpush.bf16.msra.mxu0 %v1259
    %1283 = vmatmul.bf16.gmra.mxu0 %v1191
    %v1284 = vpop.f32.mrf.mxu0
    %v1285 = vadd.f32 %v1225, %v1284
    %v1286 = vpop.f32.mrf.mxu0
    %v1287 = vadd.f32 %v1225, %v1286
    %1288 = vmatmul.bf16.gmra.mxu0 %v1192
    %v1289 = vpop.f32.mrf.mxu0
    %v1290 = vadd.f32 %v1225, %v1289
    %v1291 = vpop.f32.mrf.mxu0
    %v1292 = vadd.f32 %v1225, %v1291
    %1293 = vmatmul.bf16.gmra.mxu0 %v1193
    %v1294 = vpop.f32.mrf.mxu0
    %v1295 = vadd.f32 %v1225, %v1294
    %v1296 = vpop.f32.mrf.mxu0
    %v1297 = vadd.f32 %v1225, %v1296
    %1298 = vmatmul.bf16.gmra.mxu0 %v1194
    %v1299 = vpop.f32.mrf.mxu0
    %v1300 = vadd.f32 %v1225, %v1299
    %v1301 = vpop.f32.mrf.mxu0
    %v1302 = vadd.f32 %v1225, %v1301
    %1303 = vmatmul.bf16.gmra.mxu0 %v1195
    %v1304 = vpop.f32.mrf.mxu0
    %v1305 = vadd.f32 %v1225, %v1304
    %v1306 = vpop.f32.mrf.mxu0
    %v1307 = vadd.f32 %v1225, %v1306
    %1308 = vmatmul.bf16.gmra.mxu0 %v1196
    %v1309 = vpop.f32.mrf.mxu0
    %v1310 = vadd.f32 %v1225, %v1309
    %v1311 = vpop.f32.mrf.mxu0
    %v1312 = vadd.f32 %v1225, %v1311
    %1313 = vmatmul.bf16.gmra.mxu0 %v1197
    %v1314 = vpop.f32.mrf.mxu0
    %v1315 = vadd.f32 %v1225, %v1314
    %v1316 = vpop.f32.mrf.mxu0
    %v1317 = vadd.f32 %v1225, %v1316
    %1318 = vmatmul.bf16.gmra.mxu0 %v1198
    %v1319 = vpop.f32.mrf.mxu0
    %v1320 = vadd.f32 %v1225, %v1319
    %v1321 = vpop.f32.mrf.mxu0
    %v1322 = vadd.f32 %v1225, %v1321
    %1323 = vmatmul.bf16.gmra.mxu0 %v1199
    %v1324 = vpop.f32.mrf.mxu0
    %v1325 = vadd.f32 %v1225, %v1324
    %v1326 = vpop.f32.mrf.mxu0
    %v1327 = vadd.f32 %v1225, %v1326
    %1328 = vmatmul.bf16.gmra.mxu0 %v1200
    %v1329 = vpop.f32.mrf.mxu0
    %v1330 = vadd.f32 %v1225, %v1329
    %v1331 = vpop.f32.mrf.mxu0
    %v1332 = vadd.f32 %v1225, %v1331
    %1333 = vmatmul.bf16.gmra.mxu0 %v1201
    %v1334 = vpop.f32.mrf.mxu0
    %v1335 = vadd.f32 %v1225, %v1334
    %v1336 = vpop.f32.mrf.mxu0
    %v1337 = vadd.f32 %v1225, %v1336
    %1338 = vmatmul.bf16.gmra.mxu0 %v1202
    %v1339 = vpop.f32.mrf.mxu0
    %v1340 = vadd.f32 %v1225, %v1339
    %v1341 = vpop.f32.mrf.mxu0
    %v1342 = vadd.f32 %v1225, %v1341
    %1343 = vmatmul.bf16.gmra.mxu0 %v1203
    %v1344 = vpop.f32.mrf.mxu0
    %v1345 = vadd.f32 %v1225, %v1344
    %v1346 = vpop.f32.mrf.mxu0
    %v1347 = vadd.f32 %v1225, %v1346
    %1348 = vmatmul.bf16.gmra.mxu0 %v1204
    %v1349 = vpop.f32.mrf.mxu0
    %v1350 = vadd.f32 %v1225, %v1349
    %v1351 = vpop.f32.mrf.mxu0
    %v1352 = vadd.f32 %v1225, %v1351
    %1353 = vmatmul.bf16.gmra.mxu0 %v1205
    %v1354 = vpop.f32.mrf.mxu0
    %v1355 = vadd.f32 %v1225, %v1354
    %v1356 = vpop.f32.mrf.mxu0
    %v1357 = vadd.f32 %v1225, %v1356
    %1358 = vmatmul.bf16.gmra.mxu0 %v1206
    %v1359 = vpop.f32.mrf.mxu0
    %v1360 = vadd.f32 %v1225, %v1359
    %v1361 = vpop.f32.mrf.mxu0
    %v1362 = vadd.f32 %v1225, %v1361
    %1363 = vdwg.mxu0
    %v1364 = vmax.f32 %v1285, 0.0
    %v1365 = vmax.f32 %v1287, 0.0
    %v1366 = vmax.f32 %v1290, 0.0
    %v1367 = vmax.f32 %v1292, 0.0
    %v1368 = vmax.f32 %v1295, 0.0
    %v1369 = vmax.f32 %v1297, 0.0
    %v1370 = vmax.f32 %v1300, 0.0
    %v1371 = vmax.f32 %v1302, 0.0
    %v1372 = vmax.f32 %v1305, 0.0
    %v1373 = vmax.f32 %v1307, 0.0
    %v1374 = vmax.f32 %v1310, 0.0
    %v1375 = vmax.f32 %v1312, 0.0
    %v1376 = vmax.f32 %v1315, 0.0
    %v1377 = vmax.f32 %v1317, 0.0
    %v1378 = vmax.f32 %v1320, 0.0
    %v1379 = vmax.f32 %v1322, 0.0
    %v1380 = vmax.f32 %v1325, 0.0
    %v1381 = vmax.f32 %v1327, 0.0
    %v1382 = vmax.f32 %v1330, 0.0
    %v1383 = vmax.f32 %v1332, 0.0
    %v1384 = vmax.f32 %v1335, 0.0
    %v1385 = vmax.f32 %v1337, 0.0
    %v1386 = vmax.f32 %v1340, 0.0
    %v1387 = vmax.f32 %v1342, 0.0
    %v1388 = vmax.f32 %v1345, 0.0
    %v1389 = vmax.f32 %v1347, 0.0
    %v1390 = vmax.f32 %v1350, 0.0
    %v1391 = vmax.f32 %v1352, 0.0
    %v1392 = vmax.f32 %v1355, 0.0
    %v1393 = vmax.f32 %v1357, 0.0
    %v1394 = vmax.f32 %v1360, 0.0
    %v1395 = vmax.f32 %v1362, 0.0
    %v1396 = vpack.c.bf16 %v1365, %v1364
    %v1397 = vpack.c.bf16 %v1367, %v1366
    %v1398 = vpack.c.bf16 %v1369, %v1368
    %v1399 = vpack.c.bf16 %v1371, %v1370
    %v1400 = vpack.c.bf16 %v1373, %v1372
    %v1401 = vpack.c.bf16 %v1375, %v1374
    %v1402 = vpack.c.bf16 %v1377, %v1376
    %v1403 = vpack.c.bf16 %v1379, %v1378
    %v1404 = vpack.c.bf16 %v1381, %v1380
    %v1405 = vpack.c.bf16 %v1383, %v1382
    %v1406 = vpack.c.bf16 %v1385, %v1384
    %v1407 = vpack.c.bf16 %v1387, %v1386
    %v1408 = vpack.c.bf16 %v1389, %v1388
    %v1409 = vpack.c.bf16 %v1391, %v1390
    %v1410 = vpack.c.bf16 %v1393, %v1392
    %v1411 = vpack.c.bf16 %v1395, %v1394
    %v1412 = vld [vmem:[%s5] sm:$0xf]
    %v1413 = vld [vmem:[%s5 + $0x4] sm:$0xf]
    %v1414 = vld [vmem:[%s5 + $0x8] sm:$0xf]
    %v1415 = vld [vmem:[%s5 + $0xc] sm:$0xf]
    %v1416 = vld [vmem:[%s5 + $0x10] sm:$0xf]
    %v1417 = vld [vmem:[%s5 + $0x14] sm:$0xf]
    %v1418 = vld [vmem:[%s5 + $0x18] sm:$0xf]
    %v1419 = vld [vmem:[%s5 + $0x1c] sm:$0xf]
    %v1420 = vld [vmem:[%s5 + $0x20] sm:$0xf]
    %v1421 = vld [vmem:[%s5 + $0x24] sm:$0xf]
    %v1422 = vld [vmem:[%s5 + $0x28] sm:$0xf]
    %v1423 = vld [vmem:[%s5 + $0x2c] sm:$0xf]
    %v1424 = vld [vmem:[%s5 + $0x30] sm:$0xf]
    %v1425 = vld [vmem:[%s5 + $0x34] sm:$0xf]
    %v1426 = vld [vmem:[%s5 + $0x38] sm:$0xf]
    %v1427 = vld [vmem:[%s5 + $0x3c] sm:$0xf]
    %v1428 = vld [vmem:[%s6] sm:$0x1]
    %v1430 = vperm.slane %v1428, 0
    %v1448 = vunpack.c.l.b16 %v1412
    %v1449 = vunpack.c.l.b16 %v1413
    %v1450 = vunpack.c.l.b16 %v1414
    %v1451 = vunpack.c.l.b16 %v1415
    %v1452 = vunpack.c.l.b16 %v1416
    %v1453 = vunpack.c.l.b16 %v1417
    %v1454 = vunpack.c.l.b16 %v1418
    %v1455 = vunpack.c.l.b16 %v1419
    %v1456 = vunpack.c.l.b16 %v1420
    %v1457 = vunpack.c.l.b16 %v1421
    %v1458 = vunpack.c.l.b16 %v1422
    %v1459 = vunpack.c.l.b16 %v1423
    %v1460 = vunpack.c.l.b16 %v1424
    %v1461 = vunpack.c.l.b16 %v1425
    %v1462 = vunpack.c.l.b16 %v1426
    %v1463 = vunpack.c.l.b16 %v1427
    %v1464 = vpack.c.b16 %v1449, %v1448
    %v1465 = vpack.c.b16 %v1451, %v1450
    %v1466 = vpack.c.b16 %v1453, %v1452
    %v1467 = vpack.c.b16 %v1455, %v1454
    %v1468 = vpack.c.b16 %v1457, %v1456
    %v1469 = vpack.c.b16 %v1459, %v1458
    %v1470 = vpack.c.b16 %v1461, %v1460
    %v1471 = vpack.c.b16 %v1463, %v1462
    %1480 = vmatpush.bf16.msra.mxu0 %v1471
    %1481 = vmatpush.bf16.msra.mxu0 %v1470
    %1482 = vmatpush.bf16.msra.mxu0 %v1469
    %1483 = vmatpush.bf16.msra.mxu0 %v1468
    %1484 = vmatpush.bf16.msra.mxu0 %v1467
    %1485 = vmatpush.bf16.msra.mxu0 %v1466
    %1486 = vmatpush.bf16.msra.mxu0 %v1465
    %1487 = vmatpush.bf16.msra.mxu0 %v1464
    %1488 = vmatmul.bf16.gmra.mxu0 %v1396
    %v1489 = vpop.f32.mrf.mxu0
    %v1490 = vadd.f32 %v1430, %v1489
    %v1491 = vpop.f32.mrf.mxu0
    %v1492 = vadd.f32 %v1430, %v1491
    %1493 = vmatmul.bf16.gmra.mxu0 %v1397
    %v1494 = vpop.f32.mrf.mxu0
    %v1495 = vadd.f32 %v1430, %v1494
    %v1496 = vpop.f32.mrf.mxu0
    %v1497 = vadd.f32 %v1430, %v1496
    %1498 = vmatmul.bf16.gmra.mxu0 %v1398
    %v1499 = vpop.f32.mrf.mxu0
    %v1500 = vadd.f32 %v1430, %v1499
    %v1501 = vpop.f32.mrf.mxu0
    %v1502 = vadd.f32 %v1430, %v1501
    %1503 = vmatmul.bf16.gmra.mxu0 %v1399
    %v1504 = vpop.f32.mrf.mxu0
    %v1505 = vadd.f32 %v1430, %v1504
    %v1506 = vpop.f32.mrf.mxu0
    %v1507 = vadd.f32 %v1430, %v1506
    %1508 = vmatmul.bf16.gmra.mxu0 %v1400
    %v1509 = vpop.f32.mrf.mxu0
    %v1510 = vadd.f32 %v1430, %v1509
    %v1511 = vpop.f32.mrf.mxu0
    %v1512 = vadd.f32 %v1430, %v1511
    %1513 = vmatmul.bf16.gmra.mxu0 %v1401
    %v1514 = vpop.f32.mrf.mxu0
    %v1515 = vadd.f32 %v1430, %v1514
    %v1516 = vpop.f32.mrf.mxu0
    %v1517 = vadd.f32 %v1430, %v1516
    %1518 = vmatmul.bf16.gmra.mxu0 %v1402
    %v1519 = vpop.f32.mrf.mxu0
    %v1520 = vadd.f32 %v1430, %v1519
    %v1521 = vpop.f32.mrf.mxu0
    %v1522 = vadd.f32 %v1430, %v1521
    %1523 = vmatmul.bf16.gmra.mxu0 %v1403
    %v1524 = vpop.f32.mrf.mxu0
    %v1525 = vadd.f32 %v1430, %v1524
    %v1526 = vpop.f32.mrf.mxu0
    %v1527 = vadd.f32 %v1430, %v1526
    %1528 = vmatmul.bf16.gmra.mxu0 %v1404
    %v1529 = vpop.f32.mrf.mxu0
    %v1530 = vadd.f32 %v1430, %v1529
    %v1531 = vpop.f32.mrf.mxu0
    %v1532 = vadd.f32 %v1430, %v1531
    %1533 = vmatmul.bf16.gmra.mxu0 %v1405
    %v1534 = vpop.f32.mrf.mxu0
    %v1535 = vadd.f32 %v1430, %v1534
    %v1536 = vpop.f32.mrf.mxu0
    %v1537 = vadd.f32 %v1430, %v1536
    %1538 = vmatmul.bf16.gmra.mxu0 %v1406
    %v1539 = vpop.f32.mrf.mxu0
    %v1540 = vadd.f32 %v1430, %v1539
    %v1541 = vpop.f32.mrf.mxu0
    %v1542 = vadd.f32 %v1430, %v1541
    %1543 = vmatmul.bf16.gmra.mxu0 %v1407
    %v1544 = vpop.f32.mrf.mxu0
    %v1545 = vadd.f32 %v1430, %v1544
    %v1546 = vpop.f32.mrf.mxu0
    %v1547 = vadd.f32 %v1430, %v1546
    %1548 = vmatmul.bf16.gmra.mxu0 %v1408
    %v1549 = vpop.f32.mrf.mxu0
    %v1550 = vadd.f32 %v1430, %v1549
    %v1551 = vpop.f32.mrf.mxu0
    %v1552 = vadd.f32 %v1430, %v1551
    %1553 = vmatmul.bf16.gmra.mxu0 %v1409
    %v1554 = vpop.f32.mrf.mxu0
    %v1555 = vadd.f32 %v1430, %v1554
    %v1556 = vpop.f32.mrf.mxu0
    %v1557 = vadd.f32 %v1430, %v1556
    %1558 = vmatmul.bf16.gmra.mxu0 %v1410
    %v1559 = vpop.f32.mrf.mxu0
    %v1560 = vadd.f32 %v1430, %v1559
    %v1561 = vpop.f32.mrf.mxu0
    %v1562 = vadd.f32 %v1430, %v1561
    %1563 = vmatmul.bf16.gmra.mxu0 %v1411
    %v1564 = vpop.f32.mrf.mxu0
    %v1565 = vadd.f32 %v1430, %v1564
    %v1566 = vpop.f32.mrf.mxu0
    %v1567 = vadd.f32 %v1430, %v1566
    %1568 = vdwg.mxu0
    %v1569 = vpack.c.bf16 %v1490, %v1490
    %v1570 = vpack.c.bf16 %v1492, %v1492
    %v1571 = vpack.c.bf16 %v1495, %v1495
    %v1572 = vpack.c.bf16 %v1497, %v1497
    %v1573 = vpack.c.bf16 %v1500, %v1500
    %v1574 = vpack.c.bf16 %v1502, %v1502
    %v1575 = vpack.c.bf16 %v1505, %v1505
    %v1576 = vpack.c.bf16 %v1507, %v1507
    %v1577 = vpack.c.bf16 %v1510, %v1510
    %v1578 = vpack.c.bf16 %v1512, %v1512
    %v1579 = vpack.c.bf16 %v1515, %v1515
    %v1580 = vpack.c.bf16 %v1517, %v1517
    %v1581 = vpack.c.bf16 %v1520, %v1520
    %v1582 = vpack.c.bf16 %v1522, %v1522
    %v1583 = vpack.c.bf16 %v1525, %v1525
    %v1584 = vpack.c.bf16 %v1527, %v1527
    %v1585 = vpack.c.bf16 %v1530, %v1530
    %v1586 = vpack.c.bf16 %v1532, %v1532
    %v1587 = vpack.c.bf16 %v1535, %v1535
    %v1588 = vpack.c.bf16 %v1537, %v1537
    %v1589 = vpack.c.bf16 %v1540, %v1540
    %v1590 = vpack.c.bf16 %v1542, %v1542
    %v1591 = vpack.c.bf16 %v1545, %v1545
    %v1592 = vpack.c.bf16 %v1547, %v1547
    %v1593 = vpack.c.bf16 %v1550, %v1550
    %v1594 = vpack.c.bf16 %v1552, %v1552
    %v1595 = vpack.c.bf16 %v1555, %v1555
    %v1596 = vpack.c.bf16 %v1557, %v1557
    %v1597 = vpack.c.bf16 %v1560, %v1560
    %v1598 = vpack.c.bf16 %v1562, %v1562
    %v1599 = vpack.c.bf16 %v1565, %v1565
    %v1600 = vpack.c.bf16 %v1567, %v1567
    %1601 = vst [vmem:[%s7] sm:$0xf] %v1569
    %1602 = vst [vmem:[%s7 + $0x4] sm:$0xf] %v1570
    %1603 = vst [vmem:[%s7 + $0x8] sm:$0xf] %v1571
    %1604 = vst [vmem:[%s7 + $0xc] sm:$0xf] %v1572
    %1605 = vst [vmem:[%s7 + $0x10] sm:$0xf] %v1573
    %1606 = vst [vmem:[%s7 + $0x14] sm:$0xf] %v1574
    %1607 = vst [vmem:[%s7 + $0x18] sm:$0xf] %v1575
    %1608 = vst [vmem:[%s7 + $0x1c] sm:$0xf] %v1576
    %1609 = vst [vmem:[%s7 + $0x20] sm:$0xf] %v1577
    %1610 = vst [vmem:[%s7 + $0x24] sm:$0xf] %v1578
    %1611 = vst [vmem:[%s7 + $0x28] sm:$0xf] %v1579
    %1612 = vst [vmem:[%s7 + $0x2c] sm:$0xf] %v1580
    %1613 = vst [vmem:[%s7 + $0x30] sm:$0xf] %v1581
    %1614 = vst [vmem:[%s7 + $0x34] sm:$0xf] %v1582
    %1615 = vst [vmem:[%s7 + $0x38] sm:$0xf] %v1583
    %1616 = vst [vmem:[%s7 + $0x3c] sm:$0xf] %v1584
    %1617 = vst [vmem:[%s7 + $0x40] sm:$0xf] %v1585
    %1618 = vst [vmem:[%s7 + $0x44] sm:$0xf] %v1586
    %1619 = vst [vmem:[%s7 + $0x48] sm:$0xf] %v1587
    %1620 = vst [vmem:[%s7 + $0x4c] sm:$0xf] %v1588
    %1621 = vst [vmem:[%s7 + $0x50] sm:$0xf] %v1589
    %1622 = vst [vmem:[%s7 + $0x54] sm:$0xf] %v1590
    %1623 = vst [vmem:[%s7 + $0x58] sm:$0xf] %v1591
    %1624 = vst [vmem:[%s7 + $0x5c] sm:$0xf] %v1592
    %1625 = vst [vmem:[%s7 + $0x60] sm:$0xf] %v1593
    %1626 = vst [vmem:[%s7 + $0x64] sm:$0xf] %v1594
    %1627 = vst [vmem:[%s7 + $0x68] sm:$0xf] %v1595
    %1628 = vst [vmem:[%s7 + $0x6c] sm:$0xf] %v1596
    %1629 = vst [vmem:[%s7 + $0x70] sm:$0xf] %v1597
    %1630 = vst [vmem:[%s7 + $0x74] sm:$0xf] %v1598
    %1631 = vst [vmem:[%s7 + $0x78] sm:$0xf] %v1599
    %1632 = vst [vmem:[%s7 + $0x7c] sm:$0xf] %v1600
    %v1633 = vld [vmem:[%s688] sm:$0xff]
    %v1634 = vld [vmem:[%s688 + $0x8] sm:$0xff]
    %v1635 = vld [vmem:[%s688 + $0x10] sm:$0xff]
    %v1636 = vld [vmem:[%s688 + $0x18] sm:$0xff]
    %v1637 = vld [vmem:[%s688 + $0x20] sm:$0xff]
    %v1638 = vld [vmem:[%s688 + $0x28] sm:$0xff]
    %v1639 = vld [vmem:[%s688 + $0x30] sm:$0xff]
    %v1640 = vld [vmem:[%s688 + $0x38] sm:$0xff]
    %v1641 = vld [vmem:[%s688 + $0x40] sm:$0xff]
    %v1642 = vld [vmem:[%s688 + $0x48] sm:$0xff]
    %v1643 = vld [vmem:[%s688 + $0x50] sm:$0xff]
    %v1644 = vld [vmem:[%s688 + $0x58] sm:$0xff]
    %v1645 = vld [vmem:[%s688 + $0x60] sm:$0xff]
    %v1646 = vld [vmem:[%s688 + $0x68] sm:$0xff]
    %v1647 = vld [vmem:[%s688 + $0x70] sm:$0xff]
    %v1648 = vld [vmem:[%s688 + $0x78] sm:$0xff]
    %v1649 = vld [vmem:[%s688 + $0x80] sm:$0xff]
    %v1650 = vld [vmem:[%s688 + $0x88] sm:$0xff]
    %v1651 = vld [vmem:[%s688 + $0x90] sm:$0xff]
    %v1652 = vld [vmem:[%s688 + $0x98] sm:$0xff]
    %v1653 = vld [vmem:[%s688 + $0xa0] sm:$0xff]
    %v1654 = vld [vmem:[%s688 + $0xa8] sm:$0xff]
    %v1655 = vld [vmem:[%s688 + $0xb0] sm:$0xff]
    %v1656 = vld [vmem:[%s688 + $0xb8] sm:$0xff]
    %v1657 = vld [vmem:[%s688 + $0xc0] sm:$0xff]
    %v1658 = vld [vmem:[%s688 + $0xc8] sm:$0xff]
    %v1659 = vld [vmem:[%s688 + $0xd0] sm:$0xff]
    %v1660 = vld [vmem:[%s688 + $0xd8] sm:$0xff]
    %v1661 = vld [vmem:[%s688 + $0xe0] sm:$0xff]
    %v1662 = vld [vmem:[%s688 + $0xe8] sm:$0xff]
    %v1663 = vld [vmem:[%s688 + $0xf0] sm:$0xff]
    %v1664 = vld [vmem:[%s688 + $0xf8] sm:$0xff]
    %s1665 = scalar_lea.vmem %s2, 256
    %v1666 = vld [vmem:[%s1665] sm:$0xff]
    %v1667 = vld [vmem:[%s1665 + $0x8] sm:$0xff]
    %v1668 = vld [vmem:[%s1665 + $0x10] sm:$0xff]
    %v1669 = vld [vmem:[%s1665 + $0x18] sm:$0xff]
    %v1670 = vld [vmem:[%s1665 + $0x20] sm:$0xff]
    %v1671 = vld [vmem:[%s1665 + $0x28] sm:$0xff]
    %v1672 = vld [vmem:[%s1665 + $0x30] sm:$0xff]
    %v1673 = vld [vmem:[%s1665 + $0x38] sm:$0xff]
    %v1674 = vld [vmem:[%s1665 + $0x40] sm:$0xff]
    %v1675 = vld [vmem:[%s1665 + $0x48] sm:$0xff]
    %v1676 = vld [vmem:[%s1665 + $0x50] sm:$0xff]
    %v1677 = vld [vmem:[%s1665 + $0x58] sm:$0xff]
    %v1678 = vld [vmem:[%s1665 + $0x60] sm:$0xff]
    %v1679 = vld [vmem:[%s1665 + $0x68] sm:$0xff]
    %v1680 = vld [vmem:[%s1665 + $0x70] sm:$0xff]
    %v1681 = vld [vmem:[%s1665 + $0x78] sm:$0xff]
    %v1682 = vld [vmem:[%s1665 + $0x80] sm:$0xff]
    %v1683 = vld [vmem:[%s1665 + $0x88] sm:$0xff]
    %v1684 = vld [vmem:[%s1665 + $0x90] sm:$0xff]
    %v1685 = vld [vmem:[%s1665 + $0x98] sm:$0xff]
    %v1686 = vld [vmem:[%s1665 + $0xa0] sm:$0xff]
    %v1687 = vld [vmem:[%s1665 + $0xa8] sm:$0xff]
    %v1688 = vld [vmem:[%s1665 + $0xb0] sm:$0xff]
    %v1689 = vld [vmem:[%s1665 + $0xb8] sm:$0xff]
    %v1690 = vld [vmem:[%s1665 + $0xc0] sm:$0xff]
    %v1691 = vld [vmem:[%s1665 + $0xc8] sm:$0xff]
    %v1692 = vld [vmem:[%s1665 + $0xd0] sm:$0xff]
    %v1693 = vld [vmem:[%s1665 + $0xd8] sm:$0xff]
    %v1694 = vld [vmem:[%s1665 + $0xe0] sm:$0xff]
    %v1695 = vld [vmem:[%s1665 + $0xe8] sm:$0xff]
    %v1696 = vld [vmem:[%s1665 + $0xf0] sm:$0xff]
    %v1697 = vld [vmem:[%s1665 + $0xf8] sm:$0xff]
    %v1698 = vadd.f32 %v1633, %v1666
    %v1699 = vadd.f32 %v1634, %v1667
    %v1700 = vadd.f32 %v1635, %v1668
    %v1701 = vadd.f32 %v1636, %v1669
    %v1702 = vadd.f32 %v1637, %v1670
    %v1703 = vadd.f32 %v1638, %v1671
    %v1704 = vadd.f32 %v1639, %v1672
    %v1705 = vadd.f32 %v1640, %v1673
    %v1706 = vadd.f32 %v1641, %v1674
    %v1707 = vadd.f32 %v1642, %v1675
    %v1708 = vadd.f32 %v1643, %v1676
    %v1709 = vadd.f32 %v1644, %v1677
    %v1710 = vadd.f32 %v1645, %v1678
    %v1711 = vadd.f32 %v1646, %v1679
    %v1712 = vadd.f32 %v1647, %v1680
    %v1713 = vadd.f32 %v1648, %v1681
    %v1714 = vadd.f32 %v1649, %v1682
    %v1715 = vadd.f32 %v1650, %v1683
    %v1716 = vadd.f32 %v1651, %v1684
    %v1717 = vadd.f32 %v1652, %v1685
    %v1718 = vadd.f32 %v1653, %v1686
    %v1719 = vadd.f32 %v1654, %v1687
    %v1720 = vadd.f32 %v1655, %v1688
    %v1721 = vadd.f32 %v1656, %v1689
    %v1722 = vadd.f32 %v1657, %v1690
    %v1723 = vadd.f32 %v1658, %v1691
    %v1724 = vadd.f32 %v1659, %v1692
    %v1725 = vadd.f32 %v1660, %v1693
    %v1726 = vadd.f32 %v1661, %v1694
    %v1727 = vadd.f32 %v1662, %v1695
    %v1728 = vadd.f32 %v1663, %v1696
    %v1729 = vadd.f32 %v1664, %v1697
    %v1730 = vpack.c.bf16 %v1699, %v1698
    %v1731 = vpack.c.bf16 %v1701, %v1700
    %v1732 = vpack.c.bf16 %v1703, %v1702
    %v1733 = vpack.c.bf16 %v1705, %v1704
    %v1734 = vpack.c.bf16 %v1707, %v1706
    %v1735 = vpack.c.bf16 %v1709, %v1708
    %v1736 = vpack.c.bf16 %v1711, %v1710
    %v1737 = vpack.c.bf16 %v1713, %v1712
    %v1738 = vpack.c.bf16 %v1715, %v1714
    %v1739 = vpack.c.bf16 %v1717, %v1716
    %v1740 = vpack.c.bf16 %v1719, %v1718
    %v1741 = vpack.c.bf16 %v1721, %v1720
    %v1742 = vpack.c.bf16 %v1723, %v1722
    %v1743 = vpack.c.bf16 %v1725, %v1724
    %v1744 = vpack.c.bf16 %v1727, %v1726
    %v1745 = vpack.c.bf16 %v1729, %v1728
    %s1746 = scalar_lea.vmem %s3, 64
    %v1747 = vld [vmem:[%s1746] sm:$0xf]
    %v1748 = vld [vmem:[%s1746 + $0x4] sm:$0xf]
    %v1749 = vld [vmem:[%s1746 + $0x8] sm:$0xf]
    %v1750 = vld [vmem:[%s1746 + $0xc] sm:$0xf]
    %v1751 = vld [vmem:[%s1746 + $0x10] sm:$0xf]
    %v1752 = vld [vmem:[%s1746 + $0x14] sm:$0xf]
    %v1753 = vld [vmem:[%s1746 + $0x18] sm:$0xf]
    %v1754 = vld [vmem:[%s1746 + $0x1c] sm:$0xf]
    %v1755 = vld [vmem:[%s1746 + $0x20] sm:$0xf]
    %v1756 = vld [vmem:[%s1746 + $0x24] sm:$0xf]
    %v1757 = vld [vmem:[%s1746 + $0x28] sm:$0xf]
    %v1758 = vld [vmem:[%s1746 + $0x2c] sm:$0xf]
    %v1759 = vld [vmem:[%s1746 + $0x30] sm:$0xf]
    %v1760 = vld [vmem:[%s1746 + $0x34] sm:$0xf]
    %v1761 = vld [vmem:[%s1746 + $0x38] sm:$0xf]
    %v1762 = vld [vmem:[%s1746 + $0x3c] sm:$0xf]
    %s1763 = scalar_lea.vmem %s4, 1
    %v1764 = vld [vmem:[%s1763] sm:$0x1]
    %v1766 = vperm.slane %v1764, 0
    %v1784 = vunpack.c.l.b16 %v1747
    %v1785 = vunpack.c.l.b16 %v1748
    %v1786 = vunpack.c.l.b16 %v1749
    %v1787 = vunpack.c.l.b16 %v1750
    %v1788 = vunpack.c.l.b16 %v1751
    %v1789 = vunpack.c.l.b16 %v1752
    %v1790 = vunpack.c.l.b16 %v1753
    %v1791 = vunpack.c.l.b16 %v1754
    %v1792 = vunpack.c.l.b16 %v1755
    %v1793 = vunpack.c.l.b16 %v1756
    %v1794 = vunpack.c.l.b16 %v1757
    %v1795 = vunpack.c.l.b16 %v1758
    %v1796 = vunpack.c.l.b16 %v1759
    %v1797 = vunpack.c.l.b16 %v1760
    %v1798 = vunpack.c.l.b16 %v1761
    %v1799 = vunpack.c.l.b16 %v1762
    %v1800 = vpack.c.b16 %v1785, %v1784
    %v1801 = vpack.c.b16 %v1787, %v1786
    %v1802 = vpack.c.b16 %v1789, %v1788
    %v1803 = vpack.c.b16 %v1791, %v1790
    %v1804 = vpack.c.b16 %v1793, %v1792
    %v1805 = vpack.c.b16 %v1795, %v1794
    %v1806 = vpack.c.b16 %v1797, %v1796
    %v1807 = vpack.c.b16 %v1799, %v1798
    %1816 = vmatpush.bf16.msra.mxu0 %v1807
    %1817 = vmatpush.bf16.msra.mxu0 %v1806
    %1818 = vmatpush.bf16.msra.mxu0 %v1805
    %1819 = vmatpush.bf16.msra.mxu0 %v1804
    %1820 = vmatpush.bf16.msra.mxu0 %v1803
    %1821 = vmatpush.bf16.msra.mxu0 %v1802
    %1822 = vmatpush.bf16.msra.mxu0 %v1801
    %1823 = vmatpush.bf16.msra.mxu0 %v1800
    %1824 = vmatmul.bf16.gmra.mxu0 %v1730
    %v1825 = vpop.f32.mrf.mxu0
    %v1826 = vadd.f32 %v1766, %v1825
    %v1827 = vpop.f32.mrf.mxu0
    %v1828 = vadd.f32 %v1766, %v1827
    %1829 = vmatmul.bf16.gmra.mxu0 %v1731
    %v1830 = vpop.f32.mrf.mxu0
    %v1831 = vadd.f32 %v1766, %v1830
    %v1832 = vpop.f32.mrf.mxu0
    %v1833 = vadd.f32 %v1766, %v1832
    %1834 = vmatmul.bf16.gmra.mxu0 %v1732
    %v1835 = vpop.f32.mrf.mxu0
    %v1836 = vadd.f32 %v1766, %v1835
    %v1837 = vpop.f32.mrf.mxu0
    %v1838 = vadd.f32 %v1766, %v1837
    %1839 = vmatmul.bf16.gmra.mxu0 %v1733
    %v1840 = vpop.f32.mrf.mxu0
    %v1841 = vadd.f32 %v1766, %v1840
    %v1842 = vpop.f32.mrf.mxu0
    %v1843 = vadd.f32 %v1766, %v1842
    %1844 = vmatmul.bf16.gmra.mxu0 %v1734
    %v1845 = vpop.f32.mrf.mxu0
    %v1846 = vadd.f32 %v1766, %v1845
    %v1847 = vpop.f32.mrf.mxu0
    %v1848 = vadd.f32 %v1766, %v1847
    %1849 = vmatmul.bf16.gmra.mxu0 %v1735
    %v1850 = vpop.f32.mrf.mxu0
    %v1851 = vadd.f32 %v1766, %v1850
    %v1852 = vpop.f32.mrf.mxu0
    %v1853 = vadd.f32 %v1766, %v1852
    %1854 = vmatmul.bf16.gmra.mxu0 %v1736
    %v1855 = vpop.f32.mrf.mxu0
    %v1856 = vadd.f32 %v1766, %v1855
    %v1857 = vpop.f32.mrf.mxu0
    %v1858 = vadd.f32 %v1766, %v1857
    %1859 = vmatmul.bf16.gmra.mxu0 %v1737
    %v1860 = vpop.f32.mrf.mxu0
    %v1861 = vadd.f32 %v1766, %v1860
    %v1862 = vpop.f32.mrf.mxu0
    %v1863 = vadd.f32 %v1766, %v1862
    %1864 = vmatmul.bf16.gmra.mxu0 %v1738
    %v1865 = vpop.f32.mrf.mxu0
    %v1866 = vadd.f32 %v1766, %v1865
    %v1867 = vpop.f32.mrf.mxu0
    %v1868 = vadd.f32 %v1766, %v1867
    %1869 = vmatmul.bf16.gmra.mxu0 %v1739
    %v1870 = vpop.f32.mrf.mxu0
    %v1871 = vadd.f32 %v1766, %v1870
    %v1872 = vpop.f32.mrf.mxu0
    %v1873 = vadd.f32 %v1766, %v1872
    %1874 = vmatmul.bf16.gmra.mxu0 %v1740
    %v1875 = vpop.f32.mrf.mxu0
    %v1876 = vadd.f32 %v1766, %v1875
    %v1877 = vpop.f32.mrf.mxu0
    %v1878 = vadd.f32 %v1766, %v1877
    %1879 = vmatmul.bf16.gmra.mxu0 %v1741
    %v1880 = vpop.f32.mrf.mxu0
    %v1881 = vadd.f32 %v1766, %v1880
    %v1882 = vpop.f32.mrf.mxu0
    %v1883 = vadd.f32 %v1766, %v1882
    %1884 = vmatmul.bf16.gmra.mxu0 %v1742
    %v1885 = vpop.f32.mrf.mxu0
    %v1886 = vadd.f32 %v1766, %v1885
    %v1887 = vpop.f32.mrf.mxu0
    %v1888 = vadd.f32 %v1766, %v1887
    %1889 = vmatmul.bf16.gmra.mxu0 %v1743
    %v1890 = vpop.f32.mrf.mxu0
    %v1891 = vadd.f32 %v1766, %v1890
    %v1892 = vpop.f32.mrf.mxu0
    %v1893 = vadd.f32 %v1766, %v1892
    %1894 = vmatmul.bf16.gmra.mxu0 %v1744
    %v1895 = vpop.f32.mrf.mxu0
    %v1896 = vadd.f32 %v1766, %v1895
    %v1897 = vpop.f32.mrf.mxu0
    %v1898 = vadd.f32 %v1766, %v1897
    %1899 = vmatmul.bf16.gmra.mxu0 %v1745
    %v1900 = vpop.f32.mrf.mxu0
    %v1901 = vadd.f32 %v1766, %v1900
    %v1902 = vpop.f32.mrf.mxu0
    %v1903 = vadd.f32 %v1766, %v1902
    %1904 = vdwg.mxu0
    %v1905 = vmax.f32 %v1826, 0.0
    %v1906 = vmax.f32 %v1828, 0.0
    %v1907 = vmax.f32 %v1831, 0.0
    %v1908 = vmax.f32 %v1833, 0.0
    %v1909 = vmax.f32 %v1836, 0.0
    %v1910 = vmax.f32 %v1838, 0.0
    %v1911 = vmax.f32 %v1841, 0.0
    %v1912 = vmax.f32 %v1843, 0.0
    %v1913 = vmax.f32 %v1846, 0.0
    %v1914 = vmax.f32 %v1848, 0.0
    %v1915 = vmax.f32 %v1851, 0.0
    %v1916 = vmax.f32 %v1853, 0.0
    %v1917 = vmax.f32 %v1856, 0.0
    %v1918 = vmax.f32 %v1858, 0.0
    %v1919 = vmax.f32 %v1861, 0.0
    %v1920 = vmax.f32 %v1863, 0.0
    %v1921 = vmax.f32 %v1866, 0.0
    %v1922 = vmax.f32 %v1868, 0.0
    %v1923 = vmax.f32 %v1871, 0.0
    %v1924 = vmax.f32 %v1873, 0.0
    %v1925 = vmax.f32 %v1876, 0.0
    %v1926 = vmax.f32 %v1878, 0.0
    %v1927 = vmax.f32 %v1881, 0.0
    %v1928 = vmax.f32 %v1883, 0.0
    %v1929 = vmax.f32 %v1886, 0.0
    %v1930 = vmax.f32 %v1888, 0.0
    %v1931 = vmax.f32 %v1891, 0.0
    %v1932 = vmax.f32 %v1893, 0.0
    %v1933 = vmax.f32 %v1896, 0.0
    %v1934 = vmax.f32 %v1898, 0.0
    %v1935 = vmax.f32 %v1901, 0.0
    %v1936 = vmax.f32 %v1903, 0.0
    %v1937 = vpack.c.bf16 %v1906, %v1905
    %v1938 = vpack.c.bf16 %v1908, %v1907
    %v1939 = vpack.c.bf16 %v1910, %v1909
    %v1940 = vpack.c.bf16 %v1912, %v1911
    %v1941 = vpack.c.bf16 %v1914, %v1913
    %v1942 = vpack.c.bf16 %v1916, %v1915
    %v1943 = vpack.c.bf16 %v1918, %v1917
    %v1944 = vpack.c.bf16 %v1920, %v1919
    %v1945 = vpack.c.bf16 %v1922, %v1921
    %v1946 = vpack.c.bf16 %v1924, %v1923
    %v1947 = vpack.c.bf16 %v1926, %v1925
    %v1948 = vpack.c.bf16 %v1928, %v1927
    %v1949 = vpack.c.bf16 %v1930, %v1929
    %v1950 = vpack.c.bf16 %v1932, %v1931
    %v1951 = vpack.c.bf16 %v1934, %v1933
    %v1952 = vpack.c.bf16 %v1936, %v1935
    %s1953 = scalar_lea.vmem %s5, 64
    %v1954 = vld [vmem:[%s1953] sm:$0xf]
    %v1955 = vld [vmem:[%s1953 + $0x4] sm:$0xf]
    %v1956 = vld [vmem:[%s1953 + $0x8] sm:$0xf]
    %v1957 = vld [vmem:[%s1953 + $0xc] sm:$0xf]
    %v1958 = vld [vmem:[%s1953 + $0x10] sm:$0xf]
    %v1959 = vld [vmem:[%s1953 + $0x14] sm:$0xf]
    %v1960 = vld [vmem:[%s1953 + $0x18] sm:$0xf]
    %v1961 = vld [vmem:[%s1953 + $0x1c] sm:$0xf]
    %v1962 = vld [vmem:[%s1953 + $0x20] sm:$0xf]
    %v1963 = vld [vmem:[%s1953 + $0x24] sm:$0xf]
    %v1964 = vld [vmem:[%s1953 + $0x28] sm:$0xf]
    %v1965 = vld [vmem:[%s1953 + $0x2c] sm:$0xf]
    %v1966 = vld [vmem:[%s1953 + $0x30] sm:$0xf]
    %v1967 = vld [vmem:[%s1953 + $0x34] sm:$0xf]
    %v1968 = vld [vmem:[%s1953 + $0x38] sm:$0xf]
    %v1969 = vld [vmem:[%s1953 + $0x3c] sm:$0xf]
    %s1970 = scalar_lea.vmem %s6, 1
    %v1971 = vld [vmem:[%s1970] sm:$0x1]
    %v1973 = vperm.slane %v1971, 0
    %v1991 = vunpack.c.l.b16 %v1954
    %v1992 = vunpack.c.l.b16 %v1955
    %v1993 = vunpack.c.l.b16 %v1956
    %v1994 = vunpack.c.l.b16 %v1957
    %v1995 = vunpack.c.l.b16 %v1958
    %v1996 = vunpack.c.l.b16 %v1959
    %v1997 = vunpack.c.l.b16 %v1960
    %v1998 = vunpack.c.l.b16 %v1961
    %v1999 = vunpack.c.l.b16 %v1962
    %v2000 = vunpack.c.l.b16 %v1963
    %v2001 = vunpack.c.l.b16 %v1964
    %v2002 = vunpack.c.l.b16 %v1965
    %v2003 = vunpack.c.l.b16 %v1966
    %v2004 = vunpack.c.l.b16 %v1967
    %v2005 = vunpack.c.l.b16 %v1968
    %v2006 = vunpack.c.l.b16 %v1969
    %v2007 = vpack.c.b16 %v1992, %v1991
    %v2008 = vpack.c.b16 %v1994, %v1993
    %v2009 = vpack.c.b16 %v1996, %v1995
    %v2010 = vpack.c.b16 %v1998, %v1997
    %v2011 = vpack.c.b16 %v2000, %v1999
    %v2012 = vpack.c.b16 %v2002, %v2001
    %v2013 = vpack.c.b16 %v2004, %v2003
    %v2014 = vpack.c.b16 %v2006, %v2005
    %2023 = vmatpush.bf16.msra.mxu0 %v2014
    %2024 = vmatpush.bf16.msra.mxu0 %v2013
    %2025 = vmatpush.bf16.msra.mxu0 %v2012
    %2026 = vmatpush.bf16.msra.mxu0 %v2011
    %2027 = vmatpush.bf16.msra.mxu0 %v2010
    %2028 = vmatpush.bf16.msra.mxu0 %v2009
    %2029 = vmatpush.bf16.msra.mxu0 %v2008
    %2030 = vmatpush.bf16.msra.mxu0 %v2007
    %2031 = vmatmul.bf16.gmra.mxu0 %v1937
    %v2032 = vpop.f32.mrf.mxu0
    %v2033 = vadd.f32 %v1973, %v2032
    %v2034 = vpop.f32.mrf.mxu0
    %v2035 = vadd.f32 %v1973, %v2034
    %2036 = vmatmul.bf16.gmra.mxu0 %v1938
    %v2037 = vpop.f32.mrf.mxu0
    %v2038 = vadd.f32 %v1973, %v2037
    %v2039 = vpop.f32.mrf.mxu0
    %v2040 = vadd.f32 %v1973, %v2039
    %2041 = vmatmul.bf16.gmra.mxu0 %v1939
    %v2042 = vpop.f32.mrf.mxu0
    %v2043 = vadd.f32 %v1973, %v2042
    %v2044 = vpop.f32.mrf.mxu0
    %v2045 = vadd.f32 %v1973, %v2044
    %2046 = vmatmul.bf16.gmra.mxu0 %v1940
    %v2047 = vpop.f32.mrf.mxu0
    %v2048 = vadd.f32 %v1973, %v2047
    %v2049 = vpop.f32.mrf.mxu0
    %v2050 = vadd.f32 %v1973, %v2049
    %2051 = vmatmul.bf16.gmra.mxu0 %v1941
    %v2052 = vpop.f32.mrf.mxu0
    %v2053 = vadd.f32 %v1973, %v2052
    %v2054 = vpop.f32.mrf.mxu0
    %v2055 = vadd.f32 %v1973, %v2054
    %2056 = vmatmul.bf16.gmra.mxu0 %v1942
    %v2057 = vpop.f32.mrf.mxu0
    %v2058 = vadd.f32 %v1973, %v2057
    %v2059 = vpop.f32.mrf.mxu0
    %v2060 = vadd.f32 %v1973, %v2059
    %2061 = vmatmul.bf16.gmra.mxu0 %v1943
    %v2062 = vpop.f32.mrf.mxu0
    %v2063 = vadd.f32 %v1973, %v2062
    %v2064 = vpop.f32.mrf.mxu0
    %v2065 = vadd.f32 %v1973, %v2064
    %2066 = vmatmul.bf16.gmra.mxu0 %v1944
    %v2067 = vpop.f32.mrf.mxu0
    %v2068 = vadd.f32 %v1973, %v2067
    %v2069 = vpop.f32.mrf.mxu0
    %v2070 = vadd.f32 %v1973, %v2069
    %2071 = vmatmul.bf16.gmra.mxu0 %v1945
    %v2072 = vpop.f32.mrf.mxu0
    %v2073 = vadd.f32 %v1973, %v2072
    %v2074 = vpop.f32.mrf.mxu0
    %v2075 = vadd.f32 %v1973, %v2074
    %2076 = vmatmul.bf16.gmra.mxu0 %v1946
    %v2077 = vpop.f32.mrf.mxu0
    %v2078 = vadd.f32 %v1973, %v2077
    %v2079 = vpop.f32.mrf.mxu0
    %v2080 = vadd.f32 %v1973, %v2079
    %2081 = vmatmul.bf16.gmra.mxu0 %v1947
    %v2082 = vpop.f32.mrf.mxu0
    %v2083 = vadd.f32 %v1973, %v2082
    %v2084 = vpop.f32.mrf.mxu0
    %v2085 = vadd.f32 %v1973, %v2084
    %2086 = vmatmul.bf16.gmra.mxu0 %v1948
    %v2087 = vpop.f32.mrf.mxu0
    %v2088 = vadd.f32 %v1973, %v2087
    %v2089 = vpop.f32.mrf.mxu0
    %v2090 = vadd.f32 %v1973, %v2089
    %2091 = vmatmul.bf16.gmra.mxu0 %v1949
    %v2092 = vpop.f32.mrf.mxu0
    %v2093 = vadd.f32 %v1973, %v2092
    %v2094 = vpop.f32.mrf.mxu0
    %v2095 = vadd.f32 %v1973, %v2094
    %2096 = vmatmul.bf16.gmra.mxu0 %v1950
    %v2097 = vpop.f32.mrf.mxu0
    %v2098 = vadd.f32 %v1973, %v2097
    %v2099 = vpop.f32.mrf.mxu0
    %v2100 = vadd.f32 %v1973, %v2099
    %2101 = vmatmul.bf16.gmra.mxu0 %v1951
    %v2102 = vpop.f32.mrf.mxu0
    %v2103 = vadd.f32 %v1973, %v2102
    %v2104 = vpop.f32.mrf.mxu0
    %v2105 = vadd.f32 %v1973, %v2104
    %2106 = vmatmul.bf16.gmra.mxu0 %v1952
    %v2107 = vpop.f32.mrf.mxu0
    %v2108 = vadd.f32 %v1973, %v2107
    %v2109 = vpop.f32.mrf.mxu0
    %v2110 = vadd.f32 %v1973, %v2109
    %2111 = vdwg.mxu0
    %v2112 = vpack.c.bf16 %v2033, %v2033
    %v2113 = vpack.c.bf16 %v2035, %v2035
    %v2114 = vpack.c.bf16 %v2038, %v2038
    %v2115 = vpack.c.bf16 %v2040, %v2040
    %v2116 = vpack.c.bf16 %v2043, %v2043
    %v2117 = vpack.c.bf16 %v2045, %v2045
    %v2118 = vpack.c.bf16 %v2048, %v2048
    %v2119 = vpack.c.bf16 %v2050, %v2050
    %v2120 = vpack.c.bf16 %v2053, %v2053
    %v2121 = vpack.c.bf16 %v2055, %v2055
    %v2122 = vpack.c.bf16 %v2058, %v2058
    %v2123 = vpack.c.bf16 %v2060, %v2060
    %v2124 = vpack.c.bf16 %v2063, %v2063
    %v2125 = vpack.c.bf16 %v2065, %v2065
    %v2126 = vpack.c.bf16 %v2068, %v2068
    %v2127 = vpack.c.bf16 %v2070, %v2070
    %v2128 = vpack.c.bf16 %v2073, %v2073
    %v2129 = vpack.c.bf16 %v2075, %v2075
    %v2130 = vpack.c.bf16 %v2078, %v2078
    %v2131 = vpack.c.bf16 %v2080, %v2080
    %v2132 = vpack.c.bf16 %v2083, %v2083
    %v2133 = vpack.c.bf16 %v2085, %v2085
    %v2134 = vpack.c.bf16 %v2088, %v2088
    %v2135 = vpack.c.bf16 %v2090, %v2090
    %v2136 = vpack.c.bf16 %v2093, %v2093
    %v2137 = vpack.c.bf16 %v2095, %v2095
    %v2138 = vpack.c.bf16 %v2098, %v2098
    %v2139 = vpack.c.bf16 %v2100, %v2100
    %v2140 = vpack.c.bf16 %v2103, %v2103
    %v2141 = vpack.c.bf16 %v2105, %v2105
    %v2142 = vpack.c.bf16 %v2108, %v2108
    %v2143 = vpack.c.bf16 %v2110, %v2110
    %s2144 = scalar_lea.vmem %s7, 128
    %2145 = vst [vmem:[%s2144] sm:$0xf] %v2112
    %2146 = vst [vmem:[%s2144 + $0x4] sm:$0xf] %v2113
    %2147 = vst [vmem:[%s2144 + $0x8] sm:$0xf] %v2114
    %2148 = vst [vmem:[%s2144 + $0xc] sm:$0xf] %v2115
    %2149 = vst [vmem:[%s2144 + $0x10] sm:$0xf] %v2116
    %2150 = vst [vmem:[%s2144 + $0x14] sm:$0xf] %v2117
    %2151 = vst [vmem:[%s2144 + $0x18] sm:$0xf] %v2118
    %2152 = vst [vmem:[%s2144 + $0x1c] sm:$0xf] %v2119
    %2153 = vst [vmem:[%s2144 + $0x20] sm:$0xf] %v2120
    %2154 = vst [vmem:[%s2144 + $0x24] sm:$0xf] %v2121
    %2155 = vst [vmem:[%s2144 + $0x28] sm:$0xf] %v2122
    %2156 = vst [vmem:[%s2144 + $0x2c] sm:$0xf] %v2123
    %2157 = vst [vmem:[%s2144 + $0x30] sm:$0xf] %v2124
    %2158 = vst [vmem:[%s2144 + $0x34] sm:$0xf] %v2125
    %2159 = vst [vmem:[%s2144 + $0x38] sm:$0xf] %v2126
    %2160 = vst [vmem:[%s2144 + $0x3c] sm:$0xf] %v2127
    %2161 = vst [vmem:[%s2144 + $0x40] sm:$0xf] %v2128
    %2162 = vst [vmem:[%s2144 + $0x44] sm:$0xf] %v2129
    %2163 = vst [vmem:[%s2144 + $0x48] sm:$0xf] %v2130
    %2164 = vst [vmem:[%s2144 + $0x4c] sm:$0xf] %v2131
    %2165 = vst [vmem:[%s2144 + $0x50] sm:$0xf] %v2132
    %2166 = vst [vmem:[%s2144 + $0x54] sm:$0xf] %v2133
    %2167 = vst [vmem:[%s2144 + $0x58] sm:$0xf] %v2134
    %2168 = vst [vmem:[%s2144 + $0x5c] sm:$0xf] %v2135
    %2169 = vst [vmem:[%s2144 + $0x60] sm:$0xf] %v2136
    %2170 = vst [vmem:[%s2144 + $0x64] sm:$0xf] %v2137
    %2171 = vst [vmem:[%s2144 + $0x68] sm:$0xf] %v2138
    %2172 = vst [vmem:[%s2144 + $0x6c] sm:$0xf] %v2139
    %2173 = vst [vmem:[%s2144 + $0x70] sm:$0xf] %v2140
    %2174 = vst [vmem:[%s2144 + $0x74] sm:$0xf] %v2141
    %2175 = vst [vmem:[%s2144 + $0x78] sm:$0xf] %v2142
    %2176 = vst [vmem:[%s2144 + $0x7c] sm:$0xf] %v2143
  $region37: #{student_graphpred_forward.4} parent=0 // pred_fallthru
    _
  // Predicated region
  $region38: #{student_graphpred_forward.4} parent=0 // pred_check
    _
  $region39: #{student_graphpred_forward.4} parent=0 // pred_check_branch
    %2178 = sbr.rel (0) target = $region41
  $region40: #{student_graphpred_forward.4} parent=0 // pred_region
    _
  $region41: #{student_graphpred_forward.4} parent=0 // pred_fallthru
    _
  // Predicated region
  $region42: #{student_graphpred_forward.4} parent=0 // pred_check
    _
  $region43: #{student_graphpred_forward.4} parent=0 // pred_check_branch
    %2180 = sbr.rel (0) target = $region45
  $region44: #{student_graphpred_forward.4} parent=0 // pred_region
    _
  $region45: #{student_graphpred_forward.4} parent=0 // pred_fallthru
    _

// kernel: student_graphpred_forward.3
$region0: #{student_graphpred_forward.3}
  #allocation0 [shape = 'u32[]', space=smem, size = 0x4, offset = 0x4, fixed_abs, tag = 'smem constant byte address 0x4 - core index']
  #allocation1 [shape = 'u32[72,128]{1,0:T(1,128)}', space=vmem, size = 0x9000, scoped, tag = 'internal scratch']
  #allocation2 [shape = 'f32[2,256,128]{2,1,0:T(8,128)}', space=vmem, size = 0x40000, scoped, tag = 'scratch operand']
  %s0 = inlined_call_operand.vmem [shape: bf16[256,256], index: 0, kind: input, shape index: {}]
  %s1 = inlined_call_operand.vmem [shape: bf16[2,256,128], index: 1, kind: input, shape index: {}]
  %s2 = inlined_call_operand.vmem [shape: f32[2,256,128], index: 2, kind: input, shape index: {}]
  %s3 = inlined_call_operand.vmem [shape: bf16[2,128,128], index: 3, kind: input, shape index: {}]
  %s4 = inlined_call_operand.vmem [shape: f32[2,1,128], index: 4, kind: input, shape index: {}]
  %s5 = inlined_call_operand.vmem [shape: bf16[2,128,128], index: 5, kind: input, shape index: {}]
  %s6 = inlined_call_operand.vmem [shape: f32[2,1,128], index: 6, kind: input, shape index: {}]
  %s7 = inlined_call_operand.vmem [shape: bf16[2,256,128], index: 7, kind: output, shape index: {}]
  %s8 = sld [smem:[#allocation0]]
  $region46: #{student_graphpred_forward.3} parent=0
    _
  %s10 = ssub.s32 1, %s8
  %s11 = scalar_select 0, %s10, %s8
  // Predicated region
  $region2: #{student_graphpred_forward.3} parent=0 // pred_check
    _
  $region3: #{student_graphpred_forward.3} parent=0 // pred_check_branch
    %13 = sbr.rel (0) target = $region5
  $region4: #{student_graphpred_forward.3} parent=0 // pred_region
    _
  $region5: #{student_graphpred_forward.3} parent=0 // pred_fallthru
    _
  // Predicated region
  $region6: #{student_graphpred_forward.3} parent=0 // pred_check
    _
  $region7: #{student_graphpred_forward.3} parent=0 // pred_check_branch
    %15 = sbr.rel (0) target = $region9
  $region8: #{student_graphpred_forward.3} parent=0 // pred_region
    _
  $region9: #{student_graphpred_forward.3} parent=0 // pred_fallthru
    _
  // Predicated region
  $region10: #{student_graphpred_forward.3} parent=0 // pred_check
    _
  $region11: #{student_graphpred_forward.3} parent=0 // pred_check_branch
    %17 = sbr.rel (0) target = $region13
  $region12: #{student_graphpred_forward.3} parent=0 // pred_region
    _
  $region13: #{student_graphpred_forward.3} parent=0 // pred_fallthru
    _
  // Predicated region
  $region14: #{student_graphpred_forward.3} parent=0 // pred_check
    _
  $region15: #{student_graphpred_forward.3} parent=0 // pred_check_branch
    %19 = sbr.rel (0) target = $region17
  $region16: #{student_graphpred_forward.3} parent=0 // pred_region
    _
  $region17: #{student_graphpred_forward.3} parent=0 // pred_fallthru
    _
  // Predicated region
  $region18: #{student_graphpred_forward.3} parent=0 // pred_check
    _
  $region19: #{student_graphpred_forward.3} parent=0 // pred_check_branch
    %21 = sbr.rel (0) target = $region21
  $region20: #{student_graphpred_forward.3} parent=0 // pred_region
    _
  $region21: #{student_graphpred_forward.3} parent=0 // pred_fallthru
    _
  // Predicated region
  $region22: #{student_graphpred_forward.3} parent=0 // pred_check
    _
  $region23: #{student_graphpred_forward.3} parent=0 // pred_check_branch
    %23 = sbr.rel (0) target = $region25
  $region24: #{student_graphpred_forward.3} parent=0 // pred_region
    _
  $region25: #{student_graphpred_forward.3} parent=0 // pred_fallthru
    _
  // Predicated region
  $region26: #{student_graphpred_forward.3} parent=0 // pred_check
    _
  $region27: #{student_graphpred_forward.3} parent=0 // pred_check_branch
    %25 = sbr.rel (0) target = $region29
  $region28: #{student_graphpred_forward.3} parent=0 // pred_region
    _
  $region29: #{student_graphpred_forward.3} parent=0 // pred_fallthru
    _
  %p26 = scmp.eq.s32.totalorder 0, 0
  // Predicated region
  $region30: #{student_graphpred_forward.3} parent=0 // pred_check
    %p27 = pneg %p26
  $region31: #{student_graphpred_forward.3} parent=0 // pred_check_branch
    %29 = sbr.rel (%p27) target = $region33
  $region32: #{student_graphpred_forward.3} parent=0 // pred_region
    %30 = vst [vmem:[#allocation2] sm:$0xff] 0.0
    %31 = vst [vmem:[#allocation2 + $0x8] sm:$0xff] 0.0
    %32 = vst [vmem:[#allocation2 + $0x10] sm:$0xff] 0.0
    %33 = vst [vmem:[#allocation2 + $0x18] sm:$0xff] 0.0
    %34 = vst [vmem:[#allocation2 + $0x20] sm:$0xff] 0.0
    %35 = vst [vmem:[#allocation2 + $0x28] sm:$0xff] 0.0
    %36 = vst [vmem:[#allocation2 + $0x30] sm:$0xff] 0.0
    %37 = vst [vmem:[#allocation2 + $0x38] sm:$0xff] 0.0
    %38 = vst [vmem:[#allocation2 + $0x40] sm:$0xff] 0.0
    %39 = vst [vmem:[#allocation2 + $0x48] sm:$0xff] 0.0
    %40 = vst [vmem:[#allocation2 + $0x50] sm:$0xff] 0.0
    %41 = vst [vmem:[#allocation2 + $0x58] sm:$0xff] 0.0
    %42 = vst [vmem:[#allocation2 + $0x60] sm:$0xff] 0.0
    %43 = vst [vmem:[#allocation2 + $0x68] sm:$0xff] 0.0
    %44 = vst [vmem:[#allocation2 + $0x70] sm:$0xff] 0.0
    %45 = vst [vmem:[#allocation2 + $0x78] sm:$0xff] 0.0
    %46 = vst [vmem:[#allocation2 + $0x80] sm:$0xff] 0.0
    %47 = vst [vmem:[#allocation2 + $0x88] sm:$0xff] 0.0
    %48 = vst [vmem:[#allocation2 + $0x90] sm:$0xff] 0.0
    %49 = vst [vmem:[#allocation2 + $0x98] sm:$0xff] 0.0
    %50 = vst [vmem:[#allocation2 + $0xa0] sm:$0xff] 0.0
    %51 = vst [vmem:[#allocation2 + $0xa8] sm:$0xff] 0.0
    %52 = vst [vmem:[#allocation2 + $0xb0] sm:$0xff] 0.0
    %53 = vst [vmem:[#allocation2 + $0xb8] sm:$0xff] 0.0
    %54 = vst [vmem:[#allocation2 + $0xc0] sm:$0xff] 0.0
    %55 = vst [vmem:[#allocation2 + $0xc8] sm:$0xff] 0.0
    %56 = vst [vmem:[#allocation2 + $0xd0] sm:$0xff] 0.0
    %57 = vst [vmem:[#allocation2 + $0xd8] sm:$0xff] 0.0
    %58 = vst [vmem:[#allocation2 + $0xe0] sm:$0xff] 0.0
    %59 = vst [vmem:[#allocation2 + $0xe8] sm:$0xff] 0.0
    %60 = vst [vmem:[#allocation2 + $0xf0] sm:$0xff] 0.0
    %61 = vst [vmem:[#allocation2 + $0xf8] sm:$0xff] 0.0
    %62 = vst [vmem:[#allocation2 + $0x100] sm:$0xff] 0.0
    %63 = vst [vmem:[#allocation2 + $0x108] sm:$0xff] 0.0
    %64 = vst [vmem:[#allocation2 + $0x110] sm:$0xff] 0.0
    %65 = vst [vmem:[#allocation2 + $0x118] sm:$0xff] 0.0
    %66 = vst [vmem:[#allocation2 + $0x120] sm:$0xff] 0.0
    %67 = vst [vmem:[#allocation2 + $0x128] sm:$0xff] 0.0
    %68 = vst [vmem:[#allocation2 + $0x130] sm:$0xff] 0.0
    %69 = vst [vmem:[#allocation2 + $0x138] sm:$0xff] 0.0
    %70 = vst [vmem:[#allocation2 + $0x140] sm:$0xff] 0.0
    %71 = vst [vmem:[#allocation2 + $0x148] sm:$0xff] 0.0
    %72 = vst [vmem:[#allocation2 + $0x150] sm:$0xff] 0.0
    %73 = vst [vmem:[#allocation2 + $0x158] sm:$0xff] 0.0
    %74 = vst [vmem:[#allocation2 + $0x160] sm:$0xff] 0.0
    %75 = vst [vmem:[#allocation2 + $0x168] sm:$0xff] 0.0
    %76 = vst [vmem:[#allocation2 + $0x170] sm:$0xff] 0.0
    %77 = vst [vmem:[#allocation2 + $0x178] sm:$0xff] 0.0
    %78 = vst [vmem:[#allocation2 + $0x180] sm:$0xff] 0.0
    %79 = vst [vmem:[#allocation2 + $0x188] sm:$0xff] 0.0
    %80 = vst [vmem:[#allocation2 + $0x190] sm:$0xff] 0.0
    %81 = vst [vmem:[#allocation2 + $0x198] sm:$0xff] 0.0
    %82 = vst [vmem:[#allocation2 + $0x1a0] sm:$0xff] 0.0
    %83 = vst [vmem:[#allocation2 + $0x1a8] sm:$0xff] 0.0
    %84 = vst [vmem:[#allocation2 + $0x1b0] sm:$0xff] 0.0
    %85 = vst [vmem:[#allocation2 + $0x1b8] sm:$0xff] 0.0
    %86 = vst [vmem:[#allocation2 + $0x1c0] sm:$0xff] 0.0
    %87 = vst [vmem:[#allocation2 + $0x1c8] sm:$0xff] 0.0
    %88 = vst [vmem:[#allocation2 + $0x1d0] sm:$0xff] 0.0
    %89 = vst [vmem:[#allocation2 + $0x1d8] sm:$0xff] 0.0
    %90 = vst [vmem:[#allocation2 + $0x1e0] sm:$0xff] 0.0
    %91 = vst [vmem:[#allocation2 + $0x1e8] sm:$0xff] 0.0
    %92 = vst [vmem:[#allocation2 + $0x1f0] sm:$0xff] 0.0
    %93 = vst [vmem:[#allocation2 + $0x1f8] sm:$0xff] 0.0
  $region33: #{student_graphpred_forward.3} parent=0 // pred_fallthru
    _
  %v94 = vld [vmem:[%s0] sm:$0xff]
  %v95 = vld [vmem:[%s0 + $0x8] sm:$0xff]
  %v96 = vld [vmem:[%s0 + $0x10] sm:$0xff]
  %v97 = vld [vmem:[%s0 + $0x18] sm:$0xff]
  %v98 = vld [vmem:[%s0 + $0x20] sm:$0xff]
  %v99 = vld [vmem:[%s0 + $0x28] sm:$0xff]
  %v100 = vld [vmem:[%s0 + $0x30] sm:$0xff]
  %v101 = vld [vmem:[%s0 + $0x38] sm:$0xff]
  %v102 = vld [vmem:[%s0 + $0x40] sm:$0xff]
  %v103 = vld [vmem:[%s0 + $0x48] sm:$0xff]
  %v104 = vld [vmem:[%s0 + $0x50] sm:$0xff]
  %v105 = vld [vmem:[%s0 + $0x58] sm:$0xff]
  %v106 = vld [vmem:[%s0 + $0x60] sm:$0xff]
  %v107 = vld [vmem:[%s0 + $0x68] sm:$0xff]
  %v108 = vld [vmem:[%s0 + $0x70] sm:$0xff]
  %v109 = vld [vmem:[%s0 + $0x78] sm:$0xff]
  %v110 = vld [vmem:[%s0 + $0x80] sm:$0xff]
  %v111 = vld [vmem:[%s0 + $0x88] sm:$0xff]
  %v112 = vld [vmem:[%s0 + $0x90] sm:$0xff]
  %v113 = vld [vmem:[%s0 + $0x98] sm:$0xff]
  %v114 = vld [vmem:[%s0 + $0xa0] sm:$0xff]
  %v115 = vld [vmem:[%s0 + $0xa8] sm:$0xff]
  %v116 = vld [vmem:[%s0 + $0xb0] sm:$0xff]
  %v117 = vld [vmem:[%s0 + $0xb8] sm:$0xff]
  %v118 = vld [vmem:[%s0 + $0xc0] sm:$0xff]
  %v119 = vld [vmem:[%s0 + $0xc8] sm:$0xff]
  %v120 = vld [vmem:[%s0 + $0xd0] sm:$0xff]
  %v121 = vld [vmem:[%s0 + $0xd8] sm:$0xff]
  %v122 = vld [vmem:[%s0 + $0xe0] sm:$0xff]
  %v123 = vld [vmem:[%s0 + $0xe8] sm:$0xff]
  %v124 = vld [vmem:[%s0 + $0xf0] sm:$0xff]
  %v125 = vld [vmem:[%s0 + $0xf8] sm:$0xff]
  %v126 = vld [vmem:[#allocation2] sm:$0xff]
  %v127 = vld [vmem:[#allocation2 + $0x8] sm:$0xff]
  %v128 = vld [vmem:[#allocation2 + $0x10] sm:$0xff]
  %v129 = vld [vmem:[#allocation2 + $0x18] sm:$0xff]
  %v130 = vld [vmem:[#allocation2 + $0x20] sm:$0xff]
  %v131 = vld [vmem:[#allocation2 + $0x28] sm:$0xff]
  %v132 = vld [vmem:[#allocation2 + $0x30] sm:$0xff]
  %v133 = vld [vmem:[#allocation2 + $0x38] sm:$0xff]
  %v134 = vld [vmem:[#allocation2 + $0x40] sm:$0xff]
  %v135 = vld [vmem:[#allocation2 + $0x48] sm:$0xff]
  %v136 = vld [vmem:[#allocation2 + $0x50] sm:$0xff]
  %v137 = vld [vmem:[#allocation2 + $0x58] sm:$0xff]
  %v138 = vld [vmem:[#allocation2 + $0x60] sm:$0xff]
  %v139 = vld [vmem:[#allocation2 + $0x68] sm:$0xff]
  %v140 = vld [vmem:[#allocation2 + $0x70] sm:$0xff]
  %v141 = vld [vmem:[#allocation2 + $0x78] sm:$0xff]
  %v142 = vld [vmem:[#allocation2 + $0x80] sm:$0xff]
  %v143 = vld [vmem:[#allocation2 + $0x88] sm:$0xff]
  %v144 = vld [vmem:[#allocation2 + $0x90] sm:$0xff]
  %v145 = vld [vmem:[#allocation2 + $0x98] sm:$0xff]
  %v146 = vld [vmem:[#allocation2 + $0xa0] sm:$0xff]
  %v147 = vld [vmem:[#allocation2 + $0xa8] sm:$0xff]
  %v148 = vld [vmem:[#allocation2 + $0xb0] sm:$0xff]
  %v149 = vld [vmem:[#allocation2 + $0xb8] sm:$0xff]
  %v150 = vld [vmem:[#allocation2 + $0xc0] sm:$0xff]
  %v151 = vld [vmem:[#allocation2 + $0xc8] sm:$0xff]
  %v152 = vld [vmem:[#allocation2 + $0xd0] sm:$0xff]
  %v153 = vld [vmem:[#allocation2 + $0xd8] sm:$0xff]
  %v154 = vld [vmem:[#allocation2 + $0xe0] sm:$0xff]
  %v155 = vld [vmem:[#allocation2 + $0xe8] sm:$0xff]
  %v156 = vld [vmem:[#allocation2 + $0xf0] sm:$0xff]
  %v157 = vld [vmem:[#allocation2 + $0xf8] sm:$0xff]
  %v158 = vld [vmem:[%s1] sm:$0xf]
  %v159 = vld [vmem:[%s1 + $0x4] sm:$0xf]
  %v160 = vld [vmem:[%s1 + $0x8] sm:$0xf]
  %v161 = vld [vmem:[%s1 + $0xc] sm:$0xf]
  %v162 = vld [vmem:[%s1 + $0x10] sm:$0xf]
  %v163 = vld [vmem:[%s1 + $0x14] sm:$0xf]
  %v164 = vld [vmem:[%s1 + $0x18] sm:$0xf]
  %v165 = vld [vmem:[%s1 + $0x1c] sm:$0xf]
  %v166 = vld [vmem:[%s1 + $0x20] sm:$0xf]
  %v167 = vld [vmem:[%s1 + $0x24] sm:$0xf]
  %v168 = vld [vmem:[%s1 + $0x28] sm:$0xf]
  %v169 = vld [vmem:[%s1 + $0x2c] sm:$0xf]
  %v170 = vld [vmem:[%s1 + $0x30] sm:$0xf]
  %v171 = vld [vmem:[%s1 + $0x34] sm:$0xf]
  %v172 = vld [vmem:[%s1 + $0x38] sm:$0xf]
  %v173 = vld [vmem:[%s1 + $0x3c] sm:$0xf]
  %v174 = vld [vmem:[%s1 + $0x40] sm:$0xf]
  %v175 = vld [vmem:[%s1 + $0x44] sm:$0xf]
  %v176 = vld [vmem:[%s1 + $0x48] sm:$0xf]
  %v177 = vld [vmem:[%s1 + $0x4c] sm:$0xf]
  %v178 = vld [vmem:[%s1 + $0x50] sm:$0xf]
  %v179 = vld [vmem:[%s1 + $0x54] sm:$0xf]
  %v180 = vld [vmem:[%s1 + $0x58] sm:$0xf]
  %v181 = vld [vmem:[%s1 + $0x5c] sm:$0xf]
  %v182 = vld [vmem:[%s1 + $0x60] sm:$0xf]
  %v183 = vld [vmem:[%s1 + $0x64] sm:$0xf]
  %v184 = vld [vmem:[%s1 + $0x68] sm:$0xf]
  %v185 = vld [vmem:[%s1 + $0x6c] sm:$0xf]
  %v186 = vld [vmem:[%s1 + $0x70] sm:$0xf]
  %v187 = vld [vmem:[%s1 + $0x74] sm:$0xf]
  %v188 = vld [vmem:[%s1 + $0x78] sm:$0xf]
  %v189 = vld [vmem:[%s1 + $0x7c] sm:$0xf]
  %v222 = vunpack.c.l.b16 %v94
  %v223 = vunpack.c.h.b16 %v94
  %v224 = vunpack.c.l.b16 %v95
  %v225 = vunpack.c.h.b16 %v95
  %v226 = vunpack.c.l.b16 %v96
  %v227 = vunpack.c.h.b16 %v96
  %v228 = vunpack.c.l.b16 %v97
  %v229 = vunpack.c.h.b16 %v97
  %v230 = vunpack.c.l.b16 %v98
  %v231 = vunpack.c.h.b16 %v98
  %v232 = vunpack.c.l.b16 %v99
  %v233 = vunpack.c.h.b16 %v99
  %v234 = vunpack.c.l.b16 %v100
  %v235 = vunpack.c.h.b16 %v100
  %v236 = vunpack.c.l.b16 %v101
  %v237 = vunpack.c.h.b16 %v101
  %v238 = vunpack.c.l.b16 %v102
  %v239 = vunpack.c.h.b16 %v102
  %v240 = vunpack.c.l.b16 %v103
  %v241 = vunpack.c.h.b16 %v103
  %v242 = vunpack.c.l.b16 %v104
  %v243 = vunpack.c.h.b16 %v104
  %v244 = vunpack.c.l.b16 %v105
  %v245 = vunpack.c.h.b16 %v105
  %v246 = vunpack.c.l.b16 %v106
  %v247 = vunpack.c.h.b16 %v106
  %v248 = vunpack.c.l.b16 %v107
  %v249 = vunpack.c.h.b16 %v107
  %v250 = vunpack.c.l.b16 %v108
  %v251 = vunpack.c.h.b16 %v108
  %v252 = vunpack.c.l.b16 %v109
  %v253 = vunpack.c.h.b16 %v109
  %v254 = vunpack.c.l.b16 %v110
  %v255 = vunpack.c.h.b16 %v110
  %v256 = vunpack.c.l.b16 %v111
  %v257 = vunpack.c.h.b16 %v111
  %v258 = vunpack.c.l.b16 %v112
  %v259 = vunpack.c.h.b16 %v112
  %v260 = vunpack.c.l.b16 %v113
  %v261 = vunpack.c.h.b16 %v113
  %v262 = vunpack.c.l.b16 %v114
  %v263 = vunpack.c.h.b16 %v114
  %v264 = vunpack.c.l.b16 %v115
  %v265 = vunpack.c.h.b16 %v115
  %v266 = vunpack.c.l.b16 %v116
  %v267 = vunpack.c.h.b16 %v116
  %v268 = vunpack.c.l.b16 %v117
  %v269 = vunpack.c.h.b16 %v117
  %v270 = vunpack.c.l.b16 %v118
  %v271 = vunpack.c.h.b16 %v118
  %v272 = vunpack.c.l.b16 %v119
  %v273 = vunpack.c.h.b16 %v119
  %v274 = vunpack.c.l.b16 %v120
  %v275 = vunpack.c.h.b16 %v120
  %v276 = vunpack.c.l.b16 %v121
  %v277 = vunpack.c.h.b16 %v121
  %v278 = vunpack.c.l.b16 %v122
  %v279 = vunpack.c.h.b16 %v122
  %v280 = vunpack.c.l.b16 %v123
  %v281 = vunpack.c.h.b16 %v123
  %v282 = vunpack.c.l.b16 %v124
  %v283 = vunpack.c.h.b16 %v124
  %v284 = vunpack.c.l.b16 %v125
  %v285 = vunpack.c.h.b16 %v125
  %v286 = vpack.c.b16 %v224, %v222
  %v287 = vpack.c.b16 %v225, %v223
  %v288 = vpack.c.b16 %v228, %v226
  %v289 = vpack.c.b16 %v229, %v227
  %v290 = vpack.c.b16 %v232, %v230
  %v291 = vpack.c.b16 %v233, %v231
  %v292 = vpack.c.b16 %v236, %v234
  %v293 = vpack.c.b16 %v237, %v235
  %v294 = vpack.c.b16 %v240, %v238
  %v295 = vpack.c.b16 %v241, %v239
  %v296 = vpack.c.b16 %v244, %v242
  %v297 = vpack.c.b16 %v245, %v243
  %v298 = vpack.c.b16 %v248, %v246
  %v299 = vpack.c.b16 %v249, %v247
  %v300 = vpack.c.b16 %v252, %v250
  %v301 = vpack.c.b16 %v253, %v251
  %v302 = vpack.c.b16 %v256, %v254
  %v303 = vpack.c.b16 %v257, %v255
  %v304 = vpack.c.b16 %v260, %v258
  %v305 = vpack.c.b16 %v261, %v259
  %v306 = vpack.c.b16 %v264, %v262
  %v307 = vpack.c.b16 %v265, %v263
  %v308 = vpack.c.b16 %v268, %v266
  %v309 = vpack.c.b16 %v269, %v267
  %v310 = vpack.c.b16 %v272, %v270
  %v311 = vpack.c.b16 %v273, %v271
  %v312 = vpack.c.b16 %v276, %v274
  %v313 = vpack.c.b16 %v277, %v275
  %v314 = vpack.c.b16 %v280, %v278
  %v315 = vpack.c.b16 %v281, %v279
  %v316 = vpack.c.b16 %v284, %v282
  %v317 = vpack.c.b16 %v285, %v283
  %v382 = vunpack.c.l.b16 %v158
  %v383 = vunpack.c.l.b16 %v159
  %v384 = vunpack.c.l.b16 %v160
  %v385 = vunpack.c.l.b16 %v161
  %v386 = vunpack.c.l.b16 %v162
  %v387 = vunpack.c.l.b16 %v163
  %v388 = vunpack.c.l.b16 %v164
  %v389 = vunpack.c.l.b16 %v165
  %v390 = vunpack.c.l.b16 %v166
  %v391 = vunpack.c.l.b16 %v167
  %v392 = vunpack.c.l.b16 %v168
  %v393 = vunpack.c.l.b16 %v169
  %v394 = vunpack.c.l.b16 %v170
  %v395 = vunpack.c.l.b16 %v171
  %v396 = vunpack.c.l.b16 %v172
  %v397 = vunpack.c.l.b16 %v173
  %v398 = vunpack.c.l.b16 %v174
  %v399 = vunpack.c.l.b16 %v175
  %v400 = vunpack.c.l.b16 %v176
  %v401 = vunpack.c.l.b16 %v177
  %v402 = vunpack.c.l.b16 %v178
  %v403 = vunpack.c.l.b16 %v179
  %v404 = vunpack.c.l.b16 %v180
  %v405 = vunpack.c.l.b16 %v181
  %v406 = vunpack.c.l.b16 %v182
  %v407 = vunpack.c.l.b16 %v183
  %v408 = vunpack.c.l.b16 %v184
  %v409 = vunpack.c.l.b16 %v185
  %v410 = vunpack.c.l.b16 %v186
  %v411 = vunpack.c.l.b16 %v187
  %v412 = vunpack.c.l.b16 %v188
  %v413 = vunpack.c.l.b16 %v189
  %v414 = vpack.c.b16 %v383, %v382
  %v415 = vpack.c.b16 %v385, %v384
  %v416 = vpack.c.b16 %v387, %v386
  %v417 = vpack.c.b16 %v389, %v388
  %v418 = vpack.c.b16 %v391, %v390
  %v419 = vpack.c.b16 %v393, %v392
  %v420 = vpack.c.b16 %v395, %v394
  %v421 = vpack.c.b16 %v397, %v396
  %v422 = vpack.c.b16 %v399, %v398
  %v423 = vpack.c.b16 %v401, %v400
  %v424 = vpack.c.b16 %v403, %v402
  %v425 = vpack.c.b16 %v405, %v404
  %v426 = vpack.c.b16 %v407, %v406
  %v427 = vpack.c.b16 %v409, %v408
  %v428 = vpack.c.b16 %v411, %v410
  %v429 = vpack.c.b16 %v413, %v412
  %446 = vmatpush.bf16.msra.mxu0 %v421
  %447 = vmatpush.bf16.msra.mxu0 %v420
  %448 = vmatpush.bf16.msra.mxu0 %v419
  %449 = vmatpush.bf16.msra.mxu0 %v418
  %450 = vmatpush.bf16.msra.mxu0 %v417
  %451 = vmatpush.bf16.msra.mxu0 %v416
  %452 = vmatpush.bf16.msra.mxu0 %v415
  %453 = vmatpush.bf16.msra.mxu0 %v414
  %454 = vmatmul.bf16.gmra.mxu0 %v286
  %v455 = vpop.f32.mrf.mxu0
  %v456 = vadd.f32 0.0, %v455
  %v457 = vpop.f32.mrf.mxu0
  %v458 = vadd.f32 0.0, %v457
  %459 = vmatmul.bf16.gmra.mxu0 %v288
  %v460 = vpop.f32.mrf.mxu0
  %v461 = vadd.f32 0.0, %v460
  %v462 = vpop.f32.mrf.mxu0
  %v463 = vadd.f32 0.0, %v462
  %464 = vmatmul.bf16.gmra.mxu0 %v290
  %v465 = vpop.f32.mrf.mxu0
  %v466 = vadd.f32 0.0, %v465
  %v467 = vpop.f32.mrf.mxu0
  %v468 = vadd.f32 0.0, %v467
  %469 = vmatmul.bf16.gmra.mxu0 %v292
  %v470 = vpop.f32.mrf.mxu0
  %v471 = vadd.f32 0.0, %v470
  %v472 = vpop.f32.mrf.mxu0
  %v473 = vadd.f32 0.0, %v472
  %474 = vmatmul.bf16.gmra.mxu0 %v294
  %v475 = vpop.f32.mrf.mxu0
  %v476 = vadd.f32 0.0, %v475
  %v477 = vpop.f32.mrf.mxu0
  %v478 = vadd.f32 0.0, %v477
  %479 = vmatmul.bf16.gmra.mxu0 %v296
  %v480 = vpop.f32.mrf.mxu0
  %v481 = vadd.f32 0.0, %v480
  %v482 = vpop.f32.mrf.mxu0
  %v483 = vadd.f32 0.0, %v482
  %484 = vmatmul.bf16.gmra.mxu0 %v298
  %v485 = vpop.f32.mrf.mxu0
  %v486 = vadd.f32 0.0, %v485
  %v487 = vpop.f32.mrf.mxu0
  %v488 = vadd.f32 0.0, %v487
  %489 = vmatmul.bf16.gmra.mxu0 %v300
  %v490 = vpop.f32.mrf.mxu0
  %v491 = vadd.f32 0.0, %v490
  %v492 = vpop.f32.mrf.mxu0
  %v493 = vadd.f32 0.0, %v492
  %494 = vmatmul.bf16.gmra.mxu0 %v302
  %v495 = vpop.f32.mrf.mxu0
  %v496 = vadd.f32 0.0, %v495
  %v497 = vpop.f32.mrf.mxu0
  %v498 = vadd.f32 0.0, %v497
  %499 = vmatmul.bf16.gmra.mxu0 %v304
  %v500 = vpop.f32.mrf.mxu0
  %v501 = vadd.f32 0.0, %v500
  %v502 = vpop.f32.mrf.mxu0
  %v503 = vadd.f32 0.0, %v502
  %504 = vmatmul.bf16.gmra.mxu0 %v306
  %v505 = vpop.f32.mrf.mxu0
  %v506 = vadd.f32 0.0, %v505
  %v507 = vpop.f32.mrf.mxu0
  %v508 = vadd.f32 0.0, %v507
  %509 = vmatmul.bf16.gmra.mxu0 %v308
  %v510 = vpop.f32.mrf.mxu0
  %v511 = vadd.f32 0.0, %v510
  %v512 = vpop.f32.mrf.mxu0
  %v513 = vadd.f32 0.0, %v512
  %514 = vmatmul.bf16.gmra.mxu0 %v310
  %v515 = vpop.f32.mrf.mxu0
  %v516 = vadd.f32 0.0, %v515
  %v517 = vpop.f32.mrf.mxu0
  %v518 = vadd.f32 0.0, %v517
  %519 = vmatmul.bf16.gmra.mxu0 %v312
  %v520 = vpop.f32.mrf.mxu0
  %v521 = vadd.f32 0.0, %v520
  %v522 = vpop.f32.mrf.mxu0
  %v523 = vadd.f32 0.0, %v522
  %524 = vmatmul.bf16.gmra.mxu0 %v314
  %v525 = vpop.f32.mrf.mxu0
  %v526 = vadd.f32 0.0, %v525
  %v527 = vpop.f32.mrf.mxu0
  %v528 = vadd.f32 0.0, %v527
  %529 = vmatmul.bf16.gmra.mxu0 %v316
  %v530 = vpop.f32.mrf.mxu0
  %v531 = vadd.f32 0.0, %v530
  %v532 = vpop.f32.mrf.mxu0
  %v533 = vadd.f32 0.0, %v532
  %534 = vdwg.mxu0
  %535 = vmatpush.bf16.msra.mxu0 %v429
  %536 = vmatpush.bf16.msra.mxu0 %v428
  %537 = vmatpush.bf16.msra.mxu0 %v427
  %538 = vmatpush.bf16.msra.mxu0 %v426
  %539 = vmatpush.bf16.msra.mxu0 %v425
  %540 = vmatpush.bf16.msra.mxu0 %v424
  %541 = vmatpush.bf16.msra.mxu0 %v423
  %542 = vmatpush.bf16.msra.mxu0 %v422
  %543 = vmatmul.bf16.gmra.mxu0 %v287
  %v544 = vpop.f32.mrf.mxu0
  %v545 = vadd.f32 %v456, %v544
  %v546 = vpop.f32.mrf.mxu0
  %v547 = vadd.f32 %v458, %v546
  %548 = vmatmul.bf16.gmra.mxu0 %v289
  %v549 = vpop.f32.mrf.mxu0
  %v550 = vadd.f32 %v461, %v549
  %v551 = vpop.f32.mrf.mxu0
  %v552 = vadd.f32 %v463, %v551
  %553 = vmatmul.bf16.gmra.mxu0 %v291
  %v554 = vpop.f32.mrf.mxu0
  %v555 = vadd.f32 %v466, %v554
  %v556 = vpop.f32.mrf.mxu0
  %v557 = vadd.f32 %v468, %v556
  %558 = vmatmul.bf16.gmra.mxu0 %v293
  %v559 = vpop.f32.mrf.mxu0
  %v560 = vadd.f32 %v471, %v559
  %v561 = vpop.f32.mrf.mxu0
  %v562 = vadd.f32 %v473, %v561
  %563 = vmatmul.bf16.gmra.mxu0 %v295
  %v564 = vpop.f32.mrf.mxu0
  %v565 = vadd.f32 %v476, %v564
  %v566 = vpop.f32.mrf.mxu0
  %v567 = vadd.f32 %v478, %v566
  %568 = vmatmul.bf16.gmra.mxu0 %v297
  %v569 = vpop.f32.mrf.mxu0
  %v570 = vadd.f32 %v481, %v569
  %v571 = vpop.f32.mrf.mxu0
  %v572 = vadd.f32 %v483, %v571
  %573 = vmatmul.bf16.gmra.mxu0 %v299
  %v574 = vpop.f32.mrf.mxu0
  %v575 = vadd.f32 %v486, %v574
  %v576 = vpop.f32.mrf.mxu0
  %v577 = vadd.f32 %v488, %v576
  %578 = vmatmul.bf16.gmra.mxu0 %v301
  %v579 = vpop.f32.mrf.mxu0
  %v580 = vadd.f32 %v491, %v579
  %v581 = vpop.f32.mrf.mxu0
  %v582 = vadd.f32 %v493, %v581
  %583 = vmatmul.bf16.gmra.mxu0 %v303
  %v584 = vpop.f32.mrf.mxu0
  %v585 = vadd.f32 %v496, %v584
  %v586 = vpop.f32.mrf.mxu0
  %v587 = vadd.f32 %v498, %v586
  %588 = vmatmul.bf16.gmra.mxu0 %v305
  %v589 = vpop.f32.mrf.mxu0
  %v590 = vadd.f32 %v501, %v589
  %v591 = vpop.f32.mrf.mxu0
  %v592 = vadd.f32 %v503, %v591
  %593 = vmatmul.bf16.gmra.mxu0 %v307
  %v594 = vpop.f32.mrf.mxu0
  %v595 = vadd.f32 %v506, %v594
  %v596 = vpop.f32.mrf.mxu0
  %v597 = vadd.f32 %v508, %v596
  %598 = vmatmul.bf16.gmra.mxu0 %v309
  %v599 = vpop.f32.mrf.mxu0
  %v600 = vadd.f32 %v511, %v599
  %v601 = vpop.f32.mrf.mxu0
  %v602 = vadd.f32 %v513, %v601
  %603 = vmatmul.bf16.gmra.mxu0 %v311
  %v604 = vpop.f32.mrf.mxu0
  %v605 = vadd.f32 %v516, %v604
  %v606 = vpop.f32.mrf.mxu0
  %v607 = vadd.f32 %v518, %v606
  %608 = vmatmul.bf16.gmra.mxu0 %v313
  %v609 = vpop.f32.mrf.mxu0
  %v610 = vadd.f32 %v521, %v609
  %v611 = vpop.f32.mrf.mxu0
  %v612 = vadd.f32 %v523, %v611
  %613 = vmatmul.bf16.gmra.mxu0 %v315
  %v614 = vpop.f32.mrf.mxu0
  %v615 = vadd.f32 %v526, %v614
  %v616 = vpop.f32.mrf.mxu0
  %v617 = vadd.f32 %v528, %v616
  %618 = vmatmul.bf16.gmra.mxu0 %v317
  %v619 = vpop.f32.mrf.mxu0
  %v620 = vadd.f32 %v531, %v619
  %v621 = vpop.f32.mrf.mxu0
  %v622 = vadd.f32 %v533, %v621
  %623 = vdwg.mxu0
  %v624 = vadd.f32 %v126, %v545
  %v625 = vadd.f32 %v127, %v547
  %v626 = vadd.f32 %v128, %v550
  %v627 = vadd.f32 %v129, %v552
  %v628 = vadd.f32 %v130, %v555
  %v629 = vadd.f32 %v131, %v557
  %v630 = vadd.f32 %v132, %v560
  %v631 = vadd.f32 %v133, %v562
  %v632 = vadd.f32 %v134, %v565
  %v633 = vadd.f32 %v135, %v567
  %v634 = vadd.f32 %v136, %v570
  %v635 = vadd.f32 %v137, %v572
  %v636 = vadd.f32 %v138, %v575
  %v637 = vadd.f32 %v139, %v577
  %v638 = vadd.f32 %v140, %v580
  %v639 = vadd.f32 %v141, %v582
  %v640 = vadd.f32 %v142, %v585
  %v641 = vadd.f32 %v143, %v587
  %v642 = vadd.f32 %v144, %v590
  %v643 = vadd.f32 %v145, %v592
  %v644 = vadd.f32 %v146, %v595
  %v645 = vadd.f32 %v147, %v597
  %v646 = vadd.f32 %v148, %v600
  %v647 = vadd.f32 %v149, %v602
  %v648 = vadd.f32 %v150, %v605
  %v649 = vadd.f32 %v151, %v607
  %v650 = vadd.f32 %v152, %v610
  %v651 = vadd.f32 %v153, %v612
  %v652 = vadd.f32 %v154, %v615
  %v653 = vadd.f32 %v155, %v617
  %v654 = vadd.f32 %v156, %v620
  %v655 = vadd.f32 %v157, %v622
  %656 = vst [vmem:[#allocation2] sm:$0xff] %v624
  %657 = vst [vmem:[#allocation2 + $0x8] sm:$0xff] %v625
  %658 = vst [vmem:[#allocation2 + $0x10] sm:$0xff] %v626
  %659 = vst [vmem:[#allocation2 + $0x18] sm:$0xff] %v627
  %660 = vst [vmem:[#allocation2 + $0x20] sm:$0xff] %v628
  %661 = vst [vmem:[#allocation2 + $0x28] sm:$0xff] %v629
  %662 = vst [vmem:[#allocation2 + $0x30] sm:$0xff] %v630
  %663 = vst [vmem:[#allocation2 + $0x38] sm:$0xff] %v631
  %664 = vst [vmem:[#allocation2 + $0x40] sm:$0xff] %v632
  %665 = vst [vmem:[#allocation2 + $0x48] sm:$0xff] %v633
  %666 = vst [vmem:[#allocation2 + $0x50] sm:$0xff] %v634
  %667 = vst [vmem:[#allocation2 + $0x58] sm:$0xff] %v635
  %668 = vst [vmem:[#allocation2 + $0x60] sm:$0xff] %v636
  %669 = vst [vmem:[#allocation2 + $0x68] sm:$0xff] %v637
  %670 = vst [vmem:[#allocation2 + $0x70] sm:$0xff] %v638
  %671 = vst [vmem:[#allocation2 + $0x78] sm:$0xff] %v639
  %672 = vst [vmem:[#allocation2 + $0x80] sm:$0xff] %v640
  %673 = vst [vmem:[#allocation2 + $0x88] sm:$0xff] %v641
  %674 = vst [vmem:[#allocation2 + $0x90] sm:$0xff] %v642
  %675 = vst [vmem:[#allocation2 + $0x98] sm:$0xff] %v643
  %676 = vst [vmem:[#allocation2 + $0xa0] sm:$0xff] %v644
  %677 = vst [vmem:[#allocation2 + $0xa8] sm:$0xff] %v645
  %678 = vst [vmem:[#allocation2 + $0xb0] sm:$0xff] %v646
  %679 = vst [vmem:[#allocation2 + $0xb8] sm:$0xff] %v647
  %680 = vst [vmem:[#allocation2 + $0xc0] sm:$0xff] %v648
  %681 = vst [vmem:[#allocation2 + $0xc8] sm:$0xff] %v649
  %682 = vst [vmem:[#allocation2 + $0xd0] sm:$0xff] %v650
  %683 = vst [vmem:[#allocation2 + $0xd8] sm:$0xff] %v651
  %684 = vst [vmem:[#allocation2 + $0xe0] sm:$0xff] %v652
  %685 = vst [vmem:[#allocation2 + $0xe8] sm:$0xff] %v653
  %686 = vst [vmem:[#allocation2 + $0xf0] sm:$0xff] %v654
  %687 = vst [vmem:[#allocation2 + $0xf8] sm:$0xff] %v655
  %s688 = scalar_lea.vmem [#allocation2], 256
  %v689 = vld [vmem:[%s688] sm:$0xff]
  %v690 = vld [vmem:[%s688 + $0x8] sm:$0xff]
  %v691 = vld [vmem:[%s688 + $0x10] sm:$0xff]
  %v692 = vld [vmem:[%s688 + $0x18] sm:$0xff]
  %v693 = vld [vmem:[%s688 + $0x20] sm:$0xff]
  %v694 = vld [vmem:[%s688 + $0x28] sm:$0xff]
  %v695 = vld [vmem:[%s688 + $0x30] sm:$0xff]
  %v696 = vld [vmem:[%s688 + $0x38] sm:$0xff]
  %v697 = vld [vmem:[%s688 + $0x40] sm:$0xff]
  %v698 = vld [vmem:[%s688 + $0x48] sm:$0xff]
  %v699 = vld [vmem:[%s688 + $0x50] sm:$0xff]
  %v700 = vld [vmem:[%s688 + $0x58] sm:$0xff]
  %v701 = vld [vmem:[%s688 + $0x60] sm:$0xff]
  %v702 = vld [vmem:[%s688 + $0x68] sm:$0xff]
  %v703 = vld [vmem:[%s688 + $0x70] sm:$0xff]
  %v704 = vld [vmem:[%s688 + $0x78] sm:$0xff]
  %v705 = vld [vmem:[%s688 + $0x80] sm:$0xff]
  %v706 = vld [vmem:[%s688 + $0x88] sm:$0xff]
  %v707 = vld [vmem:[%s688 + $0x90] sm:$0xff]
  %v708 = vld [vmem:[%s688 + $0x98] sm:$0xff]
  %v709 = vld [vmem:[%s688 + $0xa0] sm:$0xff]
  %v710 = vld [vmem:[%s688 + $0xa8] sm:$0xff]
  %v711 = vld [vmem:[%s688 + $0xb0] sm:$0xff]
  %v712 = vld [vmem:[%s688 + $0xb8] sm:$0xff]
  %v713 = vld [vmem:[%s688 + $0xc0] sm:$0xff]
  %v714 = vld [vmem:[%s688 + $0xc8] sm:$0xff]
  %v715 = vld [vmem:[%s688 + $0xd0] sm:$0xff]
  %v716 = vld [vmem:[%s688 + $0xd8] sm:$0xff]
  %v717 = vld [vmem:[%s688 + $0xe0] sm:$0xff]
  %v718 = vld [vmem:[%s688 + $0xe8] sm:$0xff]
  %v719 = vld [vmem:[%s688 + $0xf0] sm:$0xff]
  %v720 = vld [vmem:[%s688 + $0xf8] sm:$0xff]
  %s721 = scalar_lea.vmem %s1, 128
  %v722 = vld [vmem:[%s721] sm:$0xf]
  %v723 = vld [vmem:[%s721 + $0x4] sm:$0xf]
  %v724 = vld [vmem:[%s721 + $0x8] sm:$0xf]
  %v725 = vld [vmem:[%s721 + $0xc] sm:$0xf]
  %v726 = vld [vmem:[%s721 + $0x10] sm:$0xf]
  %v727 = vld [vmem:[%s721 + $0x14] sm:$0xf]
  %v728 = vld [vmem:[%s721 + $0x18] sm:$0xf]
  %v729 = vld [vmem:[%s721 + $0x1c] sm:$0xf]
  %v730 = vld [vmem:[%s721 + $0x20] sm:$0xf]
  %v731 = vld [vmem:[%s721 + $0x24] sm:$0xf]
  %v732 = vld [vmem:[%s721 + $0x28] sm:$0xf]
  %v733 = vld [vmem:[%s721 + $0x2c] sm:$0xf]
  %v734 = vld [vmem:[%s721 + $0x30] sm:$0xf]
  %v735 = vld [vmem:[%s721 + $0x34] sm:$0xf]
  %v736 = vld [vmem:[%s721 + $0x38] sm:$0xf]
  %v737 = vld [vmem:[%s721 + $0x3c] sm:$0xf]
  %v738 = vld [vmem:[%s721 + $0x40] sm:$0xf]
  %v739 = vld [vmem:[%s721 + $0x44] sm:$0xf]
  %v740 = vld [vmem:[%s721 + $0x48] sm:$0xf]
  %v741 = vld [vmem:[%s721 + $0x4c] sm:$0xf]
  %v742 = vld [vmem:[%s721 + $0x50] sm:$0xf]
  %v743 = vld [vmem:[%s721 + $0x54] sm:$0xf]
  %v744 = vld [vmem:[%s721 + $0x58] sm:$0xf]
  %v745 = vld [vmem:[%s721 + $0x5c] sm:$0xf]
  %v746 = vld [vmem:[%s721 + $0x60] sm:$0xf]
  %v747 = vld [vmem:[%s721 + $0x64] sm:$0xf]
  %v748 = vld [vmem:[%s721 + $0x68] sm:$0xf]
  %v749 = vld [vmem:[%s721 + $0x6c] sm:$0xf]
  %v750 = vld [vmem:[%s721 + $0x70] sm:$0xf]
  %v751 = vld [vmem:[%s721 + $0x74] sm:$0xf]
  %v752 = vld [vmem:[%s721 + $0x78] sm:$0xf]
  %v753 = vld [vmem:[%s721 + $0x7c] sm:$0xf]
  %v786 = vunpack.c.l.b16 %v722
  %v787 = vunpack.c.l.b16 %v723
  %v788 = vunpack.c.l.b16 %v724
  %v789 = vunpack.c.l.b16 %v725
  %v790 = vunpack.c.l.b16 %v726
  %v791 = vunpack.c.l.b16 %v727
  %v792 = vunpack.c.l.b16 %v728
  %v793 = vunpack.c.l.b16 %v729
  %v794 = vunpack.c.l.b16 %v730
  %v795 = vunpack.c.l.b16 %v731
  %v796 = vunpack.c.l.b16 %v732
  %v797 = vunpack.c.l.b16 %v733
  %v798 = vunpack.c.l.b16 %v734
  %v799 = vunpack.c.l.b16 %v735
  %v800 = vunpack.c.l.b16 %v736
  %v801 = vunpack.c.l.b16 %v737
  %v802 = vunpack.c.l.b16 %v738
  %v803 = vunpack.c.l.b16 %v739
  %v804 = vunpack.c.l.b16 %v740
  %v805 = vunpack.c.l.b16 %v741
  %v806 = vunpack.c.l.b16 %v742
  %v807 = vunpack.c.l.b16 %v743
  %v808 = vunpack.c.l.b16 %v744
  %v809 = vunpack.c.l.b16 %v745
  %v810 = vunpack.c.l.b16 %v746
  %v811 = vunpack.c.l.b16 %v747
  %v812 = vunpack.c.l.b16 %v748
  %v813 = vunpack.c.l.b16 %v749
  %v814 = vunpack.c.l.b16 %v750
  %v815 = vunpack.c.l.b16 %v751
  %v816 = vunpack.c.l.b16 %v752
  %v817 = vunpack.c.l.b16 %v753
  %v818 = vpack.c.b16 %v787, %v786
  %v819 = vpack.c.b16 %v789, %v788
  %v820 = vpack.c.b16 %v791, %v790
  %v821 = vpack.c.b16 %v793, %v792
  %v822 = vpack.c.b16 %v795, %v794
  %v823 = vpack.c.b16 %v797, %v796
  %v824 = vpack.c.b16 %v799, %v798
  %v825 = vpack.c.b16 %v801, %v800
  %v826 = vpack.c.b16 %v803, %v802
  %v827 = vpack.c.b16 %v805, %v804
  %v828 = vpack.c.b16 %v807, %v806
  %v829 = vpack.c.b16 %v809, %v808
  %v830 = vpack.c.b16 %v811, %v810
  %v831 = vpack.c.b16 %v813, %v812
  %v832 = vpack.c.b16 %v815, %v814
  %v833 = vpack.c.b16 %v817, %v816
  %850 = vmatpush.bf16.msra.mxu0 %v825
  %851 = vmatpush.bf16.msra.mxu0 %v824
  %852 = vmatpush.bf16.msra.mxu0 %v823
  %853 = vmatpush.bf16.msra.mxu0 %v822
  %854 = vmatpush.bf16.msra.mxu0 %v821
  %855 = vmatpush.bf16.msra.mxu0 %v820
  %856 = vmatpush.bf16.msra.mxu0 %v819
  %857 = vmatpush.bf16.msra.mxu0 %v818
  %858 = vmatmul.bf16.gmra.mxu0 %v286
  %v859 = vpop.f32.mrf.mxu0
  %v860 = vadd.f32 0.0, %v859
  %v861 = vpop.f32.mrf.mxu0
  %v862 = vadd.f32 0.0, %v861
  %863 = vmatmul.bf16.gmra.mxu0 %v288
  %v864 = vpop.f32.mrf.mxu0
  %v865 = vadd.f32 0.0, %v864
  %v866 = vpop.f32.mrf.mxu0
  %v867 = vadd.f32 0.0, %v866
  %868 = vmatmul.bf16.gmra.mxu0 %v290
  %v869 = vpop.f32.mrf.mxu0
  %v870 = vadd.f32 0.0, %v869
  %v871 = vpop.f32.mrf.mxu0
  %v872 = vadd.f32 0.0, %v871
  %873 = vmatmul.bf16.gmra.mxu0 %v292
  %v874 = vpop.f32.mrf.mxu0
  %v875 = vadd.f32 0.0, %v874
  %v876 = vpop.f32.mrf.mxu0
  %v877 = vadd.f32 0.0, %v876
  %878 = vmatmul.bf16.gmra.mxu0 %v294
  %v879 = vpop.f32.mrf.mxu0
  %v880 = vadd.f32 0.0, %v879
  %v881 = vpop.f32.mrf.mxu0
  %v882 = vadd.f32 0.0, %v881
  %883 = vmatmul.bf16.gmra.mxu0 %v296
  %v884 = vpop.f32.mrf.mxu0
  %v885 = vadd.f32 0.0, %v884
  %v886 = vpop.f32.mrf.mxu0
  %v887 = vadd.f32 0.0, %v886
  %888 = vmatmul.bf16.gmra.mxu0 %v298
  %v889 = vpop.f32.mrf.mxu0
  %v890 = vadd.f32 0.0, %v889
  %v891 = vpop.f32.mrf.mxu0
  %v892 = vadd.f32 0.0, %v891
  %893 = vmatmul.bf16.gmra.mxu0 %v300
  %v894 = vpop.f32.mrf.mxu0
  %v895 = vadd.f32 0.0, %v894
  %v896 = vpop.f32.mrf.mxu0
  %v897 = vadd.f32 0.0, %v896
  %898 = vmatmul.bf16.gmra.mxu0 %v302
  %v899 = vpop.f32.mrf.mxu0
  %v900 = vadd.f32 0.0, %v899
  %v901 = vpop.f32.mrf.mxu0
  %v902 = vadd.f32 0.0, %v901
  %903 = vmatmul.bf16.gmra.mxu0 %v304
  %v904 = vpop.f32.mrf.mxu0
  %v905 = vadd.f32 0.0, %v904
  %v906 = vpop.f32.mrf.mxu0
  %v907 = vadd.f32 0.0, %v906
  %908 = vmatmul.bf16.gmra.mxu0 %v306
  %v909 = vpop.f32.mrf.mxu0
  %v910 = vadd.f32 0.0, %v909
  %v911 = vpop.f32.mrf.mxu0
  %v912 = vadd.f32 0.0, %v911
  %913 = vmatmul.bf16.gmra.mxu0 %v308
  %v914 = vpop.f32.mrf.mxu0
  %v915 = vadd.f32 0.0, %v914
  %v916 = vpop.f32.mrf.mxu0
  %v917 = vadd.f32 0.0, %v916
  %918 = vmatmul.bf16.gmra.mxu0 %v310
  %v919 = vpop.f32.mrf.mxu0
  %v920 = vadd.f32 0.0, %v919
  %v921 = vpop.f32.mrf.mxu0
  %v922 = vadd.f32 0.0, %v921
  %923 = vmatmul.bf16.gmra.mxu0 %v312
  %v924 = vpop.f32.mrf.mxu0
  %v925 = vadd.f32 0.0, %v924
  %v926 = vpop.f32.mrf.mxu0
  %v927 = vadd.f32 0.0, %v926
  %928 = vmatmul.bf16.gmra.mxu0 %v314
  %v929 = vpop.f32.mrf.mxu0
  %v930 = vadd.f32 0.0, %v929
  %v931 = vpop.f32.mrf.mxu0
  %v932 = vadd.f32 0.0, %v931
  %933 = vmatmul.bf16.gmra.mxu0 %v316
  %v934 = vpop.f32.mrf.mxu0
  %v935 = vadd.f32 0.0, %v934
  %v936 = vpop.f32.mrf.mxu0
  %v937 = vadd.f32 0.0, %v936
  %938 = vdwg.mxu0
  %939 = vmatpush.bf16.msra.mxu0 %v833
  %940 = vmatpush.bf16.msra.mxu0 %v832
  %941 = vmatpush.bf16.msra.mxu0 %v831
  %942 = vmatpush.bf16.msra.mxu0 %v830
  %943 = vmatpush.bf16.msra.mxu0 %v829
  %944 = vmatpush.bf16.msra.mxu0 %v828
  %945 = vmatpush.bf16.msra.mxu0 %v827
  %946 = vmatpush.bf16.msra.mxu0 %v826
  %947 = vmatmul.bf16.gmra.mxu0 %v287
  %v948 = vpop.f32.mrf.mxu0
  %v949 = vadd.f32 %v860, %v948
  %v950 = vpop.f32.mrf.mxu0
  %v951 = vadd.f32 %v862, %v950
  %952 = vmatmul.bf16.gmra.mxu0 %v289
  %v953 = vpop.f32.mrf.mxu0
  %v954 = vadd.f32 %v865, %v953
  %v955 = vpop.f32.mrf.mxu0
  %v956 = vadd.f32 %v867, %v955
  %957 = vmatmul.bf16.gmra.mxu0 %v291
  %v958 = vpop.f32.mrf.mxu0
  %v959 = vadd.f32 %v870, %v958
  %v960 = vpop.f32.mrf.mxu0
  %v961 = vadd.f32 %v872, %v960
  %962 = vmatmul.bf16.gmra.mxu0 %v293
  %v963 = vpop.f32.mrf.mxu0
  %v964 = vadd.f32 %v875, %v963
  %v965 = vpop.f32.mrf.mxu0
  %v966 = vadd.f32 %v877, %v965
  %967 = vmatmul.bf16.gmra.mxu0 %v295
  %v968 = vpop.f32.mrf.mxu0
  %v969 = vadd.f32 %v880, %v968
  %v970 = vpop.f32.mrf.mxu0
  %v971 = vadd.f32 %v882, %v970
  %972 = vmatmul.bf16.gmra.mxu0 %v297
  %v973 = vpop.f32.mrf.mxu0
  %v974 = vadd.f32 %v885, %v973
  %v975 = vpop.f32.mrf.mxu0
  %v976 = vadd.f32 %v887, %v975
  %977 = vmatmul.bf16.gmra.mxu0 %v299
  %v978 = vpop.f32.mrf.mxu0
  %v979 = vadd.f32 %v890, %v978
  %v980 = vpop.f32.mrf.mxu0
  %v981 = vadd.f32 %v892, %v980
  %982 = vmatmul.bf16.gmra.mxu0 %v301
  %v983 = vpop.f32.mrf.mxu0
  %v984 = vadd.f32 %v895, %v983
  %v985 = vpop.f32.mrf.mxu0
  %v986 = vadd.f32 %v897, %v985
  %987 = vmatmul.bf16.gmra.mxu0 %v303
  %v988 = vpop.f32.mrf.mxu0
  %v989 = vadd.f32 %v900, %v988
  %v990 = vpop.f32.mrf.mxu0
  %v991 = vadd.f32 %v902, %v990
  %992 = vmatmul.bf16.gmra.mxu0 %v305
  %v993 = vpop.f32.mrf.mxu0
  %v994 = vadd.f32 %v905, %v993
  %v995 = vpop.f32.mrf.mxu0
  %v996 = vadd.f32 %v907, %v995
  %997 = vmatmul.bf16.gmra.mxu0 %v307
  %v998 = vpop.f32.mrf.mxu0
  %v999 = vadd.f32 %v910, %v998
  %v1000 = vpop.f32.mrf.mxu0
  %v1001 = vadd.f32 %v912, %v1000
  %1002 = vmatmul.bf16.gmra.mxu0 %v309
  %v1003 = vpop.f32.mrf.mxu0
  %v1004 = vadd.f32 %v915, %v1003
  %v1005 = vpop.f32.mrf.mxu0
  %v1006 = vadd.f32 %v917, %v1005
  %1007 = vmatmul.bf16.gmra.mxu0 %v311
  %v1008 = vpop.f32.mrf.mxu0
  %v1009 = vadd.f32 %v920, %v1008
  %v1010 = vpop.f32.mrf.mxu0
  %v1011 = vadd.f32 %v922, %v1010
  %1012 = vmatmul.bf16.gmra.mxu0 %v313
  %v1013 = vpop.f32.mrf.mxu0
  %v1014 = vadd.f32 %v925, %v1013
  %v1015 = vpop.f32.mrf.mxu0
  %v1016 = vadd.f32 %v927, %v1015
  %1017 = vmatmul.bf16.gmra.mxu0 %v315
  %v1018 = vpop.f32.mrf.mxu0
  %v1019 = vadd.f32 %v930, %v1018
  %v1020 = vpop.f32.mrf.mxu0
  %v1021 = vadd.f32 %v932, %v1020
  %1022 = vmatmul.bf16.gmra.mxu0 %v317
  %v1023 = vpop.f32.mrf.mxu0
  %v1024 = vadd.f32 %v935, %v1023
  %v1025 = vpop.f32.mrf.mxu0
  %v1026 = vadd.f32 %v937, %v1025
  %1027 = vdwg.mxu0
  %v1028 = vadd.f32 %v689, %v949
  %v1029 = vadd.f32 %v690, %v951
  %v1030 = vadd.f32 %v691, %v954
  %v1031 = vadd.f32 %v692, %v956
  %v1032 = vadd.f32 %v693, %v959
  %v1033 = vadd.f32 %v694, %v961
  %v1034 = vadd.f32 %v695, %v964
  %v1035 = vadd.f32 %v696, %v966
  %v1036 = vadd.f32 %v697, %v969
  %v1037 = vadd.f32 %v698, %v971
  %v1038 = vadd.f32 %v699, %v974
  %v1039 = vadd.f32 %v700, %v976
  %v1040 = vadd.f32 %v701, %v979
  %v1041 = vadd.f32 %v702, %v981
  %v1042 = vadd.f32 %v703, %v984
  %v1043 = vadd.f32 %v704, %v986
  %v1044 = vadd.f32 %v705, %v989
  %v1045 = vadd.f32 %v706, %v991
  %v1046 = vadd.f32 %v707, %v994
  %v1047 = vadd.f32 %v708, %v996
  %v1048 = vadd.f32 %v709, %v999
  %v1049 = vadd.f32 %v710, %v1001
  %v1050 = vadd.f32 %v711, %v1004
  %v1051 = vadd.f32 %v712, %v1006
  %v1052 = vadd.f32 %v713, %v1009
  %v1053 = vadd.f32 %v714, %v1011
  %v1054 = vadd.f32 %v715, %v1014
  %v1055 = vadd.f32 %v716, %v1016
  %v1056 = vadd.f32 %v717, %v1019
  %v1057 = vadd.f32 %v718, %v1021
  %v1058 = vadd.f32 %v719, %v1024
  %v1059 = vadd.f32 %v720, %v1026
  %1060 = vst [vmem:[%s688] sm:$0xff] %v1028
  %1061 = vst [vmem:[%s688 + $0x8] sm:$0xff] %v1029
  %1062 = vst [vmem:[%s688 + $0x10] sm:$0xff] %v1030
  %1063 = vst [vmem:[%s688 + $0x18] sm:$0xff] %v1031
  %1064 = vst [vmem:[%s688 + $0x20] sm:$0xff] %v1032
  %1065 = vst [vmem:[%s688 + $0x28] sm:$0xff] %v1033
  %1066 = vst [vmem:[%s688 + $0x30] sm:$0xff] %v1034
  %1067 = vst [vmem:[%s688 + $0x38] sm:$0xff] %v1035
  %1068 = vst [vmem:[%s688 + $0x40] sm:$0xff] %v1036
  %1069 = vst [vmem:[%s688 + $0x48] sm:$0xff] %v1037
  %1070 = vst [vmem:[%s688 + $0x50] sm:$0xff] %v1038
  %1071 = vst [vmem:[%s688 + $0x58] sm:$0xff] %v1039
  %1072 = vst [vmem:[%s688 + $0x60] sm:$0xff] %v1040
  %1073 = vst [vmem:[%s688 + $0x68] sm:$0xff] %v1041
  %1074 = vst [vmem:[%s688 + $0x70] sm:$0xff] %v1042
  %1075 = vst [vmem:[%s688 + $0x78] sm:$0xff] %v1043
  %1076 = vst [vmem:[%s688 + $0x80] sm:$0xff] %v1044
  %1077 = vst [vmem:[%s688 + $0x88] sm:$0xff] %v1045
  %1078 = vst [vmem:[%s688 + $0x90] sm:$0xff] %v1046
  %1079 = vst [vmem:[%s688 + $0x98] sm:$0xff] %v1047
  %1080 = vst [vmem:[%s688 + $0xa0] sm:$0xff] %v1048
  %1081 = vst [vmem:[%s688 + $0xa8] sm:$0xff] %v1049
  %1082 = vst [vmem:[%s688 + $0xb0] sm:$0xff] %v1050
  %1083 = vst [vmem:[%s688 + $0xb8] sm:$0xff] %v1051
  %1084 = vst [vmem:[%s688 + $0xc0] sm:$0xff] %v1052
  %1085 = vst [vmem:[%s688 + $0xc8] sm:$0xff] %v1053
  %1086 = vst [vmem:[%s688 + $0xd0] sm:$0xff] %v1054
  %1087 = vst [vmem:[%s688 + $0xd8] sm:$0xff] %v1055
  %1088 = vst [vmem:[%s688 + $0xe0] sm:$0xff] %v1056
  %1089 = vst [vmem:[%s688 + $0xe8] sm:$0xff] %v1057
  %1090 = vst [vmem:[%s688 + $0xf0] sm:$0xff] %v1058
  %1091 = vst [vmem:[%s688 + $0xf8] sm:$0xff] %v1059
  // Predicated region
  $region34: #{student_graphpred_forward.3} parent=0 // pred_check
    %p1092 = pneg %p26
  $region35: #{student_graphpred_forward.3} parent=0 // pred_check_branch
    %1094 = sbr.rel (%p1092) target = $region37
  $region36: #{student_graphpred_forward.3} parent=0 // pred_region
    %v1095 = vld [vmem:[#allocation2] sm:$0xff]
    %v1096 = vld [vmem:[#allocation2 + $0x8] sm:$0xff]
    %v1097 = vld [vmem:[#allocation2 + $0x10] sm:$0xff]
    %v1098 = vld [vmem:[#allocation2 + $0x18] sm:$0xff]
    %v1099 = vld [vmem:[#allocation2 + $0x20] sm:$0xff]
    %v1100 = vld [vmem:[#allocation2 + $0x28] sm:$0xff]
    %v1101 = vld [vmem:[#allocation2 + $0x30] sm:$0xff]
    %v1102 = vld [vmem:[#allocation2 + $0x38] sm:$0xff]
    %v1103 = vld [vmem:[#allocation2 + $0x40] sm:$0xff]
    %v1104 = vld [vmem:[#allocation2 + $0x48] sm:$0xff]
    %v1105 = vld [vmem:[#allocation2 + $0x50] sm:$0xff]
    %v1106 = vld [vmem:[#allocation2 + $0x58] sm:$0xff]
    %v1107 = vld [vmem:[#allocation2 + $0x60] sm:$0xff]
    %v1108 = vld [vmem:[#allocation2 + $0x68] sm:$0xff]
    %v1109 = vld [vmem:[#allocation2 + $0x70] sm:$0xff]
    %v1110 = vld [vmem:[#allocation2 + $0x78] sm:$0xff]
    %v1111 = vld [vmem:[#allocation2 + $0x80] sm:$0xff]
    %v1112 = vld [vmem:[#allocation2 + $0x88] sm:$0xff]
    %v1113 = vld [vmem:[#allocation2 + $0x90] sm:$0xff]
    %v1114 = vld [vmem:[#allocation2 + $0x98] sm:$0xff]
    %v1115 = vld [vmem:[#allocation2 + $0xa0] sm:$0xff]
    %v1116 = vld [vmem:[#allocation2 + $0xa8] sm:$0xff]
    %v1117 = vld [vmem:[#allocation2 + $0xb0] sm:$0xff]
    %v1118 = vld [vmem:[#allocation2 + $0xb8] sm:$0xff]
    %v1119 = vld [vmem:[#allocation2 + $0xc0] sm:$0xff]
    %v1120 = vld [vmem:[#allocation2 + $0xc8] sm:$0xff]
    %v1121 = vld [vmem:[#allocation2 + $0xd0] sm:$0xff]
    %v1122 = vld [vmem:[#allocation2 + $0xd8] sm:$0xff]
    %v1123 = vld [vmem:[#allocation2 + $0xe0] sm:$0xff]
    %v1124 = vld [vmem:[#allocation2 + $0xe8] sm:$0xff]
    %v1125 = vld [vmem:[#allocation2 + $0xf0] sm:$0xff]
    %v1126 = vld [vmem:[#allocation2 + $0xf8] sm:$0xff]
    %v1127 = vld [vmem:[%s2] sm:$0xff]
    %v1128 = vld [vmem:[%s2 + $0x8] sm:$0xff]
    %v1129 = vld [vmem:[%s2 + $0x10] sm:$0xff]
    %v1130 = vld [vmem:[%s2 + $0x18] sm:$0xff]
    %v1131 = vld [vmem:[%s2 + $0x20] sm:$0xff]
    %v1132 = vld [vmem:[%s2 + $0x28] sm:$0xff]
    %v1133 = vld [vmem:[%s2 + $0x30] sm:$0xff]
    %v1134 = vld [vmem:[%s2 + $0x38] sm:$0xff]
    %v1135 = vld [vmem:[%s2 + $0x40] sm:$0xff]
    %v1136 = vld [vmem:[%s2 + $0x48] sm:$0xff]
    %v1137 = vld [vmem:[%s2 + $0x50] sm:$0xff]
    %v1138 = vld [vmem:[%s2 + $0x58] sm:$0xff]
    %v1139 = vld [vmem:[%s2 + $0x60] sm:$0xff]
    %v1140 = vld [vmem:[%s2 + $0x68] sm:$0xff]
    %v1141 = vld [vmem:[%s2 + $0x70] sm:$0xff]
    %v1142 = vld [vmem:[%s2 + $0x78] sm:$0xff]
    %v1143 = vld [vmem:[%s2 + $0x80] sm:$0xff]
    %v1144 = vld [vmem:[%s2 + $0x88] sm:$0xff]
    %v1145 = vld [vmem:[%s2 + $0x90] sm:$0xff]
    %v1146 = vld [vmem:[%s2 + $0x98] sm:$0xff]
    %v1147 = vld [vmem:[%s2 + $0xa0] sm:$0xff]
    %v1148 = vld [vmem:[%s2 + $0xa8] sm:$0xff]
    %v1149 = vld [vmem:[%s2 + $0xb0] sm:$0xff]
    %v1150 = vld [vmem:[%s2 + $0xb8] sm:$0xff]
    %v1151 = vld [vmem:[%s2 + $0xc0] sm:$0xff]
    %v1152 = vld [vmem:[%s2 + $0xc8] sm:$0xff]
    %v1153 = vld [vmem:[%s2 + $0xd0] sm:$0xff]
    %v1154 = vld [vmem:[%s2 + $0xd8] sm:$0xff]
    %v1155 = vld [vmem:[%s2 + $0xe0] sm:$0xff]
    %v1156 = vld [vmem:[%s2 + $0xe8] sm:$0xff]
    %v1157 = vld [vmem:[%s2 + $0xf0] sm:$0xff]
    %v1158 = vld [vmem:[%s2 + $0xf8] sm:$0xff]
    %v1159 = vadd.f32 %v1095, %v1127
    %v1160 = vadd.f32 %v1096, %v1128
    %v1161 = vadd.f32 %v1097, %v1129
    %v1162 = vadd.f32 %v1098, %v1130
    %v1163 = vadd.f32 %v1099, %v1131
    %v1164 = vadd.f32 %v1100, %v1132
    %v1165 = vadd.f32 %v1101, %v1133
    %v1166 = vadd.f32 %v1102, %v1134
    %v1167 = vadd.f32 %v1103, %v1135
    %v1168 = vadd.f32 %v1104, %v1136
    %v1169 = vadd.f32 %v1105, %v1137
    %v1170 = vadd.f32 %v1106, %v1138
    %v1171 = vadd.f32 %v1107, %v1139
    %v1172 = vadd.f32 %v1108, %v1140
    %v1173 = vadd.f32 %v1109, %v1141
    %v1174 = vadd.f32 %v1110, %v1142
    %v1175 = vadd.f32 %v1111, %v1143
    %v1176 = vadd.f32 %v1112, %v1144
    %v1177 = vadd.f32 %v1113, %v1145
    %v1178 = vadd.f32 %v1114, %v1146
    %v1179 = vadd.f32 %v1115, %v1147
    %v1180 = vadd.f32 %v1116, %v1148
    %v1181 = vadd.f32 %v1117, %v1149
    %v1182 = vadd.f32 %v1118, %v1150
    %v1183 = vadd.f32 %v1119, %v1151
    %v1184 = vadd.f32 %v1120, %v1152
    %v1185 = vadd.f32 %v1121, %v1153
    %v1186 = vadd.f32 %v1122, %v1154
    %v1187 = vadd.f32 %v1123, %v1155
    %v1188 = vadd.f32 %v1124, %v1156
    %v1189 = vadd.f32 %v1125, %v1157
    %v1190 = vadd.f32 %v1126, %v1158
    %v1191 = vpack.c.bf16 %v1160, %v1159
    %v1192 = vpack.c.bf16 %v1162, %v1161
    %v1193 = vpack.c.bf16 %v1164, %v1163
    %v1194 = vpack.c.bf16 %v1166, %v1165
    %v1195 = vpack.c.bf16 %v1168, %v1167
    %v1196 = vpack.c.bf16 %v1170, %v1169
    %v1197 = vpack.c.bf16 %v1172, %v1171
    %v1198 = vpack.c.bf16 %v1174, %v1173
    %v1199 = vpack.c.bf16 %v1176, %v1175
    %v1200 = vpack.c.bf16 %v1178, %v1177
    %v1201 = vpack.c.bf16 %v1180, %v1179
    %v1202 = vpack.c.bf16 %v1182, %v1181
    %v1203 = vpack.c.bf16 %v1184, %v1183
    %v1204 = vpack.c.bf16 %v1186, %v1185
    %v1205 = vpack.c.bf16 %v1188, %v1187
    %v1206 = vpack.c.bf16 %v1190, %v1189
    %v1207 = vld [vmem:[%s3] sm:$0xf]
    %v1208 = vld [vmem:[%s3 + $0x4] sm:$0xf]
    %v1209 = vld [vmem:[%s3 + $0x8] sm:$0xf]
    %v1210 = vld [vmem:[%s3 + $0xc] sm:$0xf]
    %v1211 = vld [vmem:[%s3 + $0x10] sm:$0xf]
    %v1212 = vld [vmem:[%s3 + $0x14] sm:$0xf]
    %v1213 = vld [vmem:[%s3 + $0x18] sm:$0xf]
    %v1214 = vld [vmem:[%s3 + $0x1c] sm:$0xf]
    %v1215 = vld [vmem:[%s3 + $0x20] sm:$0xf]
    %v1216 = vld [vmem:[%s3 + $0x24] sm:$0xf]
    %v1217 = vld [vmem:[%s3 + $0x28] sm:$0xf]
    %v1218 = vld [vmem:[%s3 + $0x2c] sm:$0xf]
    %v1219 = vld [vmem:[%s3 + $0x30] sm:$0xf]
    %v1220 = vld [vmem:[%s3 + $0x34] sm:$0xf]
    %v1221 = vld [vmem:[%s3 + $0x38] sm:$0xf]
    %v1222 = vld [vmem:[%s3 + $0x3c] sm:$0xf]
    %v1223 = vld [vmem:[%s4] sm:$0x1]
    %v1225 = vperm.slane %v1223, 0
    %v1243 = vunpack.c.l.b16 %v1207
    %v1244 = vunpack.c.l.b16 %v1208
    %v1245 = vunpack.c.l.b16 %v1209
    %v1246 = vunpack.c.l.b16 %v1210
    %v1247 = vunpack.c.l.b16 %v1211
    %v1248 = vunpack.c.l.b16 %v1212
    %v1249 = vunpack.c.l.b16 %v1213
    %v1250 = vunpack.c.l.b16 %v1214
    %v1251 = vunpack.c.l.b16 %v1215
    %v1252 = vunpack.c.l.b16 %v1216
    %v1253 = vunpack.c.l.b16 %v1217
    %v1254 = vunpack.c.l.b16 %v1218
    %v1255 = vunpack.c.l.b16 %v1219
    %v1256 = vunpack.c.l.b16 %v1220
    %v1257 = vunpack.c.l.b16 %v1221
    %v1258 = vunpack.c.l.b16 %v1222
    %v1259 = vpack.c.b16 %v1244, %v1243
    %v1260 = vpack.c.b16 %v1246, %v1245
    %v1261 = vpack.c.b16 %v1248, %v1247
    %v1262 = vpack.c.b16 %v1250, %v1249
    %v1263 = vpack.c.b16 %v1252, %v1251
    %v1264 = vpack.c.b16 %v1254, %v1253
    %v1265 = vpack.c.b16 %v1256, %v1255
    %v1266 = vpack.c.b16 %v1258, %v1257
    %1275 = vmatpush.bf16.msra.mxu0 %v1266
    %1276 = vmatpush.bf16.msra.mxu0 %v1265
    %1277 = vmatpush.bf16.msra.mxu0 %v1264
    %1278 = vmatpush.bf16.msra.mxu0 %v1263
    %1279 = vmatpush.bf16.msra.mxu0 %v1262
    %1280 = vmatpush.bf16.msra.mxu0 %v1261
    %1281 = vmatpush.bf16.msra.mxu0 %v1260
    %1282 = vmatpush.bf16.msra.mxu0 %v1259
    %1283 = vmatmul.bf16.gmra.mxu0 %v1191
    %v1284 = vpop.f32.mrf.mxu0
    %v1285 = vadd.f32 %v1225, %v1284
    %v1286 = vpop.f32.mrf.mxu0
    %v1287 = vadd.f32 %v1225, %v1286
    %1288 = vmatmul.bf16.gmra.mxu0 %v1192
    %v1289 = vpop.f32.mrf.mxu0
    %v1290 = vadd.f32 %v1225, %v1289
    %v1291 = vpop.f32.mrf.mxu0
    %v1292 = vadd.f32 %v1225, %v1291
    %1293 = vmatmul.bf16.gmra.mxu0 %v1193
    %v1294 = vpop.f32.mrf.mxu0
    %v1295 = vadd.f32 %v1225, %v1294
    %v1296 = vpop.f32.mrf.mxu0
    %v1297 = vadd.f32 %v1225, %v1296
    %1298 = vmatmul.bf16.gmra.mxu0 %v1194
    %v1299 = vpop.f32.mrf.mxu0
    %v1300 = vadd.f32 %v1225, %v1299
    %v1301 = vpop.f32.mrf.mxu0
    %v1302 = vadd.f32 %v1225, %v1301
    %1303 = vmatmul.bf16.gmra.mxu0 %v1195
    %v1304 = vpop.f32.mrf.mxu0
    %v1305 = vadd.f32 %v1225, %v1304
    %v1306 = vpop.f32.mrf.mxu0
    %v1307 = vadd.f32 %v1225, %v1306
    %1308 = vmatmul.bf16.gmra.mxu0 %v1196
    %v1309 = vpop.f32.mrf.mxu0
    %v1310 = vadd.f32 %v1225, %v1309
    %v1311 = vpop.f32.mrf.mxu0
    %v1312 = vadd.f32 %v1225, %v1311
    %1313 = vmatmul.bf16.gmra.mxu0 %v1197
    %v1314 = vpop.f32.mrf.mxu0
    %v1315 = vadd.f32 %v1225, %v1314
    %v1316 = vpop.f32.mrf.mxu0
    %v1317 = vadd.f32 %v1225, %v1316
    %1318 = vmatmul.bf16.gmra.mxu0 %v1198
    %v1319 = vpop.f32.mrf.mxu0
    %v1320 = vadd.f32 %v1225, %v1319
    %v1321 = vpop.f32.mrf.mxu0
    %v1322 = vadd.f32 %v1225, %v1321
    %1323 = vmatmul.bf16.gmra.mxu0 %v1199
    %v1324 = vpop.f32.mrf.mxu0
    %v1325 = vadd.f32 %v1225, %v1324
    %v1326 = vpop.f32.mrf.mxu0
    %v1327 = vadd.f32 %v1225, %v1326
    %1328 = vmatmul.bf16.gmra.mxu0 %v1200
    %v1329 = vpop.f32.mrf.mxu0
    %v1330 = vadd.f32 %v1225, %v1329
    %v1331 = vpop.f32.mrf.mxu0
    %v1332 = vadd.f32 %v1225, %v1331
    %1333 = vmatmul.bf16.gmra.mxu0 %v1201
    %v1334 = vpop.f32.mrf.mxu0
    %v1335 = vadd.f32 %v1225, %v1334
    %v1336 = vpop.f32.mrf.mxu0
    %v1337 = vadd.f32 %v1225, %v1336
    %1338 = vmatmul.bf16.gmra.mxu0 %v1202
    %v1339 = vpop.f32.mrf.mxu0
    %v1340 = vadd.f32 %v1225, %v1339
    %v1341 = vpop.f32.mrf.mxu0
    %v1342 = vadd.f32 %v1225, %v1341
    %1343 = vmatmul.bf16.gmra.mxu0 %v1203
    %v1344 = vpop.f32.mrf.mxu0
    %v1345 = vadd.f32 %v1225, %v1344
    %v1346 = vpop.f32.mrf.mxu0
    %v1347 = vadd.f32 %v1225, %v1346
    %1348 = vmatmul.bf16.gmra.mxu0 %v1204
    %v1349 = vpop.f32.mrf.mxu0
    %v1350 = vadd.f32 %v1225, %v1349
    %v1351 = vpop.f32.mrf.mxu0
    %v1352 = vadd.f32 %v1225, %v1351
    %1353 = vmatmul.bf16.gmra.mxu0 %v1205
    %v1354 = vpop.f32.mrf.mxu0
    %v1355 = vadd.f32 %v1225, %v1354
    %v1356 = vpop.f32.mrf.mxu0
    %v1357 = vadd.f32 %v1225, %v1356
    %1358 = vmatmul.bf16.gmra.mxu0 %v1206
    %v1359 = vpop.f32.mrf.mxu0
    %v1360 = vadd.f32 %v1225, %v1359
    %v1361 = vpop.f32.mrf.mxu0
    %v1362 = vadd.f32 %v1225, %v1361
    %1363 = vdwg.mxu0
    %v1364 = vmax.f32 %v1285, 0.0
    %v1365 = vmax.f32 %v1287, 0.0
    %v1366 = vmax.f32 %v1290, 0.0
    %v1367 = vmax.f32 %v1292, 0.0
    %v1368 = vmax.f32 %v1295, 0.0
    %v1369 = vmax.f32 %v1297, 0.0
    %v1370 = vmax.f32 %v1300, 0.0
    %v1371 = vmax.f32 %v1302, 0.0
    %v1372 = vmax.f32 %v1305, 0.0
    %v1373 = vmax.f32 %v1307, 0.0
    %v1374 = vmax.f32 %v1310, 0.0
    %v1375 = vmax.f32 %v1312, 0.0
    %v1376 = vmax.f32 %v1315, 0.0
    %v1377 = vmax.f32 %v1317, 0.0
    %v1378 = vmax.f32 %v1320, 0.0
    %v1379 = vmax.f32 %v1322, 0.0
    %v1380 = vmax.f32 %v1325, 0.0
    %v1381 = vmax.f32 %v1327, 0.0
    %v1382 = vmax.f32 %v1330, 0.0
    %v1383 = vmax.f32 %v1332, 0.0
    %v1384 = vmax.f32 %v1335, 0.0
    %v1385 = vmax.f32 %v1337, 0.0
    %v1386 = vmax.f32 %v1340, 0.0
    %v1387 = vmax.f32 %v1342, 0.0
    %v1388 = vmax.f32 %v1345, 0.0
    %v1389 = vmax.f32 %v1347, 0.0
    %v1390 = vmax.f32 %v1350, 0.0
    %v1391 = vmax.f32 %v1352, 0.0
    %v1392 = vmax.f32 %v1355, 0.0
    %v1393 = vmax.f32 %v1357, 0.0
    %v1394 = vmax.f32 %v1360, 0.0
    %v1395 = vmax.f32 %v1362, 0.0
    %v1396 = vpack.c.bf16 %v1365, %v1364
    %v1397 = vpack.c.bf16 %v1367, %v1366
    %v1398 = vpack.c.bf16 %v1369, %v1368
    %v1399 = vpack.c.bf16 %v1371, %v1370
    %v1400 = vpack.c.bf16 %v1373, %v1372
    %v1401 = vpack.c.bf16 %v1375, %v1374
    %v1402 = vpack.c.bf16 %v1377, %v1376
    %v1403 = vpack.c.bf16 %v1379, %v1378
    %v1404 = vpack.c.bf16 %v1381, %v1380
    %v1405 = vpack.c.bf16 %v1383, %v1382
    %v1406 = vpack.c.bf16 %v1385, %v1384
    %v1407 = vpack.c.bf16 %v1387, %v1386
    %v1408 = vpack.c.bf16 %v1389, %v1388
    %v1409 = vpack.c.bf16 %v1391, %v1390
    %v1410 = vpack.c.bf16 %v1393, %v1392
    %v1411 = vpack.c.bf16 %v1395, %v1394
    %v1412 = vld [vmem:[%s5] sm:$0xf]
    %v1413 = vld [vmem:[%s5 + $0x4] sm:$0xf]
    %v1414 = vld [vmem:[%s5 + $0x8] sm:$0xf]
    %v1415 = vld [vmem:[%s5 + $0xc] sm:$0xf]
    %v1416 = vld [vmem:[%s5 + $0x10] sm:$0xf]
    %v1417 = vld [vmem:[%s5 + $0x14] sm:$0xf]
    %v1418 = vld [vmem:[%s5 + $0x18] sm:$0xf]
    %v1419 = vld [vmem:[%s5 + $0x1c] sm:$0xf]
    %v1420 = vld [vmem:[%s5 + $0x20] sm:$0xf]
    %v1421 = vld [vmem:[%s5 + $0x24] sm:$0xf]
    %v1422 = vld [vmem:[%s5 + $0x28] sm:$0xf]
    %v1423 = vld [vmem:[%s5 + $0x2c] sm:$0xf]
    %v1424 = vld [vmem:[%s5 + $0x30] sm:$0xf]
    %v1425 = vld [vmem:[%s5 + $0x34] sm:$0xf]
    %v1426 = vld [vmem:[%s5 + $0x38] sm:$0xf]
    %v1427 = vld [vmem:[%s5 + $0x3c] sm:$0xf]
    %v1428 = vld [vmem:[%s6] sm:$0x1]
    %v1430 = vperm.slane %v1428, 0
    %v1448 = vunpack.c.l.b16 %v1412
    %v1449 = vunpack.c.l.b16 %v1413
    %v1450 = vunpack.c.l.b16 %v1414
    %v1451 = vunpack.c.l.b16 %v1415
    %v1452 = vunpack.c.l.b16 %v1416
    %v1453 = vunpack.c.l.b16 %v1417
    %v1454 = vunpack.c.l.b16 %v1418
    %v1455 = vunpack.c.l.b16 %v1419
    %v1456 = vunpack.c.l.b16 %v1420
    %v1457 = vunpack.c.l.b16 %v1421
    %v1458 = vunpack.c.l.b16 %v1422
    %v1459 = vunpack.c.l.b16 %v1423
    %v1460 = vunpack.c.l.b16 %v1424
    %v1461 = vunpack.c.l.b16 %v1425
    %v1462 = vunpack.c.l.b16 %v1426
    %v1463 = vunpack.c.l.b16 %v1427
    %v1464 = vpack.c.b16 %v1449, %v1448
    %v1465 = vpack.c.b16 %v1451, %v1450
    %v1466 = vpack.c.b16 %v1453, %v1452
    %v1467 = vpack.c.b16 %v1455, %v1454
    %v1468 = vpack.c.b16 %v1457, %v1456
    %v1469 = vpack.c.b16 %v1459, %v1458
    %v1470 = vpack.c.b16 %v1461, %v1460
    %v1471 = vpack.c.b16 %v1463, %v1462
    %1480 = vmatpush.bf16.msra.mxu0 %v1471
    %1481 = vmatpush.bf16.msra.mxu0 %v1470
    %1482 = vmatpush.bf16.msra.mxu0 %v1469
    %1483 = vmatpush.bf16.msra.mxu0 %v1468
    %1484 = vmatpush.bf16.msra.mxu0 %v1467
    %1485 = vmatpush.bf16.msra.mxu0 %v1466
    %1486 = vmatpush.bf16.msra.mxu0 %v1465
    %1487 = vmatpush.bf16.msra.mxu0 %v1464
    %1488 = vmatmul.bf16.gmra.mxu0 %v1396
    %v1489 = vpop.f32.mrf.mxu0
    %v1490 = vadd.f32 %v1430, %v1489
    %v1491 = vpop.f32.mrf.mxu0
    %v1492 = vadd.f32 %v1430, %v1491
    %1493 = vmatmul.bf16.gmra.mxu0 %v1397
    %v1494 = vpop.f32.mrf.mxu0
    %v1495 = vadd.f32 %v1430, %v1494
    %v1496 = vpop.f32.mrf.mxu0
    %v1497 = vadd.f32 %v1430, %v1496
    %1498 = vmatmul.bf16.gmra.mxu0 %v1398
    %v1499 = vpop.f32.mrf.mxu0
    %v1500 = vadd.f32 %v1430, %v1499
    %v1501 = vpop.f32.mrf.mxu0
    %v1502 = vadd.f32 %v1430, %v1501
    %1503 = vmatmul.bf16.gmra.mxu0 %v1399
    %v1504 = vpop.f32.mrf.mxu0
    %v1505 = vadd.f32 %v1430, %v1504
    %v1506 = vpop.f32.mrf.mxu0
    %v1507 = vadd.f32 %v1430, %v1506
    %1508 = vmatmul.bf16.gmra.mxu0 %v1400
    %v1509 = vpop.f32.mrf.mxu0
    %v1510 = vadd.f32 %v1430, %v1509
    %v1511 = vpop.f32.mrf.mxu0
    %v1512 = vadd.f32 %v1430, %v1511
    %1513 = vmatmul.bf16.gmra.mxu0 %v1401
    %v1514 = vpop.f32.mrf.mxu0
    %v1515 = vadd.f32 %v1430, %v1514
    %v1516 = vpop.f32.mrf.mxu0
    %v1517 = vadd.f32 %v1430, %v1516
    %1518 = vmatmul.bf16.gmra.mxu0 %v1402
    %v1519 = vpop.f32.mrf.mxu0
    %v1520 = vadd.f32 %v1430, %v1519
    %v1521 = vpop.f32.mrf.mxu0
    %v1522 = vadd.f32 %v1430, %v1521
    %1523 = vmatmul.bf16.gmra.mxu0 %v1403
    %v1524 = vpop.f32.mrf.mxu0
    %v1525 = vadd.f32 %v1430, %v1524
    %v1526 = vpop.f32.mrf.mxu0
    %v1527 = vadd.f32 %v1430, %v1526
    %1528 = vmatmul.bf16.gmra.mxu0 %v1404
    %v1529 = vpop.f32.mrf.mxu0
    %v1530 = vadd.f32 %v1430, %v1529
    %v1531 = vpop.f32.mrf.mxu0
    %v1532 = vadd.f32 %v1430, %v1531
    %1533 = vmatmul.bf16.gmra.mxu0 %v1405
    %v1534 = vpop.f32.mrf.mxu0
    %v1535 = vadd.f32 %v1430, %v1534
    %v1536 = vpop.f32.mrf.mxu0
    %v1537 = vadd.f32 %v1430, %v1536
    %1538 = vmatmul.bf16.gmra.mxu0 %v1406
    %v1539 = vpop.f32.mrf.mxu0
    %v1540 = vadd.f32 %v1430, %v1539
    %v1541 = vpop.f32.mrf.mxu0
    %v1542 = vadd.f32 %v1430, %v1541
    %1543 = vmatmul.bf16.gmra.mxu0 %v1407
    %v1544 = vpop.f32.mrf.mxu0
    %v1545 = vadd.f32 %v1430, %v1544
    %v1546 = vpop.f32.mrf.mxu0
    %v1547 = vadd.f32 %v1430, %v1546
    %1548 = vmatmul.bf16.gmra.mxu0 %v1408
    %v1549 = vpop.f32.mrf.mxu0
    %v1550 = vadd.f32 %v1430, %v1549
    %v1551 = vpop.f32.mrf.mxu0
    %v1552 = vadd.f32 %v1430, %v1551
    %1553 = vmatmul.bf16.gmra.mxu0 %v1409
    %v1554 = vpop.f32.mrf.mxu0
    %v1555 = vadd.f32 %v1430, %v1554
    %v1556 = vpop.f32.mrf.mxu0
    %v1557 = vadd.f32 %v1430, %v1556
    %1558 = vmatmul.bf16.gmra.mxu0 %v1410
    %v1559 = vpop.f32.mrf.mxu0
    %v1560 = vadd.f32 %v1430, %v1559
    %v1561 = vpop.f32.mrf.mxu0
    %v1562 = vadd.f32 %v1430, %v1561
    %1563 = vmatmul.bf16.gmra.mxu0 %v1411
    %v1564 = vpop.f32.mrf.mxu0
    %v1565 = vadd.f32 %v1430, %v1564
    %v1566 = vpop.f32.mrf.mxu0
    %v1567 = vadd.f32 %v1430, %v1566
    %1568 = vdwg.mxu0
    %v1569 = vmax.f32 %v1490, 0.0
    %v1570 = vmax.f32 %v1492, 0.0
    %v1571 = vmax.f32 %v1495, 0.0
    %v1572 = vmax.f32 %v1497, 0.0
    %v1573 = vmax.f32 %v1500, 0.0
    %v1574 = vmax.f32 %v1502, 0.0
    %v1575 = vmax.f32 %v1505, 0.0
    %v1576 = vmax.f32 %v1507, 0.0
    %v1577 = vmax.f32 %v1510, 0.0
    %v1578 = vmax.f32 %v1512, 0.0
    %v1579 = vmax.f32 %v1515, 0.0
    %v1580 = vmax.f32 %v1517, 0.0
    %v1581 = vmax.f32 %v1520, 0.0
    %v1582 = vmax.f32 %v1522, 0.0
    %v1583 = vmax.f32 %v1525, 0.0
    %v1584 = vmax.f32 %v1527, 0.0
    %v1585 = vmax.f32 %v1530, 0.0
    %v1586 = vmax.f32 %v1532, 0.0
    %v1587 = vmax.f32 %v1535, 0.0
    %v1588 = vmax.f32 %v1537, 0.0
    %v1589 = vmax.f32 %v1540, 0.0
    %v1590 = vmax.f32 %v1542, 0.0
    %v1591 = vmax.f32 %v1545, 0.0
    %v1592 = vmax.f32 %v1547, 0.0
    %v1593 = vmax.f32 %v1550, 0.0
    %v1594 = vmax.f32 %v1552, 0.0
    %v1595 = vmax.f32 %v1555, 0.0
    %v1596 = vmax.f32 %v1557, 0.0
    %v1597 = vmax.f32 %v1560, 0.0
    %v1598 = vmax.f32 %v1562, 0.0
    %v1599 = vmax.f32 %v1565, 0.0
    %v1600 = vmax.f32 %v1567, 0.0
    %v1601 = vpack.c.bf16 %v1569, %v1569
    %v1602 = vpack.c.bf16 %v1570, %v1570
    %v1603 = vpack.c.bf16 %v1571, %v1571
    %v1604 = vpack.c.bf16 %v1572, %v1572
    %v1605 = vpack.c.bf16 %v1573, %v1573
    %v1606 = vpack.c.bf16 %v1574, %v1574
    %v1607 = vpack.c.bf16 %v1575, %v1575
    %v1608 = vpack.c.bf16 %v1576, %v1576
    %v1609 = vpack.c.bf16 %v1577, %v1577
    %v1610 = vpack.c.bf16 %v1578, %v1578
    %v1611 = vpack.c.bf16 %v1579, %v1579
    %v1612 = vpack.c.bf16 %v1580, %v1580
    %v1613 = vpack.c.bf16 %v1581, %v1581
    %v1614 = vpack.c.bf16 %v1582, %v1582
    %v1615 = vpack.c.bf16 %v1583, %v1583
    %v1616 = vpack.c.bf16 %v1584, %v1584
    %v1617 = vpack.c.bf16 %v1585, %v1585
    %v1618 = vpack.c.bf16 %v1586, %v1586
    %v1619 = vpack.c.bf16 %v1587, %v1587
    %v1620 = vpack.c.bf16 %v1588, %v1588
    %v1621 = vpack.c.bf16 %v1589, %v1589
    %v1622 = vpack.c.bf16 %v1590, %v1590
    %v1623 = vpack.c.bf16 %v1591, %v1591
    %v1624 = vpack.c.bf16 %v1592, %v1592
    %v1625 = vpack.c.bf16 %v1593, %v1593
    %v1626 = vpack.c.bf16 %v1594, %v1594
    %v1627 = vpack.c.bf16 %v1595, %v1595
    %v1628 = vpack.c.bf16 %v1596, %v1596
    %v1629 = vpack.c.bf16 %v1597, %v1597
    %v1630 = vpack.c.bf16 %v1598, %v1598
    %v1631 = vpack.c.bf16 %v1599, %v1599
    %v1632 = vpack.c.bf16 %v1600, %v1600
    %1633 = vst [vmem:[%s7] sm:$0xf] %v1601
    %1634 = vst [vmem:[%s7 + $0x4] sm:$0xf] %v1602
    %1635 = vst [vmem:[%s7 + $0x8] sm:$0xf] %v1603
    %1636 = vst [vmem:[%s7 + $0xc] sm:$0xf] %v1604
    %1637 = vst [vmem:[%s7 + $0x10] sm:$0xf] %v1605
    %1638 = vst [vmem:[%s7 + $0x14] sm:$0xf] %v1606
    %1639 = vst [vmem:[%s7 + $0x18] sm:$0xf] %v1607
    %1640 = vst [vmem:[%s7 + $0x1c] sm:$0xf] %v1608
    %1641 = vst [vmem:[%s7 + $0x20] sm:$0xf] %v1609
    %1642 = vst [vmem:[%s7 + $0x24] sm:$0xf] %v1610
    %1643 = vst [vmem:[%s7 + $0x28] sm:$0xf] %v1611
    %1644 = vst [vmem:[%s7 + $0x2c] sm:$0xf] %v1612
    %1645 = vst [vmem:[%s7 + $0x30] sm:$0xf] %v1613
    %1646 = vst [vmem:[%s7 + $0x34] sm:$0xf] %v1614
    %1647 = vst [vmem:[%s7 + $0x38] sm:$0xf] %v1615
    %1648 = vst [vmem:[%s7 + $0x3c] sm:$0xf] %v1616
    %1649 = vst [vmem:[%s7 + $0x40] sm:$0xf] %v1617
    %1650 = vst [vmem:[%s7 + $0x44] sm:$0xf] %v1618
    %1651 = vst [vmem:[%s7 + $0x48] sm:$0xf] %v1619
    %1652 = vst [vmem:[%s7 + $0x4c] sm:$0xf] %v1620
    %1653 = vst [vmem:[%s7 + $0x50] sm:$0xf] %v1621
    %1654 = vst [vmem:[%s7 + $0x54] sm:$0xf] %v1622
    %1655 = vst [vmem:[%s7 + $0x58] sm:$0xf] %v1623
    %1656 = vst [vmem:[%s7 + $0x5c] sm:$0xf] %v1624
    %1657 = vst [vmem:[%s7 + $0x60] sm:$0xf] %v1625
    %1658 = vst [vmem:[%s7 + $0x64] sm:$0xf] %v1626
    %1659 = vst [vmem:[%s7 + $0x68] sm:$0xf] %v1627
    %1660 = vst [vmem:[%s7 + $0x6c] sm:$0xf] %v1628
    %1661 = vst [vmem:[%s7 + $0x70] sm:$0xf] %v1629
    %1662 = vst [vmem:[%s7 + $0x74] sm:$0xf] %v1630
    %1663 = vst [vmem:[%s7 + $0x78] sm:$0xf] %v1631
    %1664 = vst [vmem:[%s7 + $0x7c] sm:$0xf] %v1632
    %v1665 = vld [vmem:[%s688] sm:$0xff]
    %v1666 = vld [vmem:[%s688 + $0x8] sm:$0xff]
    %v1667 = vld [vmem:[%s688 + $0x10] sm:$0xff]
    %v1668 = vld [vmem:[%s688 + $0x18] sm:$0xff]
    %v1669 = vld [vmem:[%s688 + $0x20] sm:$0xff]
    %v1670 = vld [vmem:[%s688 + $0x28] sm:$0xff]
    %v1671 = vld [vmem:[%s688 + $0x30] sm:$0xff]
    %v1672 = vld [vmem:[%s688 + $0x38] sm:$0xff]
    %v1673 = vld [vmem:[%s688 + $0x40] sm:$0xff]
    %v1674 = vld [vmem:[%s688 + $0x48] sm:$0xff]
    %v1675 = vld [vmem:[%s688 + $0x50] sm:$0xff]
    %v1676 = vld [vmem:[%s688 + $0x58] sm:$0xff]
    %v1677 = vld [vmem:[%s688 + $0x60] sm:$0xff]
    %v1678 = vld [vmem:[%s688 + $0x68] sm:$0xff]
    %v1679 = vld [vmem:[%s688 + $0x70] sm:$0xff]
    %v1680 = vld [vmem:[%s688 + $0x78] sm:$0xff]
    %v1681 = vld [vmem:[%s688 + $0x80] sm:$0xff]
    %v1682 = vld [vmem:[%s688 + $0x88] sm:$0xff]
    %v1683 = vld [vmem:[%s688 + $0x90] sm:$0xff]
    %v1684 = vld [vmem:[%s688 + $0x98] sm:$0xff]
    %v1685 = vld [vmem:[%s688 + $0xa0] sm:$0xff]
    %v1686 = vld [vmem:[%s688 + $0xa8] sm:$0xff]
    %v1687 = vld [vmem:[%s688 + $0xb0] sm:$0xff]
    %v1688 = vld [vmem:[%s688 + $0xb8] sm:$0xff]
    %v1689 = vld [vmem:[%s688 + $0xc0] sm:$0xff]
    %v1690 = vld [vmem:[%s688 + $0xc8] sm:$0xff]
    %v1691 = vld [vmem:[%s688 + $0xd0] sm:$0xff]
    %v1692 = vld [vmem:[%s688 + $0xd8] sm:$0xff]
    %v1693 = vld [vmem:[%s688 + $0xe0] sm:$0xff]
    %v1694 = vld [vmem:[%s688 + $0xe8] sm:$0xff]
    %v1695 = vld [vmem:[%s688 + $0xf0] sm:$0xff]
    %v1696 = vld [vmem:[%s688 + $0xf8] sm:$0xff]
    %s1697 = scalar_lea.vmem %s2, 256
    %v1698 = vld [vmem:[%s1697] sm:$0xff]
    %v1699 = vld [vmem:[%s1697 + $0x8] sm:$0xff]
    %v1700 = vld [vmem:[%s1697 + $0x10] sm:$0xff]
    %v1701 = vld [vmem:[%s1697 + $0x18] sm:$0xff]
    %v1702 = vld [vmem:[%s1697 + $0x20] sm:$0xff]
    %v1703 = vld [vmem:[%s1697 + $0x28] sm:$0xff]
    %v1704 = vld [vmem:[%s1697 + $0x30] sm:$0xff]
    %v1705 = vld [vmem:[%s1697 + $0x38] sm:$0xff]
    %v1706 = vld [vmem:[%s1697 + $0x40] sm:$0xff]
    %v1707 = vld [vmem:[%s1697 + $0x48] sm:$0xff]
    %v1708 = vld [vmem:[%s1697 + $0x50] sm:$0xff]
    %v1709 = vld [vmem:[%s1697 + $0x58] sm:$0xff]
    %v1710 = vld [vmem:[%s1697 + $0x60] sm:$0xff]
    %v1711 = vld [vmem:[%s1697 + $0x68] sm:$0xff]
    %v1712 = vld [vmem:[%s1697 + $0x70] sm:$0xff]
    %v1713 = vld [vmem:[%s1697 + $0x78] sm:$0xff]
    %v1714 = vld [vmem:[%s1697 + $0x80] sm:$0xff]
    %v1715 = vld [vmem:[%s1697 + $0x88] sm:$0xff]
    %v1716 = vld [vmem:[%s1697 + $0x90] sm:$0xff]
    %v1717 = vld [vmem:[%s1697 + $0x98] sm:$0xff]
    %v1718 = vld [vmem:[%s1697 + $0xa0] sm:$0xff]
    %v1719 = vld [vmem:[%s1697 + $0xa8] sm:$0xff]
    %v1720 = vld [vmem:[%s1697 + $0xb0] sm:$0xff]
    %v1721 = vld [vmem:[%s1697 + $0xb8] sm:$0xff]
    %v1722 = vld [vmem:[%s1697 + $0xc0] sm:$0xff]
    %v1723 = vld [vmem:[%s1697 + $0xc8] sm:$0xff]
    %v1724 = vld [vmem:[%s1697 + $0xd0] sm:$0xff]
    %v1725 = vld [vmem:[%s1697 + $0xd8] sm:$0xff]
    %v1726 = vld [vmem:[%s1697 + $0xe0] sm:$0xff]
    %v1727 = vld [vmem:[%s1697 + $0xe8] sm:$0xff]
    %v1728 = vld [vmem:[%s1697 + $0xf0] sm:$0xff]
    %v1729 = vld [vmem:[%s1697 + $0xf8] sm:$0xff]
    %v1730 = vadd.f32 %v1665, %v1698
    %v1731 = vadd.f32 %v1666, %v1699
    %v1732 = vadd.f32 %v1667, %v1700
    %v1733 = vadd.f32 %v1668, %v1701
    %v1734 = vadd.f32 %v1669, %v1702
    %v1735 = vadd.f32 %v1670, %v1703
    %v1736 = vadd.f32 %v1671, %v1704
    %v1737 = vadd.f32 %v1672, %v1705
    %v1738 = vadd.f32 %v1673, %v1706
    %v1739 = vadd.f32 %v1674, %v1707
    %v1740 = vadd.f32 %v1675, %v1708
    %v1741 = vadd.f32 %v1676, %v1709
    %v1742 = vadd.f32 %v1677, %v1710
    %v1743 = vadd.f32 %v1678, %v1711
    %v1744 = vadd.f32 %v1679, %v1712
    %v1745 = vadd.f32 %v1680, %v1713
    %v1746 = vadd.f32 %v1681, %v1714
    %v1747 = vadd.f32 %v1682, %v1715
    %v1748 = vadd.f32 %v1683, %v1716
    %v1749 = vadd.f32 %v1684, %v1717
    %v1750 = vadd.f32 %v1685, %v1718
    %v1751 = vadd.f32 %v1686, %v1719
    %v1752 = vadd.f32 %v1687, %v1720
    %v1753 = vadd.f32 %v1688, %v1721
    %v1754 = vadd.f32 %v1689, %v1722
    %v1755 = vadd.f32 %v1690, %v1723
    %v1756 = vadd.f32 %v1691, %v1724
    %v1757 = vadd.f32 %v1692, %v1725
    %v1758 = vadd.f32 %v1693, %v1726
    %v1759 = vadd.f32 %v1694, %v1727
    %v1760 = vadd.f32 %v1695, %v1728
    %v1761 = vadd.f32 %v1696, %v1729
    %v1762 = vpack.c.bf16 %v1731, %v1730
    %v1763 = vpack.c.bf16 %v1733, %v1732
    %v1764 = vpack.c.bf16 %v1735, %v1734
    %v1765 = vpack.c.bf16 %v1737, %v1736
    %v1766 = vpack.c.bf16 %v1739, %v1738
    %v1767 = vpack.c.bf16 %v1741, %v1740
    %v1768 = vpack.c.bf16 %v1743, %v1742
    %v1769 = vpack.c.bf16 %v1745, %v1744
    %v1770 = vpack.c.bf16 %v1747, %v1746
    %v1771 = vpack.c.bf16 %v1749, %v1748
    %v1772 = vpack.c.bf16 %v1751, %v1750
    %v1773 = vpack.c.bf16 %v1753, %v1752
    %v1774 = vpack.c.bf16 %v1755, %v1754
    %v1775 = vpack.c.bf16 %v1757, %v1756
    %v1776 = vpack.c.bf16 %v1759, %v1758
    %v1777 = vpack.c.bf16 %v1761, %v1760
    %s1778 = scalar_lea.vmem %s3, 64
    %v1779 = vld [vmem:[%s1778] sm:$0xf]
    %v1780 = vld [vmem:[%s1778 + $0x4] sm:$0xf]
    %v1781 = vld [vmem:[%s1778 + $0x8] sm:$0xf]
    %v1782 = vld [vmem:[%s1778 + $0xc] sm:$0xf]
    %v1783 = vld [vmem:[%s1778 + $0x10] sm:$0xf]
    %v1784 = vld [vmem:[%s1778 + $0x14] sm:$0xf]
    %v1785 = vld [vmem:[%s1778 + $0x18] sm:$0xf]
    %v1786 = vld [vmem:[%s1778 + $0x1c] sm:$0xf]
    %v1787 = vld [vmem:[%s1778 + $0x20] sm:$0xf]
    %v1788 = vld [vmem:[%s1778 + $0x24] sm:$0xf]
    %v1789 = vld [vmem:[%s1778 + $0x28] sm:$0xf]
    %v1790 = vld [vmem:[%s1778 + $0x2c] sm:$0xf]
    %v1791 = vld [vmem:[%s1778 + $0x30] sm:$0xf]
    %v1792 = vld [vmem:[%s1778 + $0x34] sm:$0xf]
    %v1793 = vld [vmem:[%s1778 + $0x38] sm:$0xf]
    %v1794 = vld [vmem:[%s1778 + $0x3c] sm:$0xf]
    %s1795 = scalar_lea.vmem %s4, 1
    %v1796 = vld [vmem:[%s1795] sm:$0x1]
    %v1798 = vperm.slane %v1796, 0
    %v1816 = vunpack.c.l.b16 %v1779
    %v1817 = vunpack.c.l.b16 %v1780
    %v1818 = vunpack.c.l.b16 %v1781
    %v1819 = vunpack.c.l.b16 %v1782
    %v1820 = vunpack.c.l.b16 %v1783
    %v1821 = vunpack.c.l.b16 %v1784
    %v1822 = vunpack.c.l.b16 %v1785
    %v1823 = vunpack.c.l.b16 %v1786
    %v1824 = vunpack.c.l.b16 %v1787
    %v1825 = vunpack.c.l.b16 %v1788
    %v1826 = vunpack.c.l.b16 %v1789
    %v1827 = vunpack.c.l.b16 %v1790
    %v1828 = vunpack.c.l.b16 %v1791
    %v1829 = vunpack.c.l.b16 %v1792
    %v1830 = vunpack.c.l.b16 %v1793
    %v1831 = vunpack.c.l.b16 %v1794
    %v1832 = vpack.c.b16 %v1817, %v1816
    %v1833 = vpack.c.b16 %v1819, %v1818
    %v1834 = vpack.c.b16 %v1821, %v1820
    %v1835 = vpack.c.b16 %v1823, %v1822
    %v1836 = vpack.c.b16 %v1825, %v1824
    %v1837 = vpack.c.b16 %v1827, %v1826
    %v1838 = vpack.c.b16 %v1829, %v1828
    %v1839 = vpack.c.b16 %v1831, %v1830
    %1848 = vmatpush.bf16.msra.mxu0 %v1839
    %1849 = vmatpush.bf16.msra.mxu0 %v1838
    %1850 = vmatpush.bf16.msra.mxu0 %v1837
    %1851 = vmatpush.bf16.msra.mxu0 %v1836
    %1852 = vmatpush.bf16.msra.mxu0 %v1835
    %1853 = vmatpush.bf16.msra.mxu0 %v1834
    %1854 = vmatpush.bf16.msra.mxu0 %v1833
    %1855 = vmatpush.bf16.msra.mxu0 %v1832
    %1856 = vmatmul.bf16.gmra.mxu0 %v1762
    %v1857 = vpop.f32.mrf.mxu0
    %v1858 = vadd.f32 %v1798, %v1857
    %v1859 = vpop.f32.mrf.mxu0
    %v1860 = vadd.f32 %v1798, %v1859
    %1861 = vmatmul.bf16.gmra.mxu0 %v1763
    %v1862 = vpop.f32.mrf.mxu0
    %v1863 = vadd.f32 %v1798, %v1862
    %v1864 = vpop.f32.mrf.mxu0
    %v1865 = vadd.f32 %v1798, %v1864
    %1866 = vmatmul.bf16.gmra.mxu0 %v1764
    %v1867 = vpop.f32.mrf.mxu0
    %v1868 = vadd.f32 %v1798, %v1867
    %v1869 = vpop.f32.mrf.mxu0
    %v1870 = vadd.f32 %v1798, %v1869
    %1871 = vmatmul.bf16.gmra.mxu0 %v1765
    %v1872 = vpop.f32.mrf.mxu0
    %v1873 = vadd.f32 %v1798, %v1872
    %v1874 = vpop.f32.mrf.mxu0
    %v1875 = vadd.f32 %v1798, %v1874
    %1876 = vmatmul.bf16.gmra.mxu0 %v1766
    %v1877 = vpop.f32.mrf.mxu0
    %v1878 = vadd.f32 %v1798, %v1877
    %v1879 = vpop.f32.mrf.mxu0
    %v1880 = vadd.f32 %v1798, %v1879
    %1881 = vmatmul.bf16.gmra.mxu0 %v1767
    %v1882 = vpop.f32.mrf.mxu0
    %v1883 = vadd.f32 %v1798, %v1882
    %v1884 = vpop.f32.mrf.mxu0
    %v1885 = vadd.f32 %v1798, %v1884
    %1886 = vmatmul.bf16.gmra.mxu0 %v1768
    %v1887 = vpop.f32.mrf.mxu0
    %v1888 = vadd.f32 %v1798, %v1887
    %v1889 = vpop.f32.mrf.mxu0
    %v1890 = vadd.f32 %v1798, %v1889
    %1891 = vmatmul.bf16.gmra.mxu0 %v1769
    %v1892 = vpop.f32.mrf.mxu0
    %v1893 = vadd.f32 %v1798, %v1892
    %v1894 = vpop.f32.mrf.mxu0
    %v1895 = vadd.f32 %v1798, %v1894
    %1896 = vmatmul.bf16.gmra.mxu0 %v1770
    %v1897 = vpop.f32.mrf.mxu0
    %v1898 = vadd.f32 %v1798, %v1897
    %v1899 = vpop.f32.mrf.mxu0
    %v1900 = vadd.f32 %v1798, %v1899
    %1901 = vmatmul.bf16.gmra.mxu0 %v1771
    %v1902 = vpop.f32.mrf.mxu0
    %v1903 = vadd.f32 %v1798, %v1902
    %v1904 = vpop.f32.mrf.mxu0
    %v1905 = vadd.f32 %v1798, %v1904
    %1906 = vmatmul.bf16.gmra.mxu0 %v1772
    %v1907 = vpop.f32.mrf.mxu0
    %v1908 = vadd.f32 %v1798, %v1907
    %v1909 = vpop.f32.mrf.mxu0
    %v1910 = vadd.f32 %v1798, %v1909
    %1911 = vmatmul.bf16.gmra.mxu0 %v1773
    %v1912 = vpop.f32.mrf.mxu0
    %v1913 = vadd.f32 %v1798, %v1912
    %v1914 = vpop.f32.mrf.mxu0
    %v1915 = vadd.f32 %v1798, %v1914
    %1916 = vmatmul.bf16.gmra.mxu0 %v1774
    %v1917 = vpop.f32.mrf.mxu0
    %v1918 = vadd.f32 %v1798, %v1917
    %v1919 = vpop.f32.mrf.mxu0
    %v1920 = vadd.f32 %v1798, %v1919
    %1921 = vmatmul.bf16.gmra.mxu0 %v1775
    %v1922 = vpop.f32.mrf.mxu0
    %v1923 = vadd.f32 %v1798, %v1922
    %v1924 = vpop.f32.mrf.mxu0
    %v1925 = vadd.f32 %v1798, %v1924
    %1926 = vmatmul.bf16.gmra.mxu0 %v1776
    %v1927 = vpop.f32.mrf.mxu0
    %v1928 = vadd.f32 %v1798, %v1927
    %v1929 = vpop.f32.mrf.mxu0
    %v1930 = vadd.f32 %v1798, %v1929
    %1931 = vmatmul.bf16.gmra.mxu0 %v1777
    %v1932 = vpop.f32.mrf.mxu0
    %v1933 = vadd.f32 %v1798, %v1932
    %v1934 = vpop.f32.mrf.mxu0
    %v1935 = vadd.f32 %v1798, %v1934
    %1936 = vdwg.mxu0
    %v1937 = vmax.f32 %v1858, 0.0
    %v1938 = vmax.f32 %v1860, 0.0
    %v1939 = vmax.f32 %v1863, 0.0
    %v1940 = vmax.f32 %v1865, 0.0
    %v1941 = vmax.f32 %v1868, 0.0
    %v1942 = vmax.f32 %v1870, 0.0
    %v1943 = vmax.f32 %v1873, 0.0
    %v1944 = vmax.f32 %v1875, 0.0
    %v1945 = vmax.f32 %v1878, 0.0
    %v1946 = vmax.f32 %v1880, 0.0
    %v1947 = vmax.f32 %v1883, 0.0
    %v1948 = vmax.f32 %v1885, 0.0
    %v1949 = vmax.f32 %v1888, 0.0
    %v1950 = vmax.f32 %v1890, 0.0
    %v1951 = vmax.f32 %v1893, 0.0
    %v1952 = vmax.f32 %v1895, 0.0
    %v1953 = vmax.f32 %v1898, 0.0
    %v1954 = vmax.f32 %v1900, 0.0
    %v1955 = vmax.f32 %v1903, 0.0
    %v1956 = vmax.f32 %v1905, 0.0
    %v1957 = vmax.f32 %v1908, 0.0
    %v1958 = vmax.f32 %v1910, 0.0
    %v1959 = vmax.f32 %v1913, 0.0
    %v1960 = vmax.f32 %v1915, 0.0
    %v1961 = vmax.f32 %v1918, 0.0
    %v1962 = vmax.f32 %v1920, 0.0
    %v1963 = vmax.f32 %v1923, 0.0
    %v1964 = vmax.f32 %v1925, 0.0
    %v1965 = vmax.f32 %v1928, 0.0
    %v1966 = vmax.f32 %v1930, 0.0
    %v1967 = vmax.f32 %v1933, 0.0
    %v1968 = vmax.f32 %v1935, 0.0
    %v1969 = vpack.c.bf16 %v1938, %v1937
    %v1970 = vpack.c.bf16 %v1940, %v1939
    %v1971 = vpack.c.bf16 %v1942, %v1941
    %v1972 = vpack.c.bf16 %v1944, %v1943
    %v1973 = vpack.c.bf16 %v1946, %v1945
    %v1974 = vpack.c.bf16 %v1948, %v1947
    %v1975 = vpack.c.bf16 %v1950, %v1949
    %v1976 = vpack.c.bf16 %v1952, %v1951
    %v1977 = vpack.c.bf16 %v1954, %v1953
    %v1978 = vpack.c.bf16 %v1956, %v1955
    %v1979 = vpack.c.bf16 %v1958, %v1957
    %v1980 = vpack.c.bf16 %v1960, %v1959
    %v1981 = vpack.c.bf16 %v1962, %v1961
    %v1982 = vpack.c.bf16 %v1964, %v1963
    %v1983 = vpack.c.bf16 %v1966, %v1965
    %v1984 = vpack.c.bf16 %v1968, %v1967
    %s1985 = scalar_lea.vmem %s5, 64
    %v1986 = vld [vmem:[%s1985] sm:$0xf]
    %v1987 = vld [vmem:[%s1985 + $0x4] sm:$0xf]
    %v1988 = vld [vmem:[%s1985 + $0x8] sm:$0xf]
    %v1989 = vld [vmem:[%s1985 + $0xc] sm:$0xf]
    %v1990 = vld [vmem:[%s1985 + $0x10] sm:$0xf]
    %v1991 = vld [vmem:[%s1985 + $0x14] sm:$0xf]
    %v1992 = vld [vmem:[%s1985 + $0x18] sm:$0xf]
    %v1993 = vld [vmem:[%s1985 + $0x1c] sm:$0xf]
    %v1994 = vld [vmem:[%s1985 + $0x20] sm:$0xf]
    %v1995 = vld [vmem:[%s1985 + $0x24] sm:$0xf]
    %v1996 = vld [vmem:[%s1985 + $0x28] sm:$0xf]
    %v1997 = vld [vmem:[%s1985 + $0x2c] sm:$0xf]
    %v1998 = vld [vmem:[%s1985 + $0x30] sm:$0xf]
    %v1999 = vld [vmem:[%s1985 + $0x34] sm:$0xf]
    %v2000 = vld [vmem:[%s1985 + $0x38] sm:$0xf]
    %v2001 = vld [vmem:[%s1985 + $0x3c] sm:$0xf]
    %s2002 = scalar_lea.vmem %s6, 1
    %v2003 = vld [vmem:[%s2002] sm:$0x1]
    %v2005 = vperm.slane %v2003, 0
    %v2023 = vunpack.c.l.b16 %v1986
    %v2024 = vunpack.c.l.b16 %v1987
    %v2025 = vunpack.c.l.b16 %v1988
    %v2026 = vunpack.c.l.b16 %v1989
    %v2027 = vunpack.c.l.b16 %v1990
    %v2028 = vunpack.c.l.b16 %v1991
    %v2029 = vunpack.c.l.b16 %v1992
    %v2030 = vunpack.c.l.b16 %v1993
    %v2031 = vunpack.c.l.b16 %v1994
    %v2032 = vunpack.c.l.b16 %v1995
    %v2033 = vunpack.c.l.b16 %v1996
    %v2034 = vunpack.c.l.b16 %v1997
    %v2035 = vunpack.c.l.b16 %v1998
    %v2036 = vunpack.c.l.b16 %v1999
    %v2037 = vunpack.c.l.b16 %v2000
    %v2038 = vunpack.c.l.b16 %v2001
    %v2039 = vpack.c.b16 %v2024, %v2023
    %v2040 = vpack.c.b16 %v2026, %v2025
    %v2041 = vpack.c.b16 %v2028, %v2027
    %v2042 = vpack.c.b16 %v2030, %v2029
    %v2043 = vpack.c.b16 %v2032, %v2031
    %v2044 = vpack.c.b16 %v2034, %v2033
    %v2045 = vpack.c.b16 %v2036, %v2035
    %v2046 = vpack.c.b16 %v2038, %v2037
    %2055 = vmatpush.bf16.msra.mxu0 %v2046
    %2056 = vmatpush.bf16.msra.mxu0 %v2045
    %2057 = vmatpush.bf16.msra.mxu0 %v2044
    %2058 = vmatpush.bf16.msra.mxu0 %v2043
    %2059 = vmatpush.bf16.msra.mxu0 %v2042
    %2060 = vmatpush.bf16.msra.mxu0 %v2041
    %2061 = vmatpush.bf16.msra.mxu0 %v2040
    %2062 = vmatpush.bf16.msra.mxu0 %v2039
    %2063 = vmatmul.bf16.gmra.mxu0 %v1969
    %v2064 = vpop.f32.mrf.mxu0
    %v2065 = vadd.f32 %v2005, %v2064
    %v2066 = vpop.f32.mrf.mxu0
    %v2067 = vadd.f32 %v2005, %v2066
    %2068 = vmatmul.bf16.gmra.mxu0 %v1970
    %v2069 = vpop.f32.mrf.mxu0
    %v2070 = vadd.f32 %v2005, %v2069
    %v2071 = vpop.f32.mrf.mxu0
    %v2072 = vadd.f32 %v2005, %v2071
    %2073 = vmatmul.bf16.gmra.mxu0 %v1971
    %v2074 = vpop.f32.mrf.mxu0
    %v2075 = vadd.f32 %v2005, %v2074
    %v2076 = vpop.f32.mrf.mxu0
    %v2077 = vadd.f32 %v2005, %v2076
    %2078 = vmatmul.bf16.gmra.mxu0 %v1972
    %v2079 = vpop.f32.mrf.mxu0
    %v2080 = vadd.f32 %v2005, %v2079
    %v2081 = vpop.f32.mrf.mxu0
    %v2082 = vadd.f32 %v2005, %v2081
    %2083 = vmatmul.bf16.gmra.mxu0 %v1973
    %v2084 = vpop.f32.mrf.mxu0
    %v2085 = vadd.f32 %v2005, %v2084
    %v2086 = vpop.f32.mrf.mxu0
    %v2087 = vadd.f32 %v2005, %v2086
    %2088 = vmatmul.bf16.gmra.mxu0 %v1974
    %v2089 = vpop.f32.mrf.mxu0
    %v2090 = vadd.f32 %v2005, %v2089
    %v2091 = vpop.f32.mrf.mxu0
    %v2092 = vadd.f32 %v2005, %v2091
    %2093 = vmatmul.bf16.gmra.mxu0 %v1975
    %v2094 = vpop.f32.mrf.mxu0
    %v2095 = vadd.f32 %v2005, %v2094
    %v2096 = vpop.f32.mrf.mxu0
    %v2097 = vadd.f32 %v2005, %v2096
    %2098 = vmatmul.bf16.gmra.mxu0 %v1976
    %v2099 = vpop.f32.mrf.mxu0
    %v2100 = vadd.f32 %v2005, %v2099
    %v2101 = vpop.f32.mrf.mxu0
    %v2102 = vadd.f32 %v2005, %v2101
    %2103 = vmatmul.bf16.gmra.mxu0 %v1977
    %v2104 = vpop.f32.mrf.mxu0
    %v2105 = vadd.f32 %v2005, %v2104
    %v2106 = vpop.f32.mrf.mxu0
    %v2107 = vadd.f32 %v2005, %v2106
    %2108 = vmatmul.bf16.gmra.mxu0 %v1978
    %v2109 = vpop.f32.mrf.mxu0
    %v2110 = vadd.f32 %v2005, %v2109
    %v2111 = vpop.f32.mrf.mxu0
    %v2112 = vadd.f32 %v2005, %v2111
    %2113 = vmatmul.bf16.gmra.mxu0 %v1979
    %v2114 = vpop.f32.mrf.mxu0
    %v2115 = vadd.f32 %v2005, %v2114
    %v2116 = vpop.f32.mrf.mxu0
    %v2117 = vadd.f32 %v2005, %v2116
    %2118 = vmatmul.bf16.gmra.mxu0 %v1980
    %v2119 = vpop.f32.mrf.mxu0
    %v2120 = vadd.f32 %v2005, %v2119
    %v2121 = vpop.f32.mrf.mxu0
    %v2122 = vadd.f32 %v2005, %v2121
    %2123 = vmatmul.bf16.gmra.mxu0 %v1981
    %v2124 = vpop.f32.mrf.mxu0
    %v2125 = vadd.f32 %v2005, %v2124
    %v2126 = vpop.f32.mrf.mxu0
    %v2127 = vadd.f32 %v2005, %v2126
    %2128 = vmatmul.bf16.gmra.mxu0 %v1982
    %v2129 = vpop.f32.mrf.mxu0
    %v2130 = vadd.f32 %v2005, %v2129
    %v2131 = vpop.f32.mrf.mxu0
    %v2132 = vadd.f32 %v2005, %v2131
    %2133 = vmatmul.bf16.gmra.mxu0 %v1983
    %v2134 = vpop.f32.mrf.mxu0
    %v2135 = vadd.f32 %v2005, %v2134
    %v2136 = vpop.f32.mrf.mxu0
    %v2137 = vadd.f32 %v2005, %v2136
    %2138 = vmatmul.bf16.gmra.mxu0 %v1984
    %v2139 = vpop.f32.mrf.mxu0
    %v2140 = vadd.f32 %v2005, %v2139
    %v2141 = vpop.f32.mrf.mxu0
    %v2142 = vadd.f32 %v2005, %v2141
    %2143 = vdwg.mxu0
    %v2144 = vmax.f32 %v2065, 0.0
    %v2145 = vmax.f32 %v2067, 0.0
    %v2146 = vmax.f32 %v2070, 0.0
    %v2147 = vmax.f32 %v2072, 0.0
    %v2148 = vmax.f32 %v2075, 0.0
    %v2149 = vmax.f32 %v2077, 0.0
    %v2150 = vmax.f32 %v2080, 0.0
    %v2151 = vmax.f32 %v2082, 0.0
    %v2152 = vmax.f32 %v2085, 0.0
    %v2153 = vmax.f32 %v2087, 0.0
    %v2154 = vmax.f32 %v2090, 0.0
    %v2155 = vmax.f32 %v2092, 0.0
    %v2156 = vmax.f32 %v2095, 0.0
    %v2157 = vmax.f32 %v2097, 0.0
    %v2158 = vmax.f32 %v2100, 0.0
    %v2159 = vmax.f32 %v2102, 0.0
    %v2160 = vmax.f32 %v2105, 0.0
    %v2161 = vmax.f32 %v2107, 0.0
    %v2162 = vmax.f32 %v2110, 0.0
    %v2163 = vmax.f32 %v2112, 0.0
    %v2164 = vmax.f32 %v2115, 0.0
    %v2165 = vmax.f32 %v2117, 0.0
    %v2166 = vmax.f32 %v2120, 0.0
    %v2167 = vmax.f32 %v2122, 0.0
    %v2168 = vmax.f32 %v2125, 0.0
    %v2169 = vmax.f32 %v2127, 0.0
    %v2170 = vmax.f32 %v2130, 0.0
    %v2171 = vmax.f32 %v2132, 0.0
    %v2172 = vmax.f32 %v2135, 0.0
    %v2173 = vmax.f32 %v2137, 0.0
    %v2174 = vmax.f32 %v2140, 0.0
    %v2175 = vmax.f32 %v2142, 0.0
    %v2176 = vpack.c.bf16 %v2144, %v2144
    %v2177 = vpack.c.bf16 %v2145, %v2145
    %v2178 = vpack.c.bf16 %v2146, %v2146
    %v2179 = vpack.c.bf16 %v2147, %v2147
    %v2180 = vpack.c.bf16 %v2148, %v2148
    %v2181 = vpack.c.bf16 %v2149, %v2149
    %v2182 = vpack.c.bf16 %v2150, %v2150
    %v2183 = vpack.c.bf16 %v2151, %v2151
    %v2184 = vpack.c.bf16 %v2152, %v2152
    %v2185 = vpack.c.bf16 %v2153, %v2153
    %v2186 = vpack.c.bf16 %v2154, %v2154
    %v2187 = vpack.c.bf16 %v2155, %v2155
    %v2188 = vpack.c.bf16 %v2156, %v2156
    %v2189 = vpack.c.bf16 %v2157, %v2157
    %v2190 = vpack.c.bf16 %v2158, %v2158
    %v2191 = vpack.c.bf16 %v2159, %v2159
    %v2192 = vpack.c.bf16 %v2160, %v2160
    %v2193 = vpack.c.bf16 %v2161, %v2161
    %v2194 = vpack.c.bf16 %v2162, %v2162
    %v2195 = vpack.c.bf16 %v2163, %v2163
    %v2196 = vpack.c.bf16 %v2164, %v2164
    %v2197 = vpack.c.bf16 %v2165, %v2165
    %v2198 = vpack.c.bf16 %v2166, %v2166
    %v2199 = vpack.c.bf16 %v2167, %v2167
    %v2200 = vpack.c.bf16 %v2168, %v2168
    %v2201 = vpack.c.bf16 %v2169, %v2169
    %v2202 = vpack.c.bf16 %v2170, %v2170
    %v2203 = vpack.c.bf16 %v2171, %v2171
    %v2204 = vpack.c.bf16 %v2172, %v2172
    %v2205 = vpack.c.bf16 %v2173, %v2173
    %v2206 = vpack.c.bf16 %v2174, %v2174
    %v2207 = vpack.c.bf16 %v2175, %v2175
    %s2208 = scalar_lea.vmem %s7, 128
    %2209 = vst [vmem:[%s2208] sm:$0xf] %v2176
    %2210 = vst [vmem:[%s2208 + $0x4] sm:$0xf] %v2177
    %2211 = vst [vmem:[%s2208 + $0x8] sm:$0xf] %v2178
    %2212 = vst [vmem:[%s2208 + $0xc] sm:$0xf] %v2179
    %2213 = vst [vmem:[%s2208 + $0x10] sm:$0xf] %v2180
    %2214 = vst [vmem:[%s2208 + $0x14] sm:$0xf] %v2181
    %2215 = vst [vmem:[%s2208 + $0x18] sm:$0xf] %v2182
    %2216 = vst [vmem:[%s2208 + $0x1c] sm:$0xf] %v2183
    %2217 = vst [vmem:[%s2208 + $0x20] sm:$0xf] %v2184
    %2218 = vst [vmem:[%s2208 + $0x24] sm:$0xf] %v2185
    %2219 = vst [vmem:[%s2208 + $0x28] sm:$0xf] %v2186
    %2220 = vst [vmem:[%s2208 + $0x2c] sm:$0xf] %v2187
    %2221 = vst [vmem:[%s2208 + $0x30] sm:$0xf] %v2188
    %2222 = vst [vmem:[%s2208 + $0x34] sm:$0xf] %v2189
    %2223 = vst [vmem:[%s2208 + $0x38] sm:$0xf] %v2190
    %2224 = vst [vmem:[%s2208 + $0x3c] sm:$0xf] %v2191
    %2225 = vst [vmem:[%s2208 + $0x40] sm:$0xf] %v2192
    %2226 = vst [vmem:[%s2208 + $0x44] sm:$0xf] %v2193
    %2227 = vst [vmem:[%s2208 + $0x48] sm:$0xf] %v2194
    %2228 = vst [vmem:[%s2208 + $0x4c] sm:$0xf] %v2195
    %2229 = vst [vmem:[%s2208 + $0x50] sm:$0xf] %v2196
    %2230 = vst [vmem:[%s2208 + $0x54] sm:$0xf] %v2197
    %2231 = vst [vmem:[%s2208 + $0x58] sm:$0xf] %v2198
    %2232 = vst [vmem:[%s2208 + $0x5c] sm:$0xf] %v2199
    %2233 = vst [vmem:[%s2208 + $0x60] sm:$0xf] %v2200
    %2234 = vst [vmem:[%s2208 + $0x64] sm:$0xf] %v2201
    %2235 = vst [vmem:[%s2208 + $0x68] sm:$0xf] %v2202
    %2236 = vst [vmem:[%s2208 + $0x6c] sm:$0xf] %v2203
    %2237 = vst [vmem:[%s2208 + $0x70] sm:$0xf] %v2204
    %2238 = vst [vmem:[%s2208 + $0x74] sm:$0xf] %v2205
    %2239 = vst [vmem:[%s2208 + $0x78] sm:$0xf] %v2206
    %2240 = vst [vmem:[%s2208 + $0x7c] sm:$0xf] %v2207
  $region37: #{student_graphpred_forward.3} parent=0 // pred_fallthru
    _
  // Predicated region
  $region38: #{student_graphpred_forward.3} parent=0 // pred_check
    _
  $region39: #{student_graphpred_forward.3} parent=0 // pred_check_branch
    %2242 = sbr.rel (0) target = $region41
  $region40: #{student_graphpred_forward.3} parent=0 // pred_region
    _
  $region41: #{student_graphpred_forward.3} parent=0 // pred_fallthru
    _
  // Predicated region
  $region42: #{student_graphpred_forward.3} parent=0 // pred_check
    _
  $region43: #{student_graphpred_forward.3} parent=0 // pred_check_branch
    %2244 = sbr.rel (0) target = $region45
  $region44: #{student_graphpred_forward.3} parent=0 // pred_region
    _
  $region45: #{student_graphpred_forward.3} parent=0 // pred_fallthru
    _

</llo_original>
